<compile_context>
chip_gen: v7x
topology: tpu7x:2x2x1
jax: 0.10.0
libtpu: 0.0.40
codegen_flags: <defaults>
</compile_context>

<pallas_src>
import functools

import jax
import jax.numpy as jnp
from jax.experimental import pallas as pl
from jax.experimental.pallas import tpu as pltpu

# ----- small synthetic ViT hyper-parameters -----
PATCH = 4
EMBED_DIM = 32
NUM_HEADS = 2
DEPTH = 2
MLP_RATIO = 4
LN_EPS = 1e-6      # timm ViT uses LayerNorm(eps=1e-6)
GEM_P = 3.0        # ViTGeM default p
GEM_EPS = 1e-6     # ViTGeM default eps
OUT_LANES = 128    # lane-dense width for the head output


# ============================ fused Pallas kernel ============================

def _vit_fused_kernel(patches_ref, patch_w_ref, patch_b_ref, cls_ref, pos_ref,
                      ln1_g_ref, ln1_b_ref, qkv_w_ref, qkv_b_ref,
                      proj_w_ref, proj_b_ref, ln2_g_ref, ln2_b_ref,
                      fc1_w_ref, fc1_b_ref, fc2_w_ref, fc2_b_ref,
                      norm_g_ref, norm_b_ref, head_w_ref, head_b_ref,
                      out_ref, *, num_heads, scale, gem_p, gem_eps):
    depth = qkv_w_ref.shape[0]
    D = qkv_w_ref.shape[1]
    Dh = D // num_heads
    f32 = jnp.float32

    def layernorm(x, g, b):
        mean = jnp.mean(x, axis=-1, keepdims=True)
        var = jnp.mean(jnp.square(x - mean), axis=-1, keepdims=True)
        return (x - mean) * jax.lax.rsqrt(var + LN_EPS) * g + b

    # --- patch embedding: stride-PATCH conv as im2col matmul ---
    tok = (jnp.dot(patches_ref[0], patch_w_ref[...],
                   preferred_element_type=f32) + patch_b_ref[...])     # [N, D]
    # Row 0 of `patches` is a zero pad; replace its embedding with the cls token.
    row = jax.lax.broadcasted_iota(jnp.int32, tok.shape, 0)
    x = jnp.where(row == 0, cls_ref[...], tok) + pos_ref[...]          # [N, D]

    # --- transformer blocks (pre-norm, timm ViT), fully unrolled in VMEM ---
    for d in range(depth):
        h = layernorm(x, ln1_g_ref[d], ln1_b_ref[d])
        qkv = (jnp.dot(h, qkv_w_ref[d], preferred_element_type=f32)
               + qkv_b_ref[d])                                         # [N, 3D]
        pw = proj_w_ref[d]                                             # [D, D]
        attn = proj_b_ref[d]                                           # [1, D] (broadcasts)
        for hd in range(num_heads):
            q = qkv[:, hd * Dh:(hd + 1) * Dh] * scale                  # scale folded into q
            k = qkv[:, D + hd * Dh:D + (hd + 1) * Dh]
            v = qkv[:, 2 * D + hd * Dh:2 * D + (hd + 1) * Dh]
            # scores via last-dim contraction -> no explicit k transpose
            s = jax.lax.dot_general(q, k, (((1,), (1,)), ((), ())),
                                    preferred_element_type=f32)        # [N, N]
            s = s - jnp.max(s, axis=-1, keepdims=True)
            p = jnp.exp(s)
            p = p / jnp.sum(p, axis=-1, keepdims=True)
            o_h = jnp.dot(p, v, preferred_element_type=f32)            # [N, Dh]
            # fold the output projection into the head loop (no lane concat)
            attn = attn + jnp.dot(o_h, pw[hd * Dh:(hd + 1) * Dh, :],
                                  preferred_element_type=f32)          # [N, D]
        x = x + attn

        h2 = layernorm(x, ln2_g_ref[d], ln2_b_ref[d])
        # TODO(synk): timm's default nn.GELU is the exact erf form; tanh-approx
        # GELU is used here for robust Mosaic lowering.
        hid = jax.nn.gelu(
            jnp.dot(h2, fc1_w_ref[d], preferred_element_type=f32) + fc1_b_ref[d],
            approximate=True)
        x = x + (jnp.dot(hid, fc2_w_ref[d], preferred_element_type=f32)
                 + fc2_b_ref[d])

    # --- final LayerNorm + ViTGeM pooling over all tokens + Linear(D, 1) ---
    x = layernorm(x, norm_g_ref[...], norm_b_ref[...])
    xc = jnp.maximum(x, gem_eps)                         # clamp(min=eps)
    if gem_p == 3.0:
        xp = xc * xc * xc                                # .pow(3) without log/exp
    else:
        xp = jnp.exp(gem_p * jnp.log(xc))
    pooled = jnp.mean(xp, axis=0, keepdims=True)         # avg over tokens -> [1, D]
    pooled = jnp.exp(jnp.log(pooled) * (1.0 / gem_p))    # .pow(1/p); pooled > 0 via eps
    y = (jnp.dot(pooled, head_w_ref[...], preferred_element_type=f32)
         + head_b_ref[...])                              # [1, 1]
    out_ref[...] = jnp.broadcast_to(y, out_ref.shape)    # lane-dense [1, 1, 128]


# ============================ parameters ============================

def init_params(key, in_chans, img_size):
    num_patches = (img_size // PATCH) ** 2
    n_tokens = num_patches + 1
    D = EMBED_DIM
    hidden = MLP_RATIO * D

    def nrm(k, shape, s=0.02):
        return s * jax.random.normal(k, shape, dtype=jnp.float32)

    keys = iter(jax.random.split(key, 16))
    params = {
        "patch_w": nrm(next(keys), (in_chans * PATCH * PATCH, D)),
        "patch_b": jnp.zeros((1, D), jnp.float32),
        "cls_token": nrm(next(keys), (1, D)),
        "pos_embed": nrm(next(keys), (n_tokens, D)),
        "norm_g": jnp.ones((1, D), jnp.float32),
        "norm_b": jnp.zeros((1, D), jnp.float32),
        "head_w": nrm(next(keys), (D, 1)),
        "head_b": jnp.zeros((1, 1), jnp.float32),
        # per-block weights stacked along a leading depth axis (one ref each)
        "blocks": {
            "ln1_g": jnp.ones((DEPTH, 1, D), jnp.float32),
            "ln1_b": jnp.zeros((DEPTH, 1, D), jnp.float32),
            "qkv_w": nrm(next(keys), (DEPTH, D, 3 * D)),
            "qkv_b": jnp.zeros((DEPTH, 1, 3 * D), jnp.float32),
            "proj_w": nrm(next(keys), (DEPTH, D, D)),
            "proj_b": jnp.zeros((DEPTH, 1, D), jnp.float32),
            "ln2_g": jnp.ones((DEPTH, 1, D), jnp.float32),
            "ln2_b": jnp.zeros((DEPTH, 1, D), jnp.float32),
            "fc1_w": nrm(next(keys), (DEPTH, D, hidden)),
            "fc1_b": jnp.zeros((DEPTH, 1, hidden), jnp.float32),
            "fc2_w": nrm(next(keys), (DEPTH, hidden, D)),
            "fc2_b": jnp.zeros((DEPTH, 1, D), jnp.float32),
        },
    }
    return params


# ============================ forward ============================

def vit_skin_forward(images, params):
    # images: NCHW [B, C, H, W] (PyTorch convention)
    B, C, H, W = images.shape
    D = EMBED_DIM
    Dh = D // NUM_HEADS
    Np = (H // PATCH) * (W // PATCH)
    N = Np + 1

    # im2col for the stride-PATCH patch-embed conv (cheap XLA glue, once per fwd)
    x = images.reshape(B, C, H // PATCH, PATCH, W // PATCH, PATCH)
    x = x.transpose(0, 2, 4, 1, 3, 5).reshape(B, Np, C * PATCH * PATCH)
    # prepend one zero row per batch so the in-kernel patch matmul yields N rows;
    # the kernel overwrites row 0 with the cls token.
    patches = jnp.pad(x, ((0, 0), (1, 0), (0, 0)))
    Kp = patches.shape[-1]

    blk = params["blocks"]
    inputs = (
        patches,
        params["patch_w"], params["patch_b"], params["cls_token"], params["pos_embed"],
        blk["ln1_g"], blk["ln1_b"], blk["qkv_w"], blk["qkv_b"],
        blk["proj_w"], blk["proj_b"], blk["ln2_g"], blk["ln2_b"],
        blk["fc1_w"], blk["fc1_b"], blk["fc2_w"], blk["fc2_b"],
        params["norm_g"], params["norm_b"], params["head_w"], params["head_b"],
    )

    def const_spec(arr):
        nd = arr.ndim
        # whole-array block, same block every grid step -> stays VMEM-resident
        return pl.BlockSpec(arr.shape, lambda b, _nd=nd: (0,) * _nd)

    in_specs = [pl.BlockSpec((1, N, Kp), lambda b: (b, 0, 0))]
    in_specs += [const_spec(a) for a in inputs[1:]]

    out = pl.pallas_call(
        functools.partial(_vit_fused_kernel,
                          num_heads=NUM_HEADS, scale=Dh ** -0.5,
                          gem_p=GEM_P, gem_eps=GEM_EPS),
        grid=(B,),
        in_specs=in_specs,
        out_specs=pl.BlockSpec((1, 1, OUT_LANES), lambda b: (b, 0, 0)),
        out_shape=jax.ShapeDtypeStruct((B, 1, OUT_LANES), jnp.float32),
        compiler_params=pltpu.CompilerParams(
            dimension_semantics=("parallel",)),
    )(*inputs)

    return out[:, 0, :1]   # [B, 1]


# ============================ main ============================

if __name__ == "__main__":
    key = jax.random.PRNGKey(0)
    k_img, k_par = jax.random.split(key)

    B, C, HW = 2, 3, 16
    images = jax.random.normal(k_img, (B, C, HW, HW), dtype=jnp.float32)
    params = init_params(k_par, C, HW)

    fwd = jax.jit(vit_skin_forward)
    out = fwd(images, params)
    jax.block_until_ready(out)

    assert out.shape == (B, 1), out.shape
    assert out.dtype == jnp.float32
    print("KERNEL_OK")
</pallas_src>

<mosaic_0001>
module attributes {stable_mosaic.version = 11 : i64} {
  func.func @_vit_fused_kernel(%arg0: i32, %arg1: memref<1x17x48xf32, #tpu.memory_space<vmem>>, %arg2: memref<48x32xf32, #tpu.memory_space<vmem>>, %arg3: memref<1x32xf32, #tpu.memory_space<vmem>>, %arg4: memref<1x32xf32, #tpu.memory_space<vmem>>, %arg5: memref<17x32xf32, #tpu.memory_space<vmem>>, %arg6: memref<2x1x32xf32, #tpu.memory_space<vmem>>, %arg7: memref<2x1x32xf32, #tpu.memory_space<vmem>>, %arg8: memref<2x32x96xf32, #tpu.memory_space<vmem>>, %arg9: memref<2x1x96xf32, #tpu.memory_space<vmem>>, %arg10: memref<2x32x32xf32, #tpu.memory_space<vmem>>, %arg11: memref<2x1x32xf32, #tpu.memory_space<vmem>>, %arg12: memref<2x1x32xf32, #tpu.memory_space<vmem>>, %arg13: memref<2x1x32xf32, #tpu.memory_space<vmem>>, %arg14: memref<2x32x128xf32, #tpu.memory_space<vmem>>, %arg15: memref<2x1x128xf32, #tpu.memory_space<vmem>>, %arg16: memref<2x128x32xf32, #tpu.memory_space<vmem>>, %arg17: memref<2x1x32xf32, #tpu.memory_space<vmem>>, %arg18: memref<1x32xf32, #tpu.memory_space<vmem>>, %arg19: memref<1x32xf32, #tpu.memory_space<vmem>>, %arg20: memref<32x1xf32, #tpu.memory_space<vmem>>, %arg21: memref<1x1xf32, #tpu.memory_space<vmem>>, %arg22: memref<1x1x128xf32, #tpu.memory_space<vmem>>) attributes {dimension_semantics = [#tpu.dimension_semantics<parallel>], iteration_bounds = array<i64: 2>, scalar_prefetch = 0 : i64, scratch_operands = 0 : i64, tpu.core_type = #tpu.core_type<tc>, window_params = [{transform_indices = @transform_0, window_bounds = array<i64: 1, 17, 48>}, {pipeline_mode = #tpu.pipeline_mode<synchronous>, transform_indices = @transform_1, window_bounds = array<i64: 48, 32>}, {pipeline_mode = #tpu.pipeline_mode<synchronous>, transform_indices = @transform_2, window_bounds = array<i64: 1, 32>}, {pipeline_mode = #tpu.pipeline_mode<synchronous>, transform_indices = @transform_3, window_bounds = array<i64: 1, 32>}, {pipeline_mode = #tpu.pipeline_mode<synchronous>, transform_indices = @transform_4, window_bounds = array<i64: 17, 32>}, {pipeline_mode = #tpu.pipeline_mode<synchronous>, transform_indices = @transform_5, window_bounds = array<i64: 2, 1, 32>}, {pipeline_mode = #tpu.pipeline_mode<synchronous>, transform_indices = @transform_6, window_bounds = array<i64: 2, 1, 32>}, {pipeline_mode = #tpu.pipeline_mode<synchronous>, transform_indices = @transform_7, window_bounds = array<i64: 2, 32, 96>}, {pipeline_mode = #tpu.pipeline_mode<synchronous>, transform_indices = @transform_8, window_bounds = array<i64: 2, 1, 96>}, {pipeline_mode = #tpu.pipeline_mode<synchronous>, transform_indices = @transform_9, window_bounds = array<i64: 2, 32, 32>}, {pipeline_mode = #tpu.pipeline_mode<synchronous>, transform_indices = @transform_10, window_bounds = array<i64: 2, 1, 32>}, {pipeline_mode = #tpu.pipeline_mode<synchronous>, transform_indices = @transform_11, window_bounds = array<i64: 2, 1, 32>}, {pipeline_mode = #tpu.pipeline_mode<synchronous>, transform_indices = @transform_12, window_bounds = array<i64: 2, 1, 32>}, {pipeline_mode = #tpu.pipeline_mode<synchronous>, transform_indices = @transform_13, window_bounds = array<i64: 2, 32, 128>}, {pipeline_mode = #tpu.pipeline_mode<synchronous>, transform_indices = @transform_14, window_bounds = array<i64: 2, 1, 128>}, {pipeline_mode = #tpu.pipeline_mode<synchronous>, transform_indices = @transform_15, window_bounds = array<i64: 2, 128, 32>}, {pipeline_mode = #tpu.pipeline_mode<synchronous>, transform_indices = @transform_16, window_bounds = array<i64: 2, 1, 32>}, {pipeline_mode = #tpu.pipeline_mode<synchronous>, transform_indices = @transform_17, window_bounds = array<i64: 1, 32>}, {pipeline_mode = #tpu.pipeline_mode<synchronous>, transform_indices = @transform_18, window_bounds = array<i64: 1, 32>}, {pipeline_mode = #tpu.pipeline_mode<synchronous>, transform_indices = @transform_19, window_bounds = array<i64: 32, 1>}, {pipeline_mode = #tpu.pipeline_mode<synchronous>, transform_indices = @transform_20, window_bounds = array<i64: 1, 1>}, {transform_indices = @transform_21, window_bounds = array<i64: 1, 1, 128>}]} {
    %c0 = arith.constant 0 : index
    %c0_0 = arith.constant 0 : index
    %c0_1 = arith.constant 0 : index
    %0 = vector.load %arg1[%c0, %c0_0, %c0_1] : memref<1x17x48xf32, #tpu.memory_space<vmem>>, vector<1x17x48xf32>
    %1 = vector.shape_cast %0 : vector<1x17x48xf32> to vector<17x48xf32>
    %c0_2 = arith.constant 0 : index
    %c0_3 = arith.constant 0 : index
    %2 = vector.load %arg2[%c0_2, %c0_3] : memref<48x32xf32, #tpu.memory_space<vmem>>, vector<48x32xf32>
    %cst = arith.constant dense<0.000000e+00> : vector<17x32xf32>
    %3 = tpu.matmul %1, %2, %cst {dimension_numbers = #tpu.dot_dimension_numbers<[1], [0], [0], [1], [0, 0, 1, 1], [], []>} : vector<17x48xf32>, vector<48x32xf32>, vector<17x32xf32> -> vector<17x32xf32>
    %c0_4 = arith.constant 0 : index
    %c0_5 = arith.constant 0 : index
    %4 = vector.load %arg3[%c0_4, %c0_5] : memref<1x32xf32, #tpu.memory_space<vmem>>, vector<1x32xf32>
    %5 = vector.broadcast %4 : vector<1x32xf32> to vector<17x32xf32>
    %6 = arith.addf %3, %5 : vector<17x32xf32>
    %7 = tpu.iota {dimensions = array<i32: 0>} : vector<17x32xi32>
    %c0_i32 = arith.constant 0 : i32
    %8 = vector.broadcast %c0_i32 : i32 to vector<17x32xi32>
    %9 = arith.cmpi eq, %7, %8 : vector<17x32xi32>
    %c0_6 = arith.constant 0 : index
    %c0_7 = arith.constant 0 : index
    %10 = vector.load %arg4[%c0_6, %c0_7] : memref<1x32xf32, #tpu.memory_space<vmem>>, vector<1x32xf32>
    %11 = vector.shape_cast %10 : vector<1x32xf32> to vector<1x32xf32>
    %12 = vector.broadcast %11 : vector<1x32xf32> to vector<17x32xf32>
    %13 = arith.select %9, %12, %6 : vector<17x32xi1>, vector<17x32xf32>
    %c0_8 = arith.constant 0 : index
    %c0_9 = arith.constant 0 : index
    %14 = vector.load %arg5[%c0_8, %c0_9] : memref<17x32xf32, #tpu.memory_space<vmem>>, vector<17x32xf32>
    %15 = arith.addf %13, %14 : vector<17x32xf32>
    %c0_10 = arith.constant 0 : index
    %c0_11 = arith.constant 0 : index
    %c0_12 = arith.constant 0 : index
    %16 = vector.load %arg6[%c0_10, %c0_11, %c0_12] : memref<2x1x32xf32, #tpu.memory_space<vmem>>, vector<1x1x32xf32>
    %17 = vector.shape_cast %16 : vector<1x1x32xf32> to vector<1x32xf32>
    %c0_13 = arith.constant 0 : index
    %c0_14 = arith.constant 0 : index
    %c0_15 = arith.constant 0 : index
    %18 = vector.load %arg7[%c0_13, %c0_14, %c0_15] : memref<2x1x32xf32, #tpu.memory_space<vmem>>, vector<1x1x32xf32>
    %19 = vector.shape_cast %18 : vector<1x1x32xf32> to vector<1x32xf32>
    %cst_16 = arith.constant dense<0.000000e+00> : vector<17xf32>
    %20 = vector.multi_reduction <add>, %15, %cst_16 [1] : vector<17x32xf32> to vector<17xf32>
    %21 = vector.shape_cast %20 : vector<17xf32> to vector<17x1xf32>
    %cst_17 = arith.constant 3.200000e+01 : f32
    %22 = vector.broadcast %cst_17 : f32 to vector<17x1xf32>
    %23 = arith.divf %21, %22 : vector<17x1xf32>
    %24 = vector.broadcast %23 : vector<17x1xf32> to vector<17x32xf32>
    %25 = arith.subf %15, %24 : vector<17x32xf32>
    %26 = arith.mulf %25, %25 : vector<17x32xf32>
    %cst_18 = arith.constant dense<0.000000e+00> : vector<17xf32>
    %27 = vector.multi_reduction <add>, %26, %cst_18 [1] : vector<17x32xf32> to vector<17xf32>
    %28 = vector.shape_cast %27 : vector<17xf32> to vector<17x1xf32>
    %cst_19 = arith.constant 3.200000e+01 : f32
    %29 = vector.broadcast %cst_19 : f32 to vector<17x1xf32>
    %30 = arith.divf %28, %29 : vector<17x1xf32>
    %31 = vector.broadcast %23 : vector<17x1xf32> to vector<17x32xf32>
    %32 = arith.subf %15, %31 : vector<17x32xf32>
    %cst_20 = arith.constant 9.99999997E-7 : f32
    %33 = vector.broadcast %cst_20 : f32 to vector<17x1xf32>
    %34 = arith.addf %30, %33 : vector<17x1xf32>
    %35 = math.rsqrt %34 : vector<17x1xf32>
    %36 = vector.broadcast %35 : vector<17x1xf32> to vector<17x32xf32>
    %37 = arith.mulf %32, %36 : vector<17x32xf32>
    %38 = vector.broadcast %17 : vector<1x32xf32> to vector<17x32xf32>
    %39 = arith.mulf %37, %38 : vector<17x32xf32>
    %40 = vector.broadcast %19 : vector<1x32xf32> to vector<17x32xf32>
    %41 = arith.addf %39, %40 : vector<17x32xf32>
    %c0_21 = arith.constant 0 : index
    %c0_22 = arith.constant 0 : index
    %c0_23 = arith.constant 0 : index
    %42 = vector.load %arg8[%c0_21, %c0_22, %c0_23] : memref<2x32x96xf32, #tpu.memory_space<vmem>>, vector<1x32x96xf32>
    %43 = vector.shape_cast %42 : vector<1x32x96xf32> to vector<32x96xf32>
    %cst_24 = arith.constant dense<0.000000e+00> : vector<17x96xf32>
    %44 = tpu.matmul %41, %43, %cst_24 {dimension_numbers = #tpu.dot_dimension_numbers<[1], [0], [0], [1], [0, 0, 1, 1], [], []>} : vector<17x32xf32>, vector<32x96xf32>, vector<17x96xf32> -> vector<17x96xf32>
    %c0_25 = arith.constant 0 : index
    %c0_26 = arith.constant 0 : index
    %c0_27 = arith.constant 0 : index
    %45 = vector.load %arg9[%c0_25, %c0_26, %c0_27] : memref<2x1x96xf32, #tpu.memory_space<vmem>>, vector<1x1x96xf32>
    %46 = vector.shape_cast %45 : vector<1x1x96xf32> to vector<1x96xf32>
    %47 = vector.broadcast %46 : vector<1x96xf32> to vector<17x96xf32>
    %48 = arith.addf %44, %47 : vector<17x96xf32>
    %c0_28 = arith.constant 0 : index
    %c0_29 = arith.constant 0 : index
    %c0_30 = arith.constant 0 : index
    %49 = vector.load %arg10[%c0_28, %c0_29, %c0_30] : memref<2x32x32xf32, #tpu.memory_space<vmem>>, vector<1x32x32xf32>
    %50 = vector.shape_cast %49 : vector<1x32x32xf32> to vector<32x32xf32>
    %c0_31 = arith.constant 0 : index
    %c0_32 = arith.constant 0 : index
    %c0_33 = arith.constant 0 : index
    %51 = vector.load %arg11[%c0_31, %c0_32, %c0_33] : memref<2x1x32xf32, #tpu.memory_space<vmem>>, vector<1x1x32xf32>
    %52 = vector.shape_cast %51 : vector<1x1x32xf32> to vector<1x32xf32>
    %53 = vector.extract_strided_slice %48 {offsets = [0, 0], sizes = [17, 16], strides = [1, 1]} : vector<17x96xf32> to vector<17x16xf32>
    %cst_34 = arith.constant 2.500000e-01 : f32
    %54 = vector.broadcast %cst_34 : f32 to vector<17x16xf32>
    %55 = arith.mulf %53, %54 : vector<17x16xf32>
    %56 = vector.extract_strided_slice %48 {offsets = [0, 32], sizes = [17, 16], strides = [1, 1]} : vector<17x96xf32> to vector<17x16xf32>
    %57 = vector.extract_strided_slice %48 {offsets = [0, 64], sizes = [17, 16], strides = [1, 1]} : vector<17x96xf32> to vector<17x16xf32>
    %cst_35 = arith.constant dense<0.000000e+00> : vector<17x17xf32>
    %58 = tpu.matmul %55, %56, %cst_35 {dimension_numbers = #tpu.dot_dimension_numbers<[1], [1], [0], [0], [0, 0, 1, 0], [], []>} : vector<17x16xf32>, vector<17x16xf32>, vector<17x17xf32> -> vector<17x17xf32>
    %cst_36 = arith.constant dense<0xFF800000> : vector<17xf32>
    %59 = vector.multi_reduction <maximumf>, %58, %cst_36 [1] : vector<17x17xf32> to vector<17xf32>
    %60 = vector.shape_cast %59 : vector<17xf32> to vector<17x1xf32>
    %61 = vector.broadcast %60 : vector<17x1xf32> to vector<17x17xf32>
    %62 = arith.subf %58, %61 : vector<17x17xf32>
    %63 = math.exp %62 : vector<17x17xf32>
    %cst_37 = arith.constant dense<0.000000e+00> : vector<17xf32>
    %64 = vector.multi_reduction <add>, %63, %cst_37 [1] : vector<17x17xf32> to vector<17xf32>
    %65 = vector.shape_cast %64 : vector<17xf32> to vector<17x1xf32>
    %66 = vector.broadcast %65 : vector<17x1xf32> to vector<17x17xf32>
    %67 = arith.divf %63, %66 : vector<17x17xf32>
    %cst_38 = arith.constant dense<0.000000e+00> : vector<17x16xf32>
    %68 = tpu.matmul %67, %57, %cst_38 {dimension_numbers = #tpu.dot_dimension_numbers<[1], [0], [0], [1], [0, 0, 1, 1], [], []>} : vector<17x17xf32>, vector<17x16xf32>, vector<17x16xf32> -> vector<17x16xf32>
    %69 = vector.extract_strided_slice %50 {offsets = [0, 0], sizes = [16, 32], strides = [1, 1]} : vector<32x32xf32> to vector<16x32xf32>
    %cst_39 = arith.constant dense<0.000000e+00> : vector<17x32xf32>
    %70 = tpu.matmul %68, %69, %cst_39 {dimension_numbers = #tpu.dot_dimension_numbers<[1], [0], [0], [1], [0, 0, 1, 1], [], []>} : vector<17x16xf32>, vector<16x32xf32>, vector<17x32xf32> -> vector<17x32xf32>
    %71 = vector.broadcast %52 : vector<1x32xf32> to vector<17x32xf32>
    %72 = arith.addf %71, %70 : vector<17x32xf32>
    %73 = vector.extract_strided_slice %48 {offsets = [0, 16], sizes = [17, 16], strides = [1, 1]} : vector<17x96xf32> to vector<17x16xf32>
    %cst_40 = arith.constant 2.500000e-01 : f32
    %74 = vector.broadcast %cst_40 : f32 to vector<17x16xf32>
    %75 = arith.mulf %73, %74 : vector<17x16xf32>
    %76 = vector.extract_strided_slice %48 {offsets = [0, 48], sizes = [17, 16], strides = [1, 1]} : vector<17x96xf32> to vector<17x16xf32>
    %77 = vector.extract_strided_slice %48 {offsets = [0, 80], sizes = [17, 16], strides = [1, 1]} : vector<17x96xf32> to vector<17x16xf32>
    %cst_41 = arith.constant dense<0.000000e+00> : vector<17x17xf32>
    %78 = tpu.matmul %75, %76, %cst_41 {dimension_numbers = #tpu.dot_dimension_numbers<[1], [1], [0], [0], [0, 0, 1, 0], [], []>} : vector<17x16xf32>, vector<17x16xf32>, vector<17x17xf32> -> vector<17x17xf32>
    %cst_42 = arith.constant dense<0xFF800000> : vector<17xf32>
    %79 = vector.multi_reduction <maximumf>, %78, %cst_42 [1] : vector<17x17xf32> to vector<17xf32>
    %80 = vector.shape_cast %79 : vector<17xf32> to vector<17x1xf32>
    %81 = vector.broadcast %80 : vector<17x1xf32> to vector<17x17xf32>
    %82 = arith.subf %78, %81 : vector<17x17xf32>
    %83 = math.exp %82 : vector<17x17xf32>
    %cst_43 = arith.constant dense<0.000000e+00> : vector<17xf32>
    %84 = vector.multi_reduction <add>, %83, %cst_43 [1] : vector<17x17xf32> to vector<17xf32>
    %85 = vector.shape_cast %84 : vector<17xf32> to vector<17x1xf32>
    %86 = vector.broadcast %85 : vector<17x1xf32> to vector<17x17xf32>
    %87 = arith.divf %83, %86 : vector<17x17xf32>
    %cst_44 = arith.constant dense<0.000000e+00> : vector<17x16xf32>
    %88 = tpu.matmul %87, %77, %cst_44 {dimension_numbers = #tpu.dot_dimension_numbers<[1], [0], [0], [1], [0, 0, 1, 1], [], []>} : vector<17x17xf32>, vector<17x16xf32>, vector<17x16xf32> -> vector<17x16xf32>
    %89 = vector.extract_strided_slice %50 {offsets = [16, 0], sizes = [16, 32], strides = [1, 1]} : vector<32x32xf32> to vector<16x32xf32>
    %cst_45 = arith.constant dense<0.000000e+00> : vector<17x32xf32>
    %90 = tpu.matmul %88, %89, %cst_45 {dimension_numbers = #tpu.dot_dimension_numbers<[1], [0], [0], [1], [0, 0, 1, 1], [], []>} : vector<17x16xf32>, vector<16x32xf32>, vector<17x32xf32> -> vector<17x32xf32>
    %91 = arith.addf %72, %90 : vector<17x32xf32>
    %92 = arith.addf %15, %91 : vector<17x32xf32>
    %c0_46 = arith.constant 0 : index
    %c0_47 = arith.constant 0 : index
    %c0_48 = arith.constant 0 : index
    %93 = vector.load %arg12[%c0_46, %c0_47, %c0_48] : memref<2x1x32xf32, #tpu.memory_space<vmem>>, vector<1x1x32xf32>
    %94 = vector.shape_cast %93 : vector<1x1x32xf32> to vector<1x32xf32>
    %c0_49 = arith.constant 0 : index
    %c0_50 = arith.constant 0 : index
    %c0_51 = arith.constant 0 : index
    %95 = vector.load %arg13[%c0_49, %c0_50, %c0_51] : memref<2x1x32xf32, #tpu.memory_space<vmem>>, vector<1x1x32xf32>
    %96 = vector.shape_cast %95 : vector<1x1x32xf32> to vector<1x32xf32>
    %cst_52 = arith.constant dense<0.000000e+00> : vector<17xf32>
    %97 = vector.multi_reduction <add>, %92, %cst_52 [1] : vector<17x32xf32> to vector<17xf32>
    %98 = vector.shape_cast %97 : vector<17xf32> to vector<17x1xf32>
    %cst_53 = arith.constant 3.200000e+01 : f32
    %99 = vector.broadcast %cst_53 : f32 to vector<17x1xf32>
    %100 = arith.divf %98, %99 : vector<17x1xf32>
    %101 = vector.broadcast %100 : vector<17x1xf32> to vector<17x32xf32>
    %102 = arith.subf %92, %101 : vector<17x32xf32>
    %103 = arith.mulf %102, %102 : vector<17x32xf32>
    %cst_54 = arith.constant dense<0.000000e+00> : vector<17xf32>
    %104 = vector.multi_reduction <add>, %103, %cst_54 [1] : vector<17x32xf32> to vector<17xf32>
    %105 = vector.shape_cast %104 : vector<17xf32> to vector<17x1xf32>
    %cst_55 = arith.constant 3.200000e+01 : f32
    %106 = vector.broadcast %cst_55 : f32 to vector<17x1xf32>
    %107 = arith.divf %105, %106 : vector<17x1xf32>
    %108 = vector.broadcast %100 : vector<17x1xf32> to vector<17x32xf32>
    %109 = arith.subf %92, %108 : vector<17x32xf32>
    %cst_56 = arith.constant 9.99999997E-7 : f32
    %110 = vector.broadcast %cst_56 : f32 to vector<17x1xf32>
    %111 = arith.addf %107, %110 : vector<17x1xf32>
    %112 = math.rsqrt %111 : vector<17x1xf32>
    %113 = vector.broadcast %112 : vector<17x1xf32> to vector<17x32xf32>
    %114 = arith.mulf %109, %113 : vector<17x32xf32>
    %115 = vector.broadcast %94 : vector<1x32xf32> to vector<17x32xf32>
    %116 = arith.mulf %114, %115 : vector<17x32xf32>
    %117 = vector.broadcast %96 : vector<1x32xf32> to vector<17x32xf32>
    %118 = arith.addf %116, %117 : vector<17x32xf32>
    %c0_57 = arith.constant 0 : index
    %c0_58 = arith.constant 0 : index
    %c0_59 = arith.constant 0 : index
    %119 = vector.load %arg14[%c0_57, %c0_58, %c0_59] : memref<2x32x128xf32, #tpu.memory_space<vmem>>, vector<1x32x128xf32>
    %120 = vector.shape_cast %119 : vector<1x32x128xf32> to vector<32x128xf32>
    %cst_60 = arith.constant dense<0.000000e+00> : vector<17x128xf32>
    %121 = tpu.matmul %118, %120, %cst_60 {dimension_numbers = #tpu.dot_dimension_numbers<[1], [0], [0], [1], [0, 0, 1, 1], [], []>} : vector<17x32xf32>, vector<32x128xf32>, vector<17x128xf32> -> vector<17x128xf32>
    %c0_61 = arith.constant 0 : index
    %c0_62 = arith.constant 0 : index
    %c0_63 = arith.constant 0 : index
    %122 = vector.load %arg15[%c0_61, %c0_62, %c0_63] : memref<2x1x128xf32, #tpu.memory_space<vmem>>, vector<1x1x128xf32>
    %123 = vector.shape_cast %122 : vector<1x1x128xf32> to vector<1x128xf32>
    %124 = vector.broadcast %123 : vector<1x128xf32> to vector<17x128xf32>
    %125 = arith.addf %121, %124 : vector<17x128xf32>
    %126 = arith.mulf %125, %125 : vector<17x128xf32>
    %127 = arith.mulf %125, %126 : vector<17x128xf32>
    %cst_64 = arith.constant 4.471500e-02 : f32
    %128 = vector.broadcast %cst_64 : f32 to vector<17x128xf32>
    %129 = arith.mulf %128, %127 : vector<17x128xf32>
    %130 = arith.addf %125, %129 : vector<17x128xf32>
    %cst_65 = arith.constant 0.797884583 : f32
    %131 = vector.broadcast %cst_65 : f32 to vector<17x128xf32>
    %132 = arith.mulf %131, %130 : vector<17x128xf32>
    %133 = math.tanh %132 : vector<17x128xf32>
    %cst_66 = arith.constant 1.000000e+00 : f32
    %134 = vector.broadcast %cst_66 : f32 to vector<17x128xf32>
    %135 = arith.addf %134, %133 : vector<17x128xf32>
    %cst_67 = arith.constant 5.000000e-01 : f32
    %136 = vector.broadcast %cst_67 : f32 to vector<17x128xf32>
    %137 = arith.mulf %136, %135 : vector<17x128xf32>
    %138 = arith.mulf %125, %137 : vector<17x128xf32>
    %c0_68 = arith.constant 0 : index
    %c0_69 = arith.constant 0 : index
    %c0_70 = arith.constant 0 : index
    %139 = vector.load %arg16[%c0_68, %c0_69, %c0_70] : memref<2x128x32xf32, #tpu.memory_space<vmem>>, vector<1x128x32xf32>
    %140 = vector.shape_cast %139 : vector<1x128x32xf32> to vector<128x32xf32>
    %cst_71 = arith.constant dense<0.000000e+00> : vector<17x32xf32>
    %141 = tpu.matmul %138, %140, %cst_71 {dimension_numbers = #tpu.dot_dimension_numbers<[1], [0], [0], [1], [0, 0, 1, 1], [], []>} : vector<17x128xf32>, vector<128x32xf32>, vector<17x32xf32> -> vector<17x32xf32>
    %c0_72 = arith.constant 0 : index
    %c0_73 = arith.constant 0 : index
    %c0_74 = arith.constant 0 : index
    %142 = vector.load %arg17[%c0_72, %c0_73, %c0_74] : memref<2x1x32xf32, #tpu.memory_space<vmem>>, vector<1x1x32xf32>
    %143 = vector.shape_cast %142 : vector<1x1x32xf32> to vector<1x32xf32>
    %144 = vector.broadcast %143 : vector<1x32xf32> to vector<17x32xf32>
    %145 = arith.addf %141, %144 : vector<17x32xf32>
    %146 = arith.addf %92, %145 : vector<17x32xf32>
    %c1 = arith.constant 1 : index
    %c0_75 = arith.constant 0 : index
    %c0_76 = arith.constant 0 : index
    %147 = vector.load %arg6[%c1, %c0_75, %c0_76] : memref<2x1x32xf32, #tpu.memory_space<vmem>>, vector<1x1x32xf32>
    %148 = vector.shape_cast %147 : vector<1x1x32xf32> to vector<1x32xf32>
    %c1_77 = arith.constant 1 : index
    %c0_78 = arith.constant 0 : index
    %c0_79 = arith.constant 0 : index
    %149 = vector.load %arg7[%c1_77, %c0_78, %c0_79] : memref<2x1x32xf32, #tpu.memory_space<vmem>>, vector<1x1x32xf32>
    %150 = vector.shape_cast %149 : vector<1x1x32xf32> to vector<1x32xf32>
    %cst_80 = arith.constant dense<0.000000e+00> : vector<17xf32>
    %151 = vector.multi_reduction <add>, %146, %cst_80 [1] : vector<17x32xf32> to vector<17xf32>
    %152 = vector.shape_cast %151 : vector<17xf32> to vector<17x1xf32>
    %cst_81 = arith.constant 3.200000e+01 : f32
    %153 = vector.broadcast %cst_81 : f32 to vector<17x1xf32>
    %154 = arith.divf %152, %153 : vector<17x1xf32>
    %155 = vector.broadcast %154 : vector<17x1xf32> to vector<17x32xf32>
    %156 = arith.subf %146, %155 : vector<17x32xf32>
    %157 = arith.mulf %156, %156 : vector<17x32xf32>
    %cst_82 = arith.constant dense<0.000000e+00> : vector<17xf32>
    %158 = vector.multi_reduction <add>, %157, %cst_82 [1] : vector<17x32xf32> to vector<17xf32>
    %159 = vector.shape_cast %158 : vector<17xf32> to vector<17x1xf32>
    %cst_83 = arith.constant 3.200000e+01 : f32
    %160 = vector.broadcast %cst_83 : f32 to vector<17x1xf32>
    %161 = arith.divf %159, %160 : vector<17x1xf32>
    %162 = vector.broadcast %154 : vector<17x1xf32> to vector<17x32xf32>
    %163 = arith.subf %146, %162 : vector<17x32xf32>
    %cst_84 = arith.constant 9.99999997E-7 : f32
    %164 = vector.broadcast %cst_84 : f32 to vector<17x1xf32>
    %165 = arith.addf %161, %164 : vector<17x1xf32>
    %166 = math.rsqrt %165 : vector<17x1xf32>
    %167 = vector.broadcast %166 : vector<17x1xf32> to vector<17x32xf32>
    %168 = arith.mulf %163, %167 : vector<17x32xf32>
    %169 = vector.broadcast %148 : vector<1x32xf32> to vector<17x32xf32>
    %170 = arith.mulf %168, %169 : vector<17x32xf32>
    %171 = vector.broadcast %150 : vector<1x32xf32> to vector<17x32xf32>
    %172 = arith.addf %170, %171 : vector<17x32xf32>
    %c1_85 = arith.constant 1 : index
    %c0_86 = arith.constant 0 : index
    %c0_87 = arith.constant 0 : index
    %173 = vector.load %arg8[%c1_85, %c0_86, %c0_87] : memref<2x32x96xf32, #tpu.memory_space<vmem>>, vector<1x32x96xf32>
    %174 = vector.shape_cast %173 : vector<1x32x96xf32> to vector<32x96xf32>
    %cst_88 = arith.constant dense<0.000000e+00> : vector<17x96xf32>
    %175 = tpu.matmul %172, %174, %cst_88 {dimension_numbers = #tpu.dot_dimension_numbers<[1], [0], [0], [1], [0, 0, 1, 1], [], []>} : vector<17x32xf32>, vector<32x96xf32>, vector<17x96xf32> -> vector<17x96xf32>
    %c1_89 = arith.constant 1 : index
    %c0_90 = arith.constant 0 : index
    %c0_91 = arith.constant 0 : index
    %176 = vector.load %arg9[%c1_89, %c0_90, %c0_91] : memref<2x1x96xf32, #tpu.memory_space<vmem>>, vector<1x1x96xf32>
    %177 = vector.shape_cast %176 : vector<1x1x96xf32> to vector<1x96xf32>
    %178 = vector.broadcast %177 : vector<1x96xf32> to vector<17x96xf32>
    %179 = arith.addf %175, %178 : vector<17x96xf32>
    %c1_92 = arith.constant 1 : index
    %c0_93 = arith.constant 0 : index
    %c0_94 = arith.constant 0 : index
    %180 = vector.load %arg10[%c1_92, %c0_93, %c0_94] : memref<2x32x32xf32, #tpu.memory_space<vmem>>, vector<1x32x32xf32>
    %181 = vector.shape_cast %180 : vector<1x32x32xf32> to vector<32x32xf32>
    %c1_95 = arith.constant 1 : index
    %c0_96 = arith.constant 0 : index
    %c0_97 = arith.constant 0 : index
    %182 = vector.load %arg11[%c1_95, %c0_96, %c0_97] : memref<2x1x32xf32, #tpu.memory_space<vmem>>, vector<1x1x32xf32>
    %183 = vector.shape_cast %182 : vector<1x1x32xf32> to vector<1x32xf32>
    %184 = vector.extract_strided_slice %179 {offsets = [0, 0], sizes = [17, 16], strides = [1, 1]} : vector<17x96xf32> to vector<17x16xf32>
    %cst_98 = arith.constant 2.500000e-01 : f32
    %185 = vector.broadcast %cst_98 : f32 to vector<17x16xf32>
    %186 = arith.mulf %184, %185 : vector<17x16xf32>
    %187 = vector.extract_strided_slice %179 {offsets = [0, 32], sizes = [17, 16], strides = [1, 1]} : vector<17x96xf32> to vector<17x16xf32>
    %188 = vector.extract_strided_slice %179 {offsets = [0, 64], sizes = [17, 16], strides = [1, 1]} : vector<17x96xf32> to vector<17x16xf32>
    %cst_99 = arith.constant dense<0.000000e+00> : vector<17x17xf32>
    %189 = tpu.matmul %186, %187, %cst_99 {dimension_numbers = #tpu.dot_dimension_numbers<[1], [1], [0], [0], [0, 0, 1, 0], [], []>} : vector<17x16xf32>, vector<17x16xf32>, vector<17x17xf32> -> vector<17x17xf32>
    %cst_100 = arith.constant dense<0xFF800000> : vector<17xf32>
    %190 = vector.multi_reduction <maximumf>, %189, %cst_100 [1] : vector<17x17xf32> to vector<17xf32>
    %191 = vector.shape_cast %190 : vector<17xf32> to vector<17x1xf32>
    %192 = vector.broadcast %191 : vector<17x1xf32> to vector<17x17xf32>
    %193 = arith.subf %189, %192 : vector<17x17xf32>
    %194 = math.exp %193 : vector<17x17xf32>
    %cst_101 = arith.constant dense<0.000000e+00> : vector<17xf32>
    %195 = vector.multi_reduction <add>, %194, %cst_101 [1] : vector<17x17xf32> to vector<17xf32>
    %196 = vector.shape_cast %195 : vector<17xf32> to vector<17x1xf32>
    %197 = vector.broadcast %196 : vector<17x1xf32> to vector<17x17xf32>
    %198 = arith.divf %194, %197 : vector<17x17xf32>
    %cst_102 = arith.constant dense<0.000000e+00> : vector<17x16xf32>
    %199 = tpu.matmul %198, %188, %cst_102 {dimension_numbers = #tpu.dot_dimension_numbers<[1], [0], [0], [1], [0, 0, 1, 1], [], []>} : vector<17x17xf32>, vector<17x16xf32>, vector<17x16xf32> -> vector<17x16xf32>
    %200 = vector.extract_strided_slice %181 {offsets = [0, 0], sizes = [16, 32], strides = [1, 1]} : vector<32x32xf32> to vector<16x32xf32>
    %cst_103 = arith.constant dense<0.000000e+00> : vector<17x32xf32>
    %201 = tpu.matmul %199, %200, %cst_103 {dimension_numbers = #tpu.dot_dimension_numbers<[1], [0], [0], [1], [0, 0, 1, 1], [], []>} : vector<17x16xf32>, vector<16x32xf32>, vector<17x32xf32> -> vector<17x32xf32>
    %202 = vector.broadcast %183 : vector<1x32xf32> to vector<17x32xf32>
    %203 = arith.addf %202, %201 : vector<17x32xf32>
    %204 = vector.extract_strided_slice %179 {offsets = [0, 16], sizes = [17, 16], strides = [1, 1]} : vector<17x96xf32> to vector<17x16xf32>
    %cst_104 = arith.constant 2.500000e-01 : f32
    %205 = vector.broadcast %cst_104 : f32 to vector<17x16xf32>
    %206 = arith.mulf %204, %205 : vector<17x16xf32>
    %207 = vector.extract_strided_slice %179 {offsets = [0, 48], sizes = [17, 16], strides = [1, 1]} : vector<17x96xf32> to vector<17x16xf32>
    %208 = vector.extract_strided_slice %179 {offsets = [0, 80], sizes = [17, 16], strides = [1, 1]} : vector<17x96xf32> to vector<17x16xf32>
    %cst_105 = arith.constant dense<0.000000e+00> : vector<17x17xf32>
    %209 = tpu.matmul %206, %207, %cst_105 {dimension_numbers = #tpu.dot_dimension_numbers<[1], [1], [0], [0], [0, 0, 1, 0], [], []>} : vector<17x16xf32>, vector<17x16xf32>, vector<17x17xf32> -> vector<17x17xf32>
    %cst_106 = arith.constant dense<0xFF800000> : vector<17xf32>
    %210 = vector.multi_reduction <maximumf>, %209, %cst_106 [1] : vector<17x17xf32> to vector<17xf32>
    %211 = vector.shape_cast %210 : vector<17xf32> to vector<17x1xf32>
    %212 = vector.broadcast %211 : vector<17x1xf32> to vector<17x17xf32>
    %213 = arith.subf %209, %212 : vector<17x17xf32>
    %214 = math.exp %213 : vector<17x17xf32>
    %cst_107 = arith.constant dense<0.000000e+00> : vector<17xf32>
    %215 = vector.multi_reduction <add>, %214, %cst_107 [1] : vector<17x17xf32> to vector<17xf32>
    %216 = vector.shape_cast %215 : vector<17xf32> to vector<17x1xf32>
    %217 = vector.broadcast %216 : vector<17x1xf32> to vector<17x17xf32>
    %218 = arith.divf %214, %217 : vector<17x17xf32>
    %cst_108 = arith.constant dense<0.000000e+00> : vector<17x16xf32>
    %219 = tpu.matmul %218, %208, %cst_108 {dimension_numbers = #tpu.dot_dimension_numbers<[1], [0], [0], [1], [0, 0, 1, 1], [], []>} : vector<17x17xf32>, vector<17x16xf32>, vector<17x16xf32> -> vector<17x16xf32>
    %220 = vector.extract_strided_slice %181 {offsets = [16, 0], sizes = [16, 32], strides = [1, 1]} : vector<32x32xf32> to vector<16x32xf32>
    %cst_109 = arith.constant dense<0.000000e+00> : vector<17x32xf32>
    %221 = tpu.matmul %219, %220, %cst_109 {dimension_numbers = #tpu.dot_dimension_numbers<[1], [0], [0], [1], [0, 0, 1, 1], [], []>} : vector<17x16xf32>, vector<16x32xf32>, vector<17x32xf32> -> vector<17x32xf32>
    %222 = arith.addf %203, %221 : vector<17x32xf32>
    %223 = arith.addf %146, %222 : vector<17x32xf32>
    %c1_110 = arith.constant 1 : index
    %c0_111 = arith.constant 0 : index
    %c0_112 = arith.constant 0 : index
    %224 = vector.load %arg12[%c1_110, %c0_111, %c0_112] : memref<2x1x32xf32, #tpu.memory_space<vmem>>, vector<1x1x32xf32>
    %225 = vector.shape_cast %224 : vector<1x1x32xf32> to vector<1x32xf32>
    %c1_113 = arith.constant 1 : index
    %c0_114 = arith.constant 0 : index
    %c0_115 = arith.constant 0 : index
    %226 = vector.load %arg13[%c1_113, %c0_114, %c0_115] : memref<2x1x32xf32, #tpu.memory_space<vmem>>, vector<1x1x32xf32>
    %227 = vector.shape_cast %226 : vector<1x1x32xf32> to vector<1x32xf32>
    %cst_116 = arith.constant dense<0.000000e+00> : vector<17xf32>
    %228 = vector.multi_reduction <add>, %223, %cst_116 [1] : vector<17x32xf32> to vector<17xf32>
    %229 = vector.shape_cast %228 : vector<17xf32> to vector<17x1xf32>
    %cst_117 = arith.constant 3.200000e+01 : f32
    %230 = vector.broadcast %cst_117 : f32 to vector<17x1xf32>
    %231 = arith.divf %229, %230 : vector<17x1xf32>
    %232 = vector.broadcast %231 : vector<17x1xf32> to vector<17x32xf32>
    %233 = arith.subf %223, %232 : vector<17x32xf32>
    %234 = arith.mulf %233, %233 : vector<17x32xf32>
    %cst_118 = arith.constant dense<0.000000e+00> : vector<17xf32>
    %235 = vector.multi_reduction <add>, %234, %cst_118 [1] : vector<17x32xf32> to vector<17xf32>
    %236 = vector.shape_cast %235 : vector<17xf32> to vector<17x1xf32>
    %cst_119 = arith.constant 3.200000e+01 : f32
    %237 = vector.broadcast %cst_119 : f32 to vector<17x1xf32>
    %238 = arith.divf %236, %237 : vector<17x1xf32>
    %239 = vector.broadcast %231 : vector<17x1xf32> to vector<17x32xf32>
    %240 = arith.subf %223, %239 : vector<17x32xf32>
    %cst_120 = arith.constant 9.99999997E-7 : f32
    %241 = vector.broadcast %cst_120 : f32 to vector<17x1xf32>
    %242 = arith.addf %238, %241 : vector<17x1xf32>
    %243 = math.rsqrt %242 : vector<17x1xf32>
    %244 = vector.broadcast %243 : vector<17x1xf32> to vector<17x32xf32>
    %245 = arith.mulf %240, %244 : vector<17x32xf32>
    %246 = vector.broadcast %225 : vector<1x32xf32> to vector<17x32xf32>
    %247 = arith.mulf %245, %246 : vector<17x32xf32>
    %248 = vector.broadcast %227 : vector<1x32xf32> to vector<17x32xf32>
    %249 = arith.addf %247, %248 : vector<17x32xf32>
    %c1_121 = arith.constant 1 : index
    %c0_122 = arith.constant 0 : index
    %c0_123 = arith.constant 0 : index
    %250 = vector.load %arg14[%c1_121, %c0_122, %c0_123] : memref<2x32x128xf32, #tpu.memory_space<vmem>>, vector<1x32x128xf32>
    %251 = vector.shape_cast %250 : vector<1x32x128xf32> to vector<32x128xf32>
    %cst_124 = arith.constant dense<0.000000e+00> : vector<17x128xf32>
    %252 = tpu.matmul %249, %251, %cst_124 {dimension_numbers = #tpu.dot_dimension_numbers<[1], [0], [0], [1], [0, 0, 1, 1], [], []>} : vector<17x32xf32>, vector<32x128xf32>, vector<17x128xf32> -> vector<17x128xf32>
    %c1_125 = arith.constant 1 : index
    %c0_126 = arith.constant 0 : index
    %c0_127 = arith.constant 0 : index
    %253 = vector.load %arg15[%c1_125, %c0_126, %c0_127] : memref<2x1x128xf32, #tpu.memory_space<vmem>>, vector<1x1x128xf32>
    %254 = vector.shape_cast %253 : vector<1x1x128xf32> to vector<1x128xf32>
    %255 = vector.broadcast %254 : vector<1x128xf32> to vector<17x128xf32>
    %256 = arith.addf %252, %255 : vector<17x128xf32>
    %257 = arith.mulf %256, %256 : vector<17x128xf32>
    %258 = arith.mulf %256, %257 : vector<17x128xf32>
    %cst_128 = arith.constant 4.471500e-02 : f32
    %259 = vector.broadcast %cst_128 : f32 to vector<17x128xf32>
    %260 = arith.mulf %259, %258 : vector<17x128xf32>
    %261 = arith.addf %256, %260 : vector<17x128xf32>
    %cst_129 = arith.constant 0.797884583 : f32
    %262 = vector.broadcast %cst_129 : f32 to vector<17x128xf32>
    %263 = arith.mulf %262, %261 : vector<17x128xf32>
    %264 = math.tanh %263 : vector<17x128xf32>
    %cst_130 = arith.constant 1.000000e+00 : f32
    %265 = vector.broadcast %cst_130 : f32 to vector<17x128xf32>
    %266 = arith.addf %265, %264 : vector<17x128xf32>
    %cst_131 = arith.constant 5.000000e-01 : f32
    %267 = vector.broadcast %cst_131 : f32 to vector<17x128xf32>
    %268 = arith.mulf %267, %266 : vector<17x128xf32>
    %269 = arith.mulf %256, %268 : vector<17x128xf32>
    %c1_132 = arith.constant 1 : index
    %c0_133 = arith.constant 0 : index
    %c0_134 = arith.constant 0 : index
    %270 = vector.load %arg16[%c1_132, %c0_133, %c0_134] : memref<2x128x32xf32, #tpu.memory_space<vmem>>, vector<1x128x32xf32>
    %271 = vector.shape_cast %270 : vector<1x128x32xf32> to vector<128x32xf32>
    %cst_135 = arith.constant dense<0.000000e+00> : vector<17x32xf32>
    %272 = tpu.matmul %269, %271, %cst_135 {dimension_numbers = #tpu.dot_dimension_numbers<[1], [0], [0], [1], [0, 0, 1, 1], [], []>} : vector<17x128xf32>, vector<128x32xf32>, vector<17x32xf32> -> vector<17x32xf32>
    %c1_136 = arith.constant 1 : index
    %c0_137 = arith.constant 0 : index
    %c0_138 = arith.constant 0 : index
    %273 = vector.load %arg17[%c1_136, %c0_137, %c0_138] : memref<2x1x32xf32, #tpu.memory_space<vmem>>, vector<1x1x32xf32>
    %274 = vector.shape_cast %273 : vector<1x1x32xf32> to vector<1x32xf32>
    %275 = vector.broadcast %274 : vector<1x32xf32> to vector<17x32xf32>
    %276 = arith.addf %272, %275 : vector<17x32xf32>
    %277 = arith.addf %223, %276 : vector<17x32xf32>
    %c0_139 = arith.constant 0 : index
    %c0_140 = arith.constant 0 : index
    %278 = vector.load %arg18[%c0_139, %c0_140] : memref<1x32xf32, #tpu.memory_space<vmem>>, vector<1x32xf32>
    %c0_141 = arith.constant 0 : index
    %c0_142 = arith.constant 0 : index
    %279 = vector.load %arg19[%c0_141, %c0_142] : memref<1x32xf32, #tpu.memory_space<vmem>>, vector<1x32xf32>
    %cst_143 = arith.constant dense<0.000000e+00> : vector<17xf32>
    %280 = vector.multi_reduction <add>, %277, %cst_143 [1] : vector<17x32xf32> to vector<17xf32>
    %281 = vector.shape_cast %280 : vector<17xf32> to vector<17x1xf32>
    %cst_144 = arith.constant 3.200000e+01 : f32
    %282 = vector.broadcast %cst_144 : f32 to vector<17x1xf32>
    %283 = arith.divf %281, %282 : vector<17x1xf32>
    %284 = vector.broadcast %283 : vector<17x1xf32> to vector<17x32xf32>
    %285 = arith.subf %277, %284 : vector<17x32xf32>
    %286 = arith.mulf %285, %285 : vector<17x32xf32>
    %cst_145 = arith.constant dense<0.000000e+00> : vector<17xf32>
    %287 = vector.multi_reduction <add>, %286, %cst_145 [1] : vector<17x32xf32> to vector<17xf32>
    %288 = vector.shape_cast %287 : vector<17xf32> to vector<17x1xf32>
    %cst_146 = arith.constant 3.200000e+01 : f32
    %289 = vector.broadcast %cst_146 : f32 to vector<17x1xf32>
    %290 = arith.divf %288, %289 : vector<17x1xf32>
    %291 = vector.broadcast %283 : vector<17x1xf32> to vector<17x32xf32>
    %292 = arith.subf %277, %291 : vector<17x32xf32>
    %cst_147 = arith.constant 9.99999997E-7 : f32
    %293 = vector.broadcast %cst_147 : f32 to vector<17x1xf32>
    %294 = arith.addf %290, %293 : vector<17x1xf32>
    %295 = math.rsqrt %294 : vector<17x1xf32>
    %296 = vector.broadcast %295 : vector<17x1xf32> to vector<17x32xf32>
    %297 = arith.mulf %292, %296 : vector<17x32xf32>
    %298 = vector.broadcast %278 : vector<1x32xf32> to vector<17x32xf32>
    %299 = arith.mulf %297, %298 : vector<17x32xf32>
    %300 = vector.broadcast %279 : vector<1x32xf32> to vector<17x32xf32>
    %301 = arith.addf %299, %300 : vector<17x32xf32>
    %cst_148 = arith.constant 9.99999997E-7 : f32
    %302 = vector.broadcast %cst_148 : f32 to vector<17x32xf32>
    %303 = arith.maximumf %301, %302 : vector<17x32xf32>
    %304 = arith.mulf %303, %303 : vector<17x32xf32>
    %305 = arith.mulf %304, %303 : vector<17x32xf32>
    %cst_149 = arith.constant dense<0.000000e+00> : vector<32xf32>
    %306 = vector.multi_reduction <add>, %305, %cst_149 [0] : vector<17x32xf32> to vector<32xf32>
    %307 = vector.shape_cast %306 : vector<32xf32> to vector<1x32xf32>
    %cst_150 = arith.constant 1.700000e+01 : f32
    %308 = vector.broadcast %cst_150 : f32 to vector<1x32xf32>
    %309 = arith.divf %307, %308 : vector<1x32xf32>
    %310 = math.log %309 : vector<1x32xf32>
    %cst_151 = arith.constant 0.333333343 : f32
    %311 = vector.broadcast %cst_151 : f32 to vector<1x32xf32>
    %312 = arith.mulf %310, %311 : vector<1x32xf32>
    %313 = math.exp %312 : vector<1x32xf32>
    %c0_152 = arith.constant 0 : index
    %c0_153 = arith.constant 0 : index
    %314 = vector.load %arg20[%c0_152, %c0_153] : memref<32x1xf32, #tpu.memory_space<vmem>>, vector<32x1xf32>
    %cst_154 = arith.constant dense<0.000000e+00> : vector<1x1xf32>
    %315 = tpu.matmul %313, %314, %cst_154 {dimension_numbers = #tpu.dot_dimension_numbers<[1], [0], [0], [1], [0, 0, 1, 1], [], []>} : vector<1x32xf32>, vector<32x1xf32>, vector<1x1xf32> -> vector<1x1xf32>
    %c0_155 = arith.constant 0 : index
    %c0_156 = arith.constant 0 : index
    %316 = vector.load %arg21[%c0_155, %c0_156] : memref<1x1xf32, #tpu.memory_space<vmem>>, vector<1x1xf32>
    %317 = arith.addf %315, %316 : vector<1x1xf32>
    %318 = vector.shape_cast %317 : vector<1x1xf32> to vector<1x1x1xf32>
    %319 = vector.broadcast %318 : vector<1x1x1xf32> to vector<1x1x128xf32>
    %c0_157 = arith.constant 0 : index
    %c0_158 = arith.constant 0 : index
    %c0_159 = arith.constant 0 : index
    %320 = vector.load %arg22[%c0_157, %c0_158, %c0_159] : memref<1x1x128xf32, #tpu.memory_space<vmem>>, vector<1x1x128xf32>
    tpu.vector_store %arg22[%c0_157, %c0_158, %c0_159], %319 {strides = array<i32>} : memref<1x1x128xf32, #tpu.memory_space<vmem>>, vector<1x1x128xf32>,
    return
  }
  func.func @transform_0(%arg0: i32) -> (i32, i32, i32) {
    %c0_i32 = arith.constant 0 : i32
    %c0_i32_0 = arith.constant 0 : i32
    %c0_i32_1 = arith.constant 0 : i32
    return %arg0, %c0_i32, %c0_i32_0 : i32, i32, i32
  }
  func.func @transform_1(%arg0: i32) -> (i32, i32) {
    %c0_i32 = arith.constant 0 : i32
    %c0_i32_0 = arith.constant 0 : i32
    %c0_i32_1 = arith.constant 0 : i32
    return %c0_i32, %c0_i32_0 : i32, i32
  }
  func.func @transform_2(%arg0: i32) -> (i32, i32) {
    %c0_i32 = arith.constant 0 : i32
    %c0_i32_0 = arith.constant 0 : i32
    %c0_i32_1 = arith.constant 0 : i32
    return %c0_i32, %c0_i32_0 : i32, i32
  }
  func.func @transform_3(%arg0: i32) -> (i32, i32) {
    %c0_i32 = arith.constant 0 : i32
    %c0_i32_0 = arith.constant 0 : i32
    %c0_i32_1 = arith.constant 0 : i32
    return %c0_i32, %c0_i32_0 : i32, i32
  }
  func.func @transform_4(%arg0: i32) -> (i32, i32) {
    %c0_i32 = arith.constant 0 : i32
    %c0_i32_0 = arith.constant 0 : i32
    %c0_i32_1 = arith.constant 0 : i32
    return %c0_i32, %c0_i32_0 : i32, i32
  }
  func.func @transform_5(%arg0: i32) -> (i32, i32, i32) {
    %c0_i32 = arith.constant 0 : i32
    %c0_i32_0 = arith.constant 0 : i32
    %c0_i32_1 = arith.constant 0 : i32
    %c0_i32_2 = arith.constant 0 : i32
    return %c0_i32, %c0_i32_0, %c0_i32_1 : i32, i32, i32
  }
  func.func @transform_6(%arg0: i32) -> (i32, i32, i32) {
    %c0_i32 = arith.constant 0 : i32
    %c0_i32_0 = arith.constant 0 : i32
    %c0_i32_1 = arith.constant 0 : i32
    %c0_i32_2 = arith.constant 0 : i32
    return %c0_i32, %c0_i32_0, %c0_i32_1 : i32, i32, i32
  }
  func.func @transform_7(%arg0: i32) -> (i32, i32, i32) {
    %c0_i32 = arith.constant 0 : i32
    %c0_i32_0 = arith.constant 0 : i32
    %c0_i32_1 = arith.constant 0 : i32
    %c0_i32_2 = arith.constant 0 : i32
    return %c0_i32, %c0_i32_0, %c0_i32_1 : i32, i32, i32
  }
  func.func @transform_8(%arg0: i32) -> (i32, i32, i32) {
    %c0_i32 = arith.constant 0 : i32
    %c0_i32_0 = arith.constant 0 : i32
    %c0_i32_1 = arith.constant 0 : i32
    %c0_i32_2 = arith.constant 0 : i32
    return %c0_i32, %c0_i32_0, %c0_i32_1 : i32, i32, i32
  }
  func.func @transform_9(%arg0: i32) -> (i32, i32, i32) {
    %c0_i32 = arith.constant 0 : i32
    %c0_i32_0 = arith.constant 0 : i32
    %c0_i32_1 = arith.constant 0 : i32
    %c0_i32_2 = arith.constant 0 : i32
    return %c0_i32, %c0_i32_0, %c0_i32_1 : i32, i32, i32
  }
  func.func @transform_10(%arg0: i32) -> (i32, i32, i32) {
    %c0_i32 = arith.constant 0 : i32
    %c0_i32_0 = arith.constant 0 : i32
    %c0_i32_1 = arith.constant 0 : i32
    %c0_i32_2 = arith.constant 0 : i32
    return %c0_i32, %c0_i32_0, %c0_i32_1 : i32, i32, i32
  }
  func.func @transform_11(%arg0: i32) -> (i32, i32, i32) {
    %c0_i32 = arith.constant 0 : i32
    %c0_i32_0 = arith.constant 0 : i32
    %c0_i32_1 = arith.constant 0 : i32
    %c0_i32_2 = arith.constant 0 : i32
    return %c0_i32, %c0_i32_0, %c0_i32_1 : i32, i32, i32
  }
  func.func @transform_12(%arg0: i32) -> (i32, i32, i32) {
    %c0_i32 = arith.constant 0 : i32
    %c0_i32_0 = arith.constant 0 : i32
    %c0_i32_1 = arith.constant 0 : i32
    %c0_i32_2 = arith.constant 0 : i32
    return %c0_i32, %c0_i32_0, %c0_i32_1 : i32, i32, i32
  }
  func.func @transform_13(%arg0: i32) -> (i32, i32, i32) {
    %c0_i32 = arith.constant 0 : i32
    %c0_i32_0 = arith.constant 0 : i32
    %c0_i32_1 = arith.constant 0 : i32
    %c0_i32_2 = arith.constant 0 : i32
    return %c0_i32, %c0_i32_0, %c0_i32_1 : i32, i32, i32
  }
  func.func @transform_14(%arg0: i32) -> (i32, i32, i32) {
    %c0_i32 = arith.constant 0 : i32
    %c0_i32_0 = arith.constant 0 : i32
    %c0_i32_1 = arith.constant 0 : i32
    %c0_i32_2 = arith.constant 0 : i32
    return %c0_i32, %c0_i32_0, %c0_i32_1 : i32, i32, i32
  }
  func.func @transform_15(%arg0: i32) -> (i32, i32, i32) {
    %c0_i32 = arith.constant 0 : i32
    %c0_i32_0 = arith.constant 0 : i32
    %c0_i32_1 = arith.constant 0 : i32
    %c0_i32_2 = arith.constant 0 : i32
    return %c0_i32, %c0_i32_0, %c0_i32_1 : i32, i32, i32
  }
  func.func @transform_16(%arg0: i32) -> (i32, i32, i32) {
    %c0_i32 = arith.constant 0 : i32
    %c0_i32_0 = arith.constant 0 : i32
    %c0_i32_1 = arith.constant 0 : i32
    %c0_i32_2 = arith.constant 0 : i32
    return %c0_i32, %c0_i32_0, %c0_i32_1 : i32, i32, i32
  }
  func.func @transform_17(%arg0: i32) -> (i32, i32) {
    %c0_i32 = arith.constant 0 : i32
    %c0_i32_0 = arith.constant 0 : i32
    %c0_i32_1 = arith.constant 0 : i32
    return %c0_i32, %c0_i32_0 : i32, i32
  }
  func.func @transform_18(%arg0: i32) -> (i32, i32) {
    %c0_i32 = arith.constant 0 : i32
    %c0_i32_0 = arith.constant 0 : i32
    %c0_i32_1 = arith.constant 0 : i32
    return %c0_i32, %c0_i32_0 : i32, i32
  }
  func.func @transform_19(%arg0: i32) -> (i32, i32) {
    %c0_i32 = arith.constant 0 : i32
    %c0_i32_0 = arith.constant 0 : i32
    %c0_i32_1 = arith.constant 0 : i32
    return %c0_i32, %c0_i32_0 : i32, i32
  }
  func.func @transform_20(%arg0: i32) -> (i32, i32) {
    %c0_i32 = arith.constant 0 : i32
    %c0_i32_0 = arith.constant 0 : i32
    %c0_i32_1 = arith.constant 0 : i32
    return %c0_i32, %c0_i32_0 : i32, i32
  }
  func.func @transform_21(%arg0: i32) -> (i32, i32, i32) {
    %c0_i32 = arith.constant 0 : i32
    %c0_i32_0 = arith.constant 0 : i32
    %c0_i32_1 = arith.constant 0 : i32
    return %arg0, %c0_i32, %c0_i32_0 : i32, i32, i32
  }
}

</mosaic_0001>

<llo_original>
// kernel: vit_skin_forward.1
$region0: #{vit_skin_forward.1}
  #allocation0 [shape = 'u32[]', space=smem, size = 0x4, offset = 0x4, fixed_abs, tag = 'smem constant byte address 0x4 - core index']
  #allocation1 [shape = 'u32[144,128]{1,0:T(1,128)}', space=vmem, size = 0x12000, scoped, tag = 'internal scratch']
  #allocation2 [shape = 'f32[1,1]{1,0:T(1,128)S(1)}', space=vmem, size = 0x200, scoped, tag = 'scoped memory for vit_skin_forward.1']
  %s0 = inlined_call_operand.vmem [shape: f32[2,17,48], index: 0, kind: input, shape index: {}]
  %s1 = inlined_call_operand.vmem [shape: f32[48,32], index: 1, kind: input, shape index: {}]
  %s2 = inlined_call_operand.vmem [shape: f32[1,32], index: 2, kind: input, shape index: {}]
  %s3 = inlined_call_operand.vmem [shape: f32[1,32], index: 3, kind: input, shape index: {}]
  %s4 = inlined_call_operand.vmem [shape: f32[17,32], index: 4, kind: input, shape index: {}]
  %s5 = inlined_call_operand.vmem [shape: f32[2,1,32], index: 5, kind: input, shape index: {}]
  %s6 = inlined_call_operand.vmem [shape: f32[2,1,32], index: 6, kind: input, shape index: {}]
  %s7 = inlined_call_operand.vmem [shape: f32[2,32,96], index: 7, kind: input, shape index: {}]
  %s8 = inlined_call_operand.vmem [shape: f32[2,1,96], index: 8, kind: input, shape index: {}]
  %s9 = inlined_call_operand.vmem [shape: f32[2,32,32], index: 9, kind: input, shape index: {}]
  %s10 = inlined_call_operand.vmem [shape: f32[2,1,32], index: 10, kind: input, shape index: {}]
  %s11 = inlined_call_operand.vmem [shape: f32[2,1,32], index: 11, kind: input, shape index: {}]
  %s12 = inlined_call_operand.vmem [shape: f32[2,1,32], index: 12, kind: input, shape index: {}]
  %s13 = inlined_call_operand.vmem [shape: f32[2,32,128], index: 13, kind: input, shape index: {}]
  %s14 = inlined_call_operand.vmem [shape: f32[2,1,128], index: 14, kind: input, shape index: {}]
  %s15 = inlined_call_operand.vmem [shape: f32[2,128,32], index: 15, kind: input, shape index: {}]
  %s16 = inlined_call_operand.vmem [shape: f32[2,1,32], index: 16, kind: input, shape index: {}]
  %s17 = inlined_call_operand.vmem [shape: f32[1,32], index: 17, kind: input, shape index: {}]
  %s18 = inlined_call_operand.vmem [shape: f32[1,32], index: 18, kind: input, shape index: {}]
  %s19 = inlined_call_operand.vmem [shape: f32[32,1], index: 19, kind: input, shape index: {}]
  %s20 = inlined_call_operand.<no memory space> [shape: f32[1,1], index: 20, kind: input, shape index: {}]
  %s21 = inlined_call_operand.vmem [shape: f32[2,1,128], index: 21, kind: output, shape index: {}]
  %s22 = sld [smem:[#allocation0]]
  $region117: #{vit_skin_forward.1} parent=0
    _
  %s24 = ssub.s32 1, %s22
  %s25 = scalar_select 0, %s24, %s22
  %v26 = vstv %s20
  %27 = vst [vmem:[#allocation2] sm:$0x1] %v26
  loop: start=0, step=1, limit=4
  $region2: #{vit_skin_forward.1} parent=0 // loop_pre_header
    _
  $region3: #{vit_skin_forward.1} parent=0 // loop_header
    %s29 = sphi 0, %s33
    %p30 = scmp.ge.s32.totalorder %s29, 4
    %s39 = sphi 0, %s41
    %s42 = sphi 0, %s39
    %s43 = sphi 0, %s42
    %s59 = sphi 0, %s43
    %s63 = sphi 0, %s63
    %s65 = sphi 0, %s63
    %s66 = sphi 0, %s65
    %s80 = sphi 0, %s66
    %s84 = sphi 0, %s84
    %s86 = sphi 0, %s84
    %s87 = sphi 0, %s86
    %s101 = sphi 0, %s87
    %s105 = sphi 0, %s105
    %s107 = sphi 0, %s105
    %s108 = sphi 0, %s107
    %s122 = sphi 0, %s108
    %s126 = sphi 0, %s126
    %s128 = sphi 0, %s126
    %s129 = sphi 0, %s128
    %s143 = sphi 0, %s129
    %s147 = sphi 0, %s147
    %s149 = sphi 0, %s147
    %s150 = sphi 0, %s149
    %s164 = sphi 0, %s150
    %s168 = sphi 0, %s168
    %s170 = sphi 0, %s168
    %s171 = sphi 0, %s170
    %s185 = sphi 0, %s171
    %s189 = sphi 0, %s189
    %s191 = sphi 0, %s189
    %s192 = sphi 0, %s191
    %s206 = sphi 0, %s192
    %s210 = sphi 0, %s210
    %s212 = sphi 0, %s210
    %s213 = sphi 0, %s212
    %s227 = sphi 0, %s213
    %s231 = sphi 0, %s231
    %s233 = sphi 0, %s231
    %s234 = sphi 0, %s233
    %s248 = sphi 0, %s234
    %s252 = sphi 0, %s252
    %s254 = sphi 0, %s252
    %s255 = sphi 0, %s254
    %s269 = sphi 0, %s255
    %s273 = sphi 0, %s273
    %s275 = sphi 0, %s273
    %s276 = sphi 0, %s275
    %s290 = sphi 0, %s276
    %s294 = sphi 0, %s294
    %s296 = sphi 0, %s294
    %s297 = sphi 0, %s296
    %s311 = sphi 0, %s297
    %s315 = sphi 0, %s315
    %s317 = sphi 0, %s315
    %s318 = sphi 0, %s317
    %s332 = sphi 0, %s318
    %s336 = sphi 0, %s336
    %s338 = sphi 0, %s336
    %s339 = sphi 0, %s338
    %s353 = sphi 0, %s339
    %s357 = sphi 0, %s357
    %s359 = sphi 0, %s357
    %s360 = sphi 0, %s359
    %s374 = sphi 0, %s360
    %s378 = sphi 0, %s378
    %s380 = sphi 0, %s378
    %s381 = sphi 0, %s380
    %s395 = sphi 0, %s381
    %s399 = sphi 0, %s399
    %s401 = sphi 0, %s399
    %s402 = sphi 0, %s401
    %s416 = sphi 0, %s402
    %s420 = sphi 0, %s420
    %s422 = sphi 0, %s420
    %s423 = sphi 0, %s422
    %s437 = sphi 0, %s423
    %s441 = sphi 0, %s441
    %s443 = sphi 0, %s441
    %s444 = sphi 0, %s443
    %s458 = sphi 0, %s444
    %s462 = sphi 0, %s462
    %s464 = sphi 0, %s462
    %s465 = sphi 0, %s464
    %s479 = sphi 0, %s465
    %s485 = sphi 0, %s487
    %s488 = sphi 0, %s485
    %s489 = sphi 0, %s488
    %s505 = sphi 0, %s489
  $region4: #{vit_skin_forward.1} parent=0 // loop_header_branch
    %32 = sbr.rel (%p30) target = $region8
  $region5: #{vit_skin_forward.1} parent=0 // loop_body
    %s34 = ssub.s32 %s29, 1
    %s35 = ssub.s32 %s29, 2
    %s36 = sadd.s32 %s29, 1
    %s37 = ssub.s32 %s29, %s36
    %p38 = scmp.eq.s32.totalorder %s37, 0
    %s40 = sadd.s32 %s39, 1
    %s41 = scalar_select %p38, %s39, %s40
    %p44 = pneg %p38
    %p45 = scmp.eq.s32.totalorder %s29, 1
    %p46 = por %p44, %p45
    %p47 = scmp.ne.s32.totalorder %s39, %s42
    %p48 = scmp.eq.s32.totalorder %s29, 0
    %p49 = por %p47, %p48
    %p50 = scmp.ne.s32.totalorder %s39, %s42
    %p51 = scmp.eq.s32.totalorder %s34, 1
    %p52 = por %p50, %p51
    %p53 = scmp.ne.s32.totalorder %s42, %s43
    %p54 = scmp.eq.s32.totalorder %s34, 0
    %p55 = por %p53, %p54
    %p56 = scmp.ne.s32.totalorder %s42, %s43
    %p57 = scmp.eq.s32.totalorder %s35, 1
    %p58 = por %p56, %p57
    %p60 = scmp.ne.s32.totalorder %s43, %s59
    %p61 = scmp.eq.s32.totalorder %s35, 0
    %p62 = por %p60, %p61
    %s64 = sadd.s32 %s63, 1
    %p67 = scmp.eq.s32.totalorder %s29, 1
    %p68 = scmp.ne.s32.totalorder %s63, %s65
    %p69 = scmp.eq.s32.totalorder %s29, 0
    %p70 = por %p68, %p69
    %p71 = scmp.ne.s32.totalorder %s63, %s65
    %p72 = scmp.eq.s32.totalorder %s34, 1
    %p73 = por %p71, %p72
    %p74 = scmp.ne.s32.totalorder %s65, %s66
    %p75 = scmp.eq.s32.totalorder %s34, 0
    %p76 = por %p74, %p75
    %p77 = scmp.ne.s32.totalorder %s65, %s66
    %p78 = scmp.eq.s32.totalorder %s35, 1
    %p79 = por %p77, %p78
    %p81 = scmp.ne.s32.totalorder %s66, %s80
    %p82 = scmp.eq.s32.totalorder %s35, 0
    %p83 = por %p81, %p82
    %s85 = sadd.s32 %s84, 1
    %p88 = scmp.eq.s32.totalorder %s29, 1
    %p89 = scmp.ne.s32.totalorder %s84, %s86
    %p90 = scmp.eq.s32.totalorder %s29, 0
    %p91 = por %p89, %p90
    %p92 = scmp.ne.s32.totalorder %s84, %s86
    %p93 = scmp.eq.s32.totalorder %s34, 1
    %p94 = por %p92, %p93
    %p95 = scmp.ne.s32.totalorder %s86, %s87
    %p96 = scmp.eq.s32.totalorder %s34, 0
    %p97 = por %p95, %p96
    %p98 = scmp.ne.s32.totalorder %s86, %s87
    %p99 = scmp.eq.s32.totalorder %s35, 1
    %p100 = por %p98, %p99
    %p102 = scmp.ne.s32.totalorder %s87, %s101
    %p103 = scmp.eq.s32.totalorder %s35, 0
    %p104 = por %p102, %p103
    %s106 = sadd.s32 %s105, 1
    %p109 = scmp.eq.s32.totalorder %s29, 1
    %p110 = scmp.ne.s32.totalorder %s105, %s107
    %p111 = scmp.eq.s32.totalorder %s29, 0
    %p112 = por %p110, %p111
    %p113 = scmp.ne.s32.totalorder %s105, %s107
    %p114 = scmp.eq.s32.totalorder %s34, 1
    %p115 = por %p113, %p114
    %p116 = scmp.ne.s32.totalorder %s107, %s108
    %p117 = scmp.eq.s32.totalorder %s34, 0
    %p118 = por %p116, %p117
    %p119 = scmp.ne.s32.totalorder %s107, %s108
    %p120 = scmp.eq.s32.totalorder %s35, 1
    %p121 = por %p119, %p120
    %p123 = scmp.ne.s32.totalorder %s108, %s122
    %p124 = scmp.eq.s32.totalorder %s35, 0
    %p125 = por %p123, %p124
    %s127 = sadd.s32 %s126, 1
    %p130 = scmp.eq.s32.totalorder %s29, 1
    %p131 = scmp.ne.s32.totalorder %s126, %s128
    %p132 = scmp.eq.s32.totalorder %s29, 0
    %p133 = por %p131, %p132
    %p134 = scmp.ne.s32.totalorder %s126, %s128
    %p135 = scmp.eq.s32.totalorder %s34, 1
    %p136 = por %p134, %p135
    %p137 = scmp.ne.s32.totalorder %s128, %s129
    %p138 = scmp.eq.s32.totalorder %s34, 0
    %p139 = por %p137, %p138
    %p140 = scmp.ne.s32.totalorder %s128, %s129
    %p141 = scmp.eq.s32.totalorder %s35, 1
    %p142 = por %p140, %p141
    %p144 = scmp.ne.s32.totalorder %s129, %s143
    %p145 = scmp.eq.s32.totalorder %s35, 0
    %p146 = por %p144, %p145
    %s148 = sadd.s32 %s147, 1
    %p151 = scmp.eq.s32.totalorder %s29, 1
    %p152 = scmp.ne.s32.totalorder %s147, %s149
    %p153 = scmp.eq.s32.totalorder %s29, 0
    %p154 = por %p152, %p153
    %p155 = scmp.ne.s32.totalorder %s147, %s149
    %p156 = scmp.eq.s32.totalorder %s34, 1
    %p157 = por %p155, %p156
    %p158 = scmp.ne.s32.totalorder %s149, %s150
    %p159 = scmp.eq.s32.totalorder %s34, 0
    %p160 = por %p158, %p159
    %p161 = scmp.ne.s32.totalorder %s149, %s150
    %p162 = scmp.eq.s32.totalorder %s35, 1
    %p163 = por %p161, %p162
    %p165 = scmp.ne.s32.totalorder %s150, %s164
    %p166 = scmp.eq.s32.totalorder %s35, 0
    %p167 = por %p165, %p166
    %s169 = sadd.s32 %s168, 1
    %p172 = scmp.eq.s32.totalorder %s29, 1
    %p173 = scmp.ne.s32.totalorder %s168, %s170
    %p174 = scmp.eq.s32.totalorder %s29, 0
    %p175 = por %p173, %p174
    %p176 = scmp.ne.s32.totalorder %s168, %s170
    %p177 = scmp.eq.s32.totalorder %s34, 1
    %p178 = por %p176, %p177
    %p179 = scmp.ne.s32.totalorder %s170, %s171
    %p180 = scmp.eq.s32.totalorder %s34, 0
    %p181 = por %p179, %p180
    %p182 = scmp.ne.s32.totalorder %s170, %s171
    %p183 = scmp.eq.s32.totalorder %s35, 1
    %p184 = por %p182, %p183
    %p186 = scmp.ne.s32.totalorder %s171, %s185
    %p187 = scmp.eq.s32.totalorder %s35, 0
    %p188 = por %p186, %p187
    %s190 = sadd.s32 %s189, 1
    %p193 = scmp.eq.s32.totalorder %s29, 1
    %p194 = scmp.ne.s32.totalorder %s189, %s191
    %p195 = scmp.eq.s32.totalorder %s29, 0
    %p196 = por %p194, %p195
    %p197 = scmp.ne.s32.totalorder %s189, %s191
    %p198 = scmp.eq.s32.totalorder %s34, 1
    %p199 = por %p197, %p198
    %p200 = scmp.ne.s32.totalorder %s191, %s192
    %p201 = scmp.eq.s32.totalorder %s34, 0
    %p202 = por %p200, %p201
    %p203 = scmp.ne.s32.totalorder %s191, %s192
    %p204 = scmp.eq.s32.totalorder %s35, 1
    %p205 = por %p203, %p204
    %p207 = scmp.ne.s32.totalorder %s192, %s206
    %p208 = scmp.eq.s32.totalorder %s35, 0
    %p209 = por %p207, %p208
    %s211 = sadd.s32 %s210, 1
    %p214 = scmp.eq.s32.totalorder %s29, 1
    %p215 = scmp.ne.s32.totalorder %s210, %s212
    %p216 = scmp.eq.s32.totalorder %s29, 0
    %p217 = por %p215, %p216
    %p218 = scmp.ne.s32.totalorder %s210, %s212
    %p219 = scmp.eq.s32.totalorder %s34, 1
    %p220 = por %p218, %p219
    %p221 = scmp.ne.s32.totalorder %s212, %s213
    %p222 = scmp.eq.s32.totalorder %s34, 0
    %p223 = por %p221, %p222
    %p224 = scmp.ne.s32.totalorder %s212, %s213
    %p225 = scmp.eq.s32.totalorder %s35, 1
    %p226 = por %p224, %p225
    %p228 = scmp.ne.s32.totalorder %s213, %s227
    %p229 = scmp.eq.s32.totalorder %s35, 0
    %p230 = por %p228, %p229
    %s232 = sadd.s32 %s231, 1
    %p235 = scmp.eq.s32.totalorder %s29, 1
    %p236 = scmp.ne.s32.totalorder %s231, %s233
    %p237 = scmp.eq.s32.totalorder %s29, 0
    %p238 = por %p236, %p237
    %p239 = scmp.ne.s32.totalorder %s231, %s233
    %p240 = scmp.eq.s32.totalorder %s34, 1
    %p241 = por %p239, %p240
    %p242 = scmp.ne.s32.totalorder %s233, %s234
    %p243 = scmp.eq.s32.totalorder %s34, 0
    %p244 = por %p242, %p243
    %p245 = scmp.ne.s32.totalorder %s233, %s234
    %p246 = scmp.eq.s32.totalorder %s35, 1
    %p247 = por %p245, %p246
    %p249 = scmp.ne.s32.totalorder %s234, %s248
    %p250 = scmp.eq.s32.totalorder %s35, 0
    %p251 = por %p249, %p250
    %s253 = sadd.s32 %s252, 1
    %p256 = scmp.eq.s32.totalorder %s29, 1
    %p257 = scmp.ne.s32.totalorder %s252, %s254
    %p258 = scmp.eq.s32.totalorder %s29, 0
    %p259 = por %p257, %p258
    %p260 = scmp.ne.s32.totalorder %s252, %s254
    %p261 = scmp.eq.s32.totalorder %s34, 1
    %p262 = por %p260, %p261
    %p263 = scmp.ne.s32.totalorder %s254, %s255
    %p264 = scmp.eq.s32.totalorder %s34, 0
    %p265 = por %p263, %p264
    %p266 = scmp.ne.s32.totalorder %s254, %s255
    %p267 = scmp.eq.s32.totalorder %s35, 1
    %p268 = por %p266, %p267
    %p270 = scmp.ne.s32.totalorder %s255, %s269
    %p271 = scmp.eq.s32.totalorder %s35, 0
    %p272 = por %p270, %p271
    %s274 = sadd.s32 %s273, 1
    %p277 = scmp.eq.s32.totalorder %s29, 1
    %p278 = scmp.ne.s32.totalorder %s273, %s275
    %p279 = scmp.eq.s32.totalorder %s29, 0
    %p280 = por %p278, %p279
    %p281 = scmp.ne.s32.totalorder %s273, %s275
    %p282 = scmp.eq.s32.totalorder %s34, 1
    %p283 = por %p281, %p282
    %p284 = scmp.ne.s32.totalorder %s275, %s276
    %p285 = scmp.eq.s32.totalorder %s34, 0
    %p286 = por %p284, %p285
    %p287 = scmp.ne.s32.totalorder %s275, %s276
    %p288 = scmp.eq.s32.totalorder %s35, 1
    %p289 = por %p287, %p288
    %p291 = scmp.ne.s32.totalorder %s276, %s290
    %p292 = scmp.eq.s32.totalorder %s35, 0
    %p293 = por %p291, %p292
    %s295 = sadd.s32 %s294, 1
    %p298 = scmp.eq.s32.totalorder %s29, 1
    %p299 = scmp.ne.s32.totalorder %s294, %s296
    %p300 = scmp.eq.s32.totalorder %s29, 0
    %p301 = por %p299, %p300
    %p302 = scmp.ne.s32.totalorder %s294, %s296
    %p303 = scmp.eq.s32.totalorder %s34, 1
    %p304 = por %p302, %p303
    %p305 = scmp.ne.s32.totalorder %s296, %s297
    %p306 = scmp.eq.s32.totalorder %s34, 0
    %p307 = por %p305, %p306
    %p308 = scmp.ne.s32.totalorder %s296, %s297
    %p309 = scmp.eq.s32.totalorder %s35, 1
    %p310 = por %p308, %p309
    %p312 = scmp.ne.s32.totalorder %s297, %s311
    %p313 = scmp.eq.s32.totalorder %s35, 0
    %p314 = por %p312, %p313
    %s316 = sadd.s32 %s315, 1
    %p319 = scmp.eq.s32.totalorder %s29, 1
    %p320 = scmp.ne.s32.totalorder %s315, %s317
    %p321 = scmp.eq.s32.totalorder %s29, 0
    %p322 = por %p320, %p321
    %p323 = scmp.ne.s32.totalorder %s315, %s317
    %p324 = scmp.eq.s32.totalorder %s34, 1
    %p325 = por %p323, %p324
    %p326 = scmp.ne.s32.totalorder %s317, %s318
    %p327 = scmp.eq.s32.totalorder %s34, 0
    %p328 = por %p326, %p327
    %p329 = scmp.ne.s32.totalorder %s317, %s318
    %p330 = scmp.eq.s32.totalorder %s35, 1
    %p331 = por %p329, %p330
    %p333 = scmp.ne.s32.totalorder %s318, %s332
    %p334 = scmp.eq.s32.totalorder %s35, 0
    %p335 = por %p333, %p334
    %s337 = sadd.s32 %s336, 1
    %p340 = scmp.eq.s32.totalorder %s29, 1
    %p341 = scmp.ne.s32.totalorder %s336, %s338
    %p342 = scmp.eq.s32.totalorder %s29, 0
    %p343 = por %p341, %p342
    %p344 = scmp.ne.s32.totalorder %s336, %s338
    %p345 = scmp.eq.s32.totalorder %s34, 1
    %p346 = por %p344, %p345
    %p347 = scmp.ne.s32.totalorder %s338, %s339
    %p348 = scmp.eq.s32.totalorder %s34, 0
    %p349 = por %p347, %p348
    %p350 = scmp.ne.s32.totalorder %s338, %s339
    %p351 = scmp.eq.s32.totalorder %s35, 1
    %p352 = por %p350, %p351
    %p354 = scmp.ne.s32.totalorder %s339, %s353
    %p355 = scmp.eq.s32.totalorder %s35, 0
    %p356 = por %p354, %p355
    %s358 = sadd.s32 %s357, 1
    %p361 = scmp.eq.s32.totalorder %s29, 1
    %p362 = scmp.ne.s32.totalorder %s357, %s359
    %p363 = scmp.eq.s32.totalorder %s29, 0
    %p364 = por %p362, %p363
    %p365 = scmp.ne.s32.totalorder %s357, %s359
    %p366 = scmp.eq.s32.totalorder %s34, 1
    %p367 = por %p365, %p366
    %p368 = scmp.ne.s32.totalorder %s359, %s360
    %p369 = scmp.eq.s32.totalorder %s34, 0
    %p370 = por %p368, %p369
    %p371 = scmp.ne.s32.totalorder %s359, %s360
    %p372 = scmp.eq.s32.totalorder %s35, 1
    %p373 = por %p371, %p372
    %p375 = scmp.ne.s32.totalorder %s360, %s374
    %p376 = scmp.eq.s32.totalorder %s35, 0
    %p377 = por %p375, %p376
    %s379 = sadd.s32 %s378, 1
    %p382 = scmp.eq.s32.totalorder %s29, 1
    %p383 = scmp.ne.s32.totalorder %s378, %s380
    %p384 = scmp.eq.s32.totalorder %s29, 0
    %p385 = por %p383, %p384
    %p386 = scmp.ne.s32.totalorder %s378, %s380
    %p387 = scmp.eq.s32.totalorder %s34, 1
    %p388 = por %p386, %p387
    %p389 = scmp.ne.s32.totalorder %s380, %s381
    %p390 = scmp.eq.s32.totalorder %s34, 0
    %p391 = por %p389, %p390
    %p392 = scmp.ne.s32.totalorder %s380, %s381
    %p393 = scmp.eq.s32.totalorder %s35, 1
    %p394 = por %p392, %p393
    %p396 = scmp.ne.s32.totalorder %s381, %s395
    %p397 = scmp.eq.s32.totalorder %s35, 0
    %p398 = por %p396, %p397
    %s400 = sadd.s32 %s399, 1
    %p403 = scmp.eq.s32.totalorder %s29, 1
    %p404 = scmp.ne.s32.totalorder %s399, %s401
    %p405 = scmp.eq.s32.totalorder %s29, 0
    %p406 = por %p404, %p405
    %p407 = scmp.ne.s32.totalorder %s399, %s401
    %p408 = scmp.eq.s32.totalorder %s34, 1
    %p409 = por %p407, %p408
    %p410 = scmp.ne.s32.totalorder %s401, %s402
    %p411 = scmp.eq.s32.totalorder %s34, 0
    %p412 = por %p410, %p411
    %p413 = scmp.ne.s32.totalorder %s401, %s402
    %p414 = scmp.eq.s32.totalorder %s35, 1
    %p415 = por %p413, %p414
    %p417 = scmp.ne.s32.totalorder %s402, %s416
    %p418 = scmp.eq.s32.totalorder %s35, 0
    %p419 = por %p417, %p418
    %s421 = sadd.s32 %s420, 1
    %p424 = scmp.eq.s32.totalorder %s29, 1
    %p425 = scmp.ne.s32.totalorder %s420, %s422
    %p426 = scmp.eq.s32.totalorder %s29, 0
    %p427 = por %p425, %p426
    %p428 = scmp.ne.s32.totalorder %s420, %s422
    %p429 = scmp.eq.s32.totalorder %s34, 1
    %p430 = por %p428, %p429
    %p431 = scmp.ne.s32.totalorder %s422, %s423
    %p432 = scmp.eq.s32.totalorder %s34, 0
    %p433 = por %p431, %p432
    %p434 = scmp.ne.s32.totalorder %s422, %s423
    %p435 = scmp.eq.s32.totalorder %s35, 1
    %p436 = por %p434, %p435
    %p438 = scmp.ne.s32.totalorder %s423, %s437
    %p439 = scmp.eq.s32.totalorder %s35, 0
    %p440 = por %p438, %p439
    %s442 = sadd.s32 %s441, 1
    %p445 = scmp.eq.s32.totalorder %s29, 1
    %p446 = scmp.ne.s32.totalorder %s441, %s443
    %p447 = scmp.eq.s32.totalorder %s29, 0
    %p448 = por %p446, %p447
    %p449 = scmp.ne.s32.totalorder %s441, %s443
    %p450 = scmp.eq.s32.totalorder %s34, 1
    %p451 = por %p449, %p450
    %p452 = scmp.ne.s32.totalorder %s443, %s444
    %p453 = scmp.eq.s32.totalorder %s34, 0
    %p454 = por %p452, %p453
    %p455 = scmp.ne.s32.totalorder %s443, %s444
    %p456 = scmp.eq.s32.totalorder %s35, 1
    %p457 = por %p455, %p456
    %p459 = scmp.ne.s32.totalorder %s444, %s458
    %p460 = scmp.eq.s32.totalorder %s35, 0
    %p461 = por %p459, %p460
    %s463 = sadd.s32 %s462, 1
    %p466 = scmp.eq.s32.totalorder %s29, 1
    %p467 = scmp.ne.s32.totalorder %s462, %s464
    %p468 = scmp.eq.s32.totalorder %s29, 0
    %p469 = por %p467, %p468
    %p470 = scmp.ne.s32.totalorder %s462, %s464
    %p471 = scmp.eq.s32.totalorder %s34, 1
    %p472 = por %p470, %p471
    %p473 = scmp.ne.s32.totalorder %s464, %s465
    %p474 = scmp.eq.s32.totalorder %s34, 0
    %p475 = por %p473, %p474
    %p476 = scmp.ne.s32.totalorder %s464, %s465
    %p477 = scmp.eq.s32.totalorder %s35, 1
    %p478 = por %p476, %p477
    %p480 = scmp.ne.s32.totalorder %s465, %s479
    %p481 = scmp.eq.s32.totalorder %s35, 0
    %p482 = por %p480, %p481
    %s483 = ssub.s32 %s29, %s36
    %p484 = scmp.eq.s32.totalorder %s483, 0
    %s486 = sadd.s32 %s485, 1
    %s487 = scalar_select %p484, %s485, %s486
    %p490 = pneg %p484
    %p491 = scmp.eq.s32.totalorder %s29, 1
    %p492 = por %p490, %p491
    %p493 = scmp.ne.s32.totalorder %s485, %s488
    %p494 = scmp.eq.s32.totalorder %s29, 0
    %p495 = por %p493, %p494
    %p496 = scmp.ne.s32.totalorder %s485, %s488
    %p497 = scmp.eq.s32.totalorder %s34, 1
    %p498 = por %p496, %p497
    %p499 = scmp.ne.s32.totalorder %s488, %s489
    %p500 = scmp.eq.s32.totalorder %s34, 0
    %p501 = por %p499, %p500
    %p502 = scmp.ne.s32.totalorder %s488, %s489
    %p503 = scmp.eq.s32.totalorder %s35, 1
    %p504 = por %p502, %p503
    %p506 = scmp.ne.s32.totalorder %s489, %s505
    %p507 = scmp.eq.s32.totalorder %s35, 0
    %p508 = por %p506, %p507
    %p509 = scmp.le.s32.totalorder 1, %s29
    %p510 = scmp.lt.s32.totalorder %s29, 3
    %p511 = pnand %p509, %p510
    %p512 = pneg %p511
    // Predicated region
    $region9: #{vit_skin_forward.1} parent=5 // pred_check
      _
    $region10: #{vit_skin_forward.1} parent=5 // pred_check_branch
      %514 = sbr.rel (%p511) target = $region12
    $region11: #{vit_skin_forward.1} parent=5 // pred_region
      %s515 = ssub.s32 %s29, 1
      // Predicated region
      $region13: #{vit_skin_forward.1} parent=11 // pred_check
        %p516 = pneg %p76
      $region14: #{vit_skin_forward.1} parent=11 // pred_check_branch
        %518 = sbr.rel (%p516) target = $region16
      $region15: #{vit_skin_forward.1} parent=11 // pred_region
        _
      $region16: #{vit_skin_forward.1} parent=11 // pred_fallthru
        _
      // Predicated region
      $region17: #{vit_skin_forward.1} parent=11 // pred_check
        %p519 = pneg %p97
      $region18: #{vit_skin_forward.1} parent=11 // pred_check_branch
        %521 = sbr.rel (%p519) target = $region20
      $region19: #{vit_skin_forward.1} parent=11 // pred_region
        _
      $region20: #{vit_skin_forward.1} parent=11 // pred_fallthru
        _
      // Predicated region
      $region21: #{vit_skin_forward.1} parent=11 // pred_check
        %p522 = pneg %p118
      $region22: #{vit_skin_forward.1} parent=11 // pred_check_branch
        %524 = sbr.rel (%p522) target = $region24
      $region23: #{vit_skin_forward.1} parent=11 // pred_region
        _
      $region24: #{vit_skin_forward.1} parent=11 // pred_fallthru
        _
      // Predicated region
      $region25: #{vit_skin_forward.1} parent=11 // pred_check
        %p525 = pneg %p139
      $region26: #{vit_skin_forward.1} parent=11 // pred_check_branch
        %527 = sbr.rel (%p525) target = $region28
      $region27: #{vit_skin_forward.1} parent=11 // pred_region
        _
      $region28: #{vit_skin_forward.1} parent=11 // pred_fallthru
        _
      // Predicated region
      $region29: #{vit_skin_forward.1} parent=11 // pred_check
        %p528 = pneg %p160
      $region30: #{vit_skin_forward.1} parent=11 // pred_check_branch
        %530 = sbr.rel (%p528) target = $region32
      $region31: #{vit_skin_forward.1} parent=11 // pred_region
        _
      $region32: #{vit_skin_forward.1} parent=11 // pred_fallthru
        _
      // Predicated region
      $region33: #{vit_skin_forward.1} parent=11 // pred_check
        %p531 = pneg %p181
      $region34: #{vit_skin_forward.1} parent=11 // pred_check_branch
        %533 = sbr.rel (%p531) target = $region36
      $region35: #{vit_skin_forward.1} parent=11 // pred_region
        _
      $region36: #{vit_skin_forward.1} parent=11 // pred_fallthru
        _
      // Predicated region
      $region37: #{vit_skin_forward.1} parent=11 // pred_check
        %p534 = pneg %p202
      $region38: #{vit_skin_forward.1} parent=11 // pred_check_branch
        %536 = sbr.rel (%p534) target = $region40
      $region39: #{vit_skin_forward.1} parent=11 // pred_region
        _
      $region40: #{vit_skin_forward.1} parent=11 // pred_fallthru
        _
      // Predicated region
      $region41: #{vit_skin_forward.1} parent=11 // pred_check
        %p537 = pneg %p223
      $region42: #{vit_skin_forward.1} parent=11 // pred_check_branch
        %539 = sbr.rel (%p537) target = $region44
      $region43: #{vit_skin_forward.1} parent=11 // pred_region
        _
      $region44: #{vit_skin_forward.1} parent=11 // pred_fallthru
        _
      // Predicated region
      $region45: #{vit_skin_forward.1} parent=11 // pred_check
        %p540 = pneg %p244
      $region46: #{vit_skin_forward.1} parent=11 // pred_check_branch
        %542 = sbr.rel (%p540) target = $region48
      $region47: #{vit_skin_forward.1} parent=11 // pred_region
        _
      $region48: #{vit_skin_forward.1} parent=11 // pred_fallthru
        _
      // Predicated region
      $region49: #{vit_skin_forward.1} parent=11 // pred_check
        %p543 = pneg %p265
      $region50: #{vit_skin_forward.1} parent=11 // pred_check_branch
        %545 = sbr.rel (%p543) target = $region52
      $region51: #{vit_skin_forward.1} parent=11 // pred_region
        _
      $region52: #{vit_skin_forward.1} parent=11 // pred_fallthru
        _
      // Predicated region
      $region53: #{vit_skin_forward.1} parent=11 // pred_check
        %p546 = pneg %p286
      $region54: #{vit_skin_forward.1} parent=11 // pred_check_branch
        %548 = sbr.rel (%p546) target = $region56
      $region55: #{vit_skin_forward.1} parent=11 // pred_region
        _
      $region56: #{vit_skin_forward.1} parent=11 // pred_fallthru
        _
      // Predicated region
      $region57: #{vit_skin_forward.1} parent=11 // pred_check
        %p549 = pneg %p307
      $region58: #{vit_skin_forward.1} parent=11 // pred_check_branch
        %551 = sbr.rel (%p549) target = $region60
      $region59: #{vit_skin_forward.1} parent=11 // pred_region
        _
      $region60: #{vit_skin_forward.1} parent=11 // pred_fallthru
        _
      // Predicated region
      $region61: #{vit_skin_forward.1} parent=11 // pred_check
        %p552 = pneg %p328
      $region62: #{vit_skin_forward.1} parent=11 // pred_check_branch
        %554 = sbr.rel (%p552) target = $region64
      $region63: #{vit_skin_forward.1} parent=11 // pred_region
        _
      $region64: #{vit_skin_forward.1} parent=11 // pred_fallthru
        _
      // Predicated region
      $region65: #{vit_skin_forward.1} parent=11 // pred_check
        %p555 = pneg %p349
      $region66: #{vit_skin_forward.1} parent=11 // pred_check_branch
        %557 = sbr.rel (%p555) target = $region68
      $region67: #{vit_skin_forward.1} parent=11 // pred_region
        _
      $region68: #{vit_skin_forward.1} parent=11 // pred_fallthru
        _
      // Predicated region
      $region69: #{vit_skin_forward.1} parent=11 // pred_check
        %p558 = pneg %p370
      $region70: #{vit_skin_forward.1} parent=11 // pred_check_branch
        %560 = sbr.rel (%p558) target = $region72
      $region71: #{vit_skin_forward.1} parent=11 // pred_region
        _
      $region72: #{vit_skin_forward.1} parent=11 // pred_fallthru
        _
      // Predicated region
      $region73: #{vit_skin_forward.1} parent=11 // pred_check
        %p561 = pneg %p391
      $region74: #{vit_skin_forward.1} parent=11 // pred_check_branch
        %563 = sbr.rel (%p561) target = $region76
      $region75: #{vit_skin_forward.1} parent=11 // pred_region
        _
      $region76: #{vit_skin_forward.1} parent=11 // pred_fallthru
        _
      // Predicated region
      $region77: #{vit_skin_forward.1} parent=11 // pred_check
        %p564 = pneg %p412
      $region78: #{vit_skin_forward.1} parent=11 // pred_check_branch
        %566 = sbr.rel (%p564) target = $region80
      $region79: #{vit_skin_forward.1} parent=11 // pred_region
        _
      $region80: #{vit_skin_forward.1} parent=11 // pred_fallthru
        _
      // Predicated region
      $region81: #{vit_skin_forward.1} parent=11 // pred_check
        %p567 = pneg %p433
      $region82: #{vit_skin_forward.1} parent=11 // pred_check_branch
        %569 = sbr.rel (%p567) target = $region84
      $region83: #{vit_skin_forward.1} parent=11 // pred_region
        _
      $region84: #{vit_skin_forward.1} parent=11 // pred_fallthru
        _
      // Predicated region
      $region85: #{vit_skin_forward.1} parent=11 // pred_check
        %p570 = pneg %p454
      $region86: #{vit_skin_forward.1} parent=11 // pred_check_branch
        %572 = sbr.rel (%p570) target = $region88
      $region87: #{vit_skin_forward.1} parent=11 // pred_region
        _
      $region88: #{vit_skin_forward.1} parent=11 // pred_fallthru
        _
      // Predicated region
      $region89: #{vit_skin_forward.1} parent=11 // pred_check
        %p573 = pneg %p475
      $region90: #{vit_skin_forward.1} parent=11 // pred_check_branch
        %575 = sbr.rel (%p573) target = $region92
      $region91: #{vit_skin_forward.1} parent=11 // pred_region
        _
      $region92: #{vit_skin_forward.1} parent=11 // pred_fallthru
        _
    $region12: #{vit_skin_forward.1} parent=5 // pred_fallthru
      _
    %p576 = scmp.lt.s32.totalorder %s29, 2
    // Predicated region
    $region93: #{vit_skin_forward.1} parent=5 // pred_check
      %p577 = pneg %p576
    $region94: #{vit_skin_forward.1} parent=5 // pred_check_branch
      %579 = sbr.rel (%p577) target = $region96
    $region95: #{vit_skin_forward.1} parent=5 // pred_region
      // Predicated region
      $region97: #{vit_skin_forward.1} parent=95 // pred_check
        %p580 = pneg %p49
      $region98: #{vit_skin_forward.1} parent=95 // pred_check_branch
        %582 = sbr.rel (%p580) target = $region100
      $region99: #{vit_skin_forward.1} parent=95 // pred_region
        %p583 = scmp.lt.s32.totalorder %s29, 1
        %s584 = scalar_select %p583, %s29, 1
        %s585 = smul.addr %s584, 3
        %s586 = smul.addr %s585, 8
        %s587 = scalar_lea.vmem %s0, %s586
      $region100: #{vit_skin_forward.1} parent=95 // pred_fallthru
        _
    $region96: #{vit_skin_forward.1} parent=5 // pred_fallthru
      _
    %p588 = scmp.le.s32.totalorder 1, %s29
    %p589 = scmp.lt.s32.totalorder %s29, 3
    %p590 = pnand %p588, %p589
    %p591 = pneg %p590
    // Predicated region
    $region101: #{vit_skin_forward.1} parent=5 // pred_check
      _
    $region102: #{vit_skin_forward.1} parent=5 // pred_check_branch
      %593 = sbr.rel (%p590) target = $region104
    $region103: #{vit_skin_forward.1} parent=5 // pred_region
      %s594 = ssub.s32 %s29, 1
      %p595 = scmp.lt.s32.totalorder %s34, 1
      %s596 = scalar_select %p595, %s34, 1
      %s597 = smul.addr %s596, 3
      %s598 = smul.addr %s597, 8
      %s599 = scalar_lea.vmem %s0, %s598
      %p600 = pneg %p55
      %p601 = pneg %p52
      %p602 = pneg %p76
      %p603 = pneg %p73
      %p604 = pneg %p97
      %p605 = pneg %p94
      %p606 = pneg %p118
      %p607 = pneg %p115
      %p608 = pneg %p139
      %p609 = pneg %p136
      %p610 = pneg %p160
      %p611 = pneg %p157
      %p612 = pneg %p181
      %p613 = pneg %p178
      %p614 = pneg %p202
      %p615 = pneg %p199
      %p616 = pneg %p223
      %p617 = pneg %p220
      %p618 = pneg %p244
      %p619 = pneg %p241
      %p620 = pneg %p265
      %p621 = pneg %p262
      %p622 = pneg %p286
      %p623 = pneg %p283
      %p624 = pneg %p307
      %p625 = pneg %p304
      %p626 = pneg %p328
      %p627 = pneg %p325
      %p628 = pneg %p349
      %p629 = pneg %p346
      %p630 = pneg %p370
      %p631 = pneg %p367
      %p632 = pneg %p391
      %p633 = pneg %p388
      %p634 = pneg %p412
      %p635 = pneg %p409
      %p636 = pneg %p433
      %p637 = pneg %p430
      %p638 = pneg %p454
      %p639 = pneg %p451
      %p640 = pneg %p475
      %p641 = pneg %p472
      %p642 = pneg %p501
      %p643 = pneg %p498
      %p644 = scmp.lt.s32.totalorder %s34, 1
      %s645 = scalar_select %p644, %s34, 1
      %s646 = scalar_lea.vmem %s21, %s645
      %p647 = scmp.lt.s32.totalorder %s34, 1
      %s648 = scalar_select %p647, %s34, 1
      %s649 = smul.addr %s648, 3
      %s650 = smul.addr %s649, 8
      %s651 = scalar_lea.vmem %s0, %s650
      %p652 = scmp.lt.s32.totalorder %s34, 1
      %s653 = scalar_select %p652, %s34, 1
      %s654 = scalar_lea.vmem %s21, %s653
      %v655 = vld [vmem:[%s651] sm:$0xff]
      %v656 = vld [vmem:[%s651 + $0x8] sm:$0xff]
      %v657 = vld [vmem:[%s651 + $0x10] sm:$0x1]
      %v658 = vld [vmem:[%s1] sm:$0xff]
      %v659 = vld [vmem:[%s1 + $0x8] sm:$0xff]
      %v660 = vld [vmem:[%s1 + $0x10] sm:$0xff]
      %v661 = vld [vmem:[%s1 + $0x18] sm:$0xff]
      %v662 = vld [vmem:[%s1 + $0x20] sm:$0xff]
      %v663 = vld [vmem:[%s1 + $0x28] sm:$0xff]
      %v664 = vld [vmem:[%s2] sm:$0x1]
      %v666 = vlaneseq
      %v667 = vshrl.u32 %v666, 7
      %v668 = vsub.s32 0, %v667
      %v669 = vrot.slane %v664, %v668
      %vm671 = vcmask 392192
      %v673 = vsel %vm671, %v655, 0
      %v676 = vsel %vm671, %v656, 0
      %v679 = vsel %vm671, %v657, 0
      %681 = vmatprep.subr.mxu0 0.0
      %682 = vmatpush1.msra.mxu0 %v658
      %683 = vmatprep.subr.mxu0 0.0
      %684 = vmatpush1.msra.mxu0 %v659
      %685 = vmatprep.subr.mxu0 0.0
      %686 = vmatpush1.msra.mxu0 %v660
      %687 = vmatprep.subr.mxu0 0.0
      %688 = vmatpush1.msra.mxu0 %v661
      %689 = vmatprep.subr.mxu0 0.0
      %690 = vmatpush1.msra.mxu0 %v662
      %691 = vmatprep.subr.mxu0 0.0
      %692 = vmatpush1.msra.mxu0 %v663
      %693 = vmatprep.subr.mxu0 0.0
      %694 = vmatpush1.msra.mxu0 0.0
      %695 = vmatprep.subr.mxu0 0.0
      %696 = vmatpush1.msra.mxu0 0.0
      %697 = vmatprep.subr.mxu0 0.0
      %698 = vmatpush1.msra.mxu0 0.0
      %699 = vmatprep.subr.mxu0 0.0
      %700 = vmatpush1.msra.mxu0 0.0
      %701 = vmatprep.subr.mxu0 0.0
      %702 = vmatpush1.msra.mxu0 0.0
      %703 = vmatprep.subr.mxu0 0.0
      %704 = vmatpush1.msra.mxu0 0.0
      %705 = vmatprep.subr.mxu0 0.0
      %706 = vmatpush1.msra.mxu0 0.0
      %707 = vmatprep.subr.mxu0 0.0
      %708 = vmatpush1.msra.mxu0 0.0
      %709 = vmatprep.subr.mxu0 0.0
      %710 = vmatpush1.msra.mxu0 0.0
      %711 = vmatprep.subr.mxu0 0.0
      %712 = vmatpush1.msra.mxu0 0.0
      %713 = vmatprep.subr.mxu0 0.0
      %714 = vmatpush1.msra.mxu0 0.0
      %715 = vmatprep.subr.mxu0 0.0
      %716 = vmatpush1.msra.mxu0 0.0
      %717 = vmatprep.subr.mxu0 0.0
      %718 = vmatpush1.msra.mxu0 0.0
      %719 = vmatprep.subr.mxu0 0.0
      %720 = vmatpush1.msra.mxu0 0.0
      %721 = vmatprep.subr.mxu0 0.0
      %722 = vmatpush1.msra.mxu0 0.0
      %723 = vmatprep.subr.mxu0 0.0
      %724 = vmatpush1.msra.mxu0 0.0
      %725 = vmatprep.subr.mxu0 0.0
      %726 = vmatpush1.msra.mxu0 0.0
      %727 = vmatprep.subr.mxu0 0.0
      %728 = vmatpush1.msra.mxu0 0.0
      %729 = vmatprep.subr.mxu0 0.0
      %730 = vmatpush1.msra.mxu0 0.0
      %731 = vmatprep.subr.mxu0 0.0
      %732 = vmatpush1.msra.mxu0 0.0
      %733 = vmatprep.subr.mxu0 0.0
      %734 = vmatpush1.msra.mxu0 0.0
      %735 = vmatprep.subr.mxu0 0.0
      %736 = vmatpush1.msra.mxu0 0.0
      %737 = vmatprep.subr.mxu0 0.0
      %738 = vmatpush1.msra.mxu0 0.0
      %739 = vmatprep.subr.mxu0 0.0
      %740 = vmatpush1.msra.mxu0 0.0
      %741 = vmatprep.subr.mxu0 0.0
      %742 = vmatpush1.msra.mxu0 0.0
      %743 = vmatprep.subr.mxu0 0.0
      %744 = vmatpush1.msra.mxu0 0.0
      %745 = vmatprep.mubr.f32.mxu0 0.0
      %746 = vmatmul.mubr.f32.gmra.mrb[0].mxu0 %v673
      %v747 = vpop.f32.mrb[0].mxu0
      %v748 = vadd.f32 %v669, %v747
      %v749 = vpop.f32.mrb[0].mxu0
      %750 = vmatprep.mubr.f32.mxu0 0.0
      %751 = vmatmul.mubr.f32.gmra.mrb[0].mxu0 %v676
      %v752 = vpop.f32.mrb[0].mxu0
      %v753 = vadd.f32 %v669, %v752
      %v754 = vpop.f32.mrb[0].mxu0
      %755 = vmatprep.mubr.f32.mxu0 0.0
      %756 = vmatmul.mubr.f32.gmra.mrb[0].mxu0 %v679
      %v757 = vpop.f32.mrb[0].mxu0
      %v758 = vadd.f32 %v669, %v757
      %v759 = vpop.f32.mrb[0].mxu0
      %760 = vdwg.mxu0
      %v761 = vlaneseq
      %v762 = vshrl.u32 %v761, 7
      %v763 = vadd.s32 %v762, 8
      %v764 = vadd.s32 %v762, 16
      %vm765 = vcmp.eq.s32.totalorder %v762, 0
      %vm766 = vcmp.eq.s32.totalorder %v763, 0
      %vm767 = vcmp.eq.s32.totalorder %v764, 0
      %v768 = vld [vmem:[%s3] sm:$0x1]
      %v770 = vlaneseq
      %v771 = vshrl.u32 %v770, 7
      %v772 = vsub.s32 0, %v771
      %v773 = vrot.slane %v768, %v772
      %v775 = vsel %vm765, %v773, %v748
      %v776 = vsel %vm766, %v773, %v753
      %v777 = vsel %vm767, %v773, %v758
      %v778 = vld [vmem:[%s4] sm:$0xff]
      %v779 = vld [vmem:[%s4 + $0x8] sm:$0xff]
      %v780 = vld [vmem:[%s4 + $0x10] sm:$0x1]
      %v781 = vadd.f32 %v775, %v778
      %v782 = vadd.f32 %v776, %v779
      %v783 = vadd.f32 %v777, %v780
      %v784 = vld [vmem:[%s5] sm:$0x1]
      %v785 = vld [vmem:[%s6] sm:$0x1]
      %vm786 = vcmask 261120
      %v787 = vsel %vm786, %v781, 0.0
      %788 = vadd.xlane.f32.xlu0 %v787
      %v789 = vpop.xlane.xlu0 %788
      %v790 = vsel %vm786, %v782, 0.0
      %791 = vadd.xlane.f32.xlu0 %v790
      %v792 = vpop.xlane.xlu0 %791
      %vm793 = vcmask 253952
      %v794 = vsel %vm793, %v783, 0.0
      %795 = vadd.xlane.f32.xlu0 %v794
      %v796 = vpop.xlane.xlu0 %795
      %v797 = vrcp.pop 32.0
      %v798 = vmul.f32 %v789, %v797
      %v799 = vmul.f32 %v792, %v797
      %v800 = vmul.f32 %v796, %v797
      %v801 = vsub.f32 %v781, %v798
      %v802 = vsub.f32 %v782, %v799
      %v803 = vsub.f32 %v783, %v800
      %v804 = vmul.f32 %v801, %v801
      %v805 = vmul.f32 %v802, %v802
      %v806 = vmul.f32 %v803, %v803
      %v807 = vsel %vm786, %v804, 0.0
      %808 = vadd.xlane.f32.xlu0 %v807
      %v809 = vpop.xlane.xlu0 %808
      %v810 = vsel %vm786, %v805, 0.0
      %811 = vadd.xlane.f32.xlu0 %v810
      %v812 = vpop.xlane.xlu0 %811
      %v813 = vsel %vm793, %v806, 0.0
      %814 = vadd.xlane.f32.xlu0 %v813
      %v815 = vpop.xlane.xlu0 %814
      %v816 = vmul.f32 %v809, %v797
      %v817 = vmul.f32 %v812, %v797
      %v818 = vmul.f32 %v815, %v797
      %v819 = vadd.f32 %v816, 1e-06
      %v820 = vadd.f32 %v817, 1e-06
      %v821 = vadd.f32 %v818, 1e-06
      %v822 = vrsqrt.pop %v819
      %v823 = vrsqrt.pop %v820
      %v824 = vrsqrt.pop %v821
      %v825 = vmul.f32 %v801, %v822
      %v826 = vmul.f32 %v802, %v823
      %v827 = vmul.f32 %v803, %v824
      %v829 = vlaneseq
      %v830 = vshrl.u32 %v829, 7
      %v831 = vsub.s32 0, %v830
      %v832 = vrot.slane %v784, %v831
      %v834 = vmul.f32 %v825, %v832
      %v835 = vmul.f32 %v826, %v832
      %v836 = vmul.f32 %v827, %v832
      %v838 = vlaneseq
      %v839 = vshrl.u32 %v838, 7
      %v840 = vsub.s32 0, %v839
      %v841 = vrot.slane %v785, %v840
      %v843 = vadd.f32 %v834, %v841
      %v844 = vadd.f32 %v835, %v841
      %v845 = vadd.f32 %v836, %v841
      %v846 = vld [vmem:[%s7] sm:$0xff]
      %v847 = vld [vmem:[%s7 + $0x8] sm:$0xff]
      %v848 = vld [vmem:[%s7 + $0x10] sm:$0xff]
      %v849 = vld [vmem:[%s7 + $0x18] sm:$0xff]
      %v850 = vld [vmem:[%s8] sm:$0x1]
      %v852 = vlaneseq
      %v853 = vshrl.u32 %v852, 7
      %v854 = vsub.s32 0, %v853
      %v855 = vrot.slane %v850, %v854
      %v858 = vsel %vm786, %v843, 0
      %v861 = vsel %vm786, %v844, 0
      %v864 = vsel %vm786, %v845, 0
      %866 = vmatprep.subr.mxu0 0.0
      %867 = vmatpush1.msra.mxu0 %v846
      %868 = vmatprep.subr.mxu0 0.0
      %869 = vmatpush1.msra.mxu0 %v847
      %870 = vmatprep.subr.mxu0 0.0
      %871 = vmatpush1.msra.mxu0 %v848
      %872 = vmatprep.subr.mxu0 0.0
      %873 = vmatpush1.msra.mxu0 %v849
      %874 = vmatprep.subr.mxu0 0.0
      %875 = vmatpush1.msra.mxu0 0.0
      %876 = vmatprep.subr.mxu0 0.0
      %877 = vmatpush1.msra.mxu0 0.0
      %878 = vmatprep.subr.mxu0 0.0
      %879 = vmatpush1.msra.mxu0 0.0
      %880 = vmatprep.subr.mxu0 0.0
      %881 = vmatpush1.msra.mxu0 0.0
      %882 = vmatprep.subr.mxu0 0.0
      %883 = vmatpush1.msra.mxu0 0.0
      %884 = vmatprep.subr.mxu0 0.0
      %885 = vmatpush1.msra.mxu0 0.0
      %886 = vmatprep.subr.mxu0 0.0
      %887 = vmatpush1.msra.mxu0 0.0
      %888 = vmatprep.subr.mxu0 0.0
      %889 = vmatpush1.msra.mxu0 0.0
      %890 = vmatprep.subr.mxu0 0.0
      %891 = vmatpush1.msra.mxu0 0.0
      %892 = vmatprep.subr.mxu0 0.0
      %893 = vmatpush1.msra.mxu0 0.0
      %894 = vmatprep.subr.mxu0 0.0
      %895 = vmatpush1.msra.mxu0 0.0
      %896 = vmatprep.subr.mxu0 0.0
      %897 = vmatpush1.msra.mxu0 0.0
      %898 = vmatprep.subr.mxu0 0.0
      %899 = vmatpush1.msra.mxu0 0.0
      %900 = vmatprep.subr.mxu0 0.0
      %901 = vmatpush1.msra.mxu0 0.0
      %902 = vmatprep.subr.mxu0 0.0
      %903 = vmatpush1.msra.mxu0 0.0
      %904 = vmatprep.subr.mxu0 0.0
      %905 = vmatpush1.msra.mxu0 0.0
      %906 = vmatprep.subr.mxu0 0.0
      %907 = vmatpush1.msra.mxu0 0.0
      %908 = vmatprep.subr.mxu0 0.0
      %909 = vmatpush1.msra.mxu0 0.0
      %910 = vmatprep.subr.mxu0 0.0
      %911 = vmatpush1.msra.mxu0 0.0
      %912 = vmatprep.subr.mxu0 0.0
      %913 = vmatpush1.msra.mxu0 0.0
      %914 = vmatprep.subr.mxu0 0.0
      %915 = vmatpush1.msra.mxu0 0.0
      %916 = vmatprep.subr.mxu0 0.0
      %917 = vmatpush1.msra.mxu0 0.0
      %918 = vmatprep.subr.mxu0 0.0
      %919 = vmatpush1.msra.mxu0 0.0
      %920 = vmatprep.subr.mxu0 0.0
      %921 = vmatpush1.msra.mxu0 0.0
      %922 = vmatprep.subr.mxu0 0.0
      %923 = vmatpush1.msra.mxu0 0.0
      %924 = vmatprep.subr.mxu0 0.0
      %925 = vmatpush1.msra.mxu0 0.0
      %926 = vmatprep.subr.mxu0 0.0
      %927 = vmatpush1.msra.mxu0 0.0
      %928 = vmatprep.subr.mxu0 0.0
      %929 = vmatpush1.msra.mxu0 0.0
      %930 = vmatprep.mubr.f32.mxu0 0.0
      %931 = vmatmul.mubr.f32.gmra.mrb[0].mxu0 %v858
      %v932 = vpop.f32.mrb[0].mxu0
      %v933 = vadd.f32 %v855, %v932
      %v934 = vpop.f32.mrb[0].mxu0
      %935 = vmatprep.mubr.f32.mxu0 0.0
      %936 = vmatmul.mubr.f32.gmra.mrb[0].mxu0 %v861
      %v937 = vpop.f32.mrb[0].mxu0
      %v938 = vadd.f32 %v855, %v937
      %v939 = vpop.f32.mrb[0].mxu0
      %940 = vmatprep.mubr.f32.mxu0 0.0
      %941 = vmatmul.mubr.f32.gmra.mrb[0].mxu0 %v864
      %v942 = vpop.f32.mrb[0].mxu0
      %v943 = vadd.f32 %v855, %v942
      %v944 = vpop.f32.mrb[0].mxu0
      %945 = vdwg.mxu0
      %v946 = vld [vmem:[%s9] sm:$0xff]
      %v947 = vld [vmem:[%s9 + $0x8] sm:$0xff]
      %v948 = vld [vmem:[%s9 + $0x10] sm:$0xff]
      %v949 = vld [vmem:[%s9 + $0x18] sm:$0xff]
      %v950 = vld [vmem:[%s10] sm:$0x1]
      %v951 = vmul.f32 %v933, 0.25
      %v952 = vmul.f32 %v938, 0.25
      %v953 = vmul.f32 %v943, 0.25
      %957 = vrot.lane.b32.xlu0 %v933, 96
      %v958 = vpop.permute.xlu0 %957
      %959 = vrot.lane.b32.xlu0 %v938, 96
      %v960 = vpop.permute.xlu0 %959
      %961 = vrot.lane.b32.xlu0 %v943, 96
      %v962 = vpop.permute.xlu0 %961
      %vm963 = vcmask 130048
      %v965 = vsel %vm963, %v951, 0
      %v968 = vsel %vm963, %v952, 0
      %v971 = vsel %vm963, %v953, 0
      %v973 = vsel %vm963, %v958, 0
      %v975 = vsel %vm963, %v960, 0
      %v977 = vsel %vm963, %v962, 0
      %979 = vmatprep.subr.mxu0 0.0
      %980 = vmatpush1.xpose.msra.mxu0 %v973
      %981 = vmatprep.subr.mxu0 0.0
      %982 = vmatpush1.xpose.msra.mxu0 %v975
      %983 = vmatprep.subr.mxu0 0.0
      %984 = vmatpush1.xpose.msra.mxu0 %v977
      %985 = vmatprep.subr.mxu0 0.0
      %986 = vmatpush1.xpose.msra.mxu0 0.0
      %987 = vmatprep.subr.mxu0 0.0
      %988 = vmatpush1.xpose.msra.mxu0 0.0
      %989 = vmatprep.subr.mxu0 0.0
      %990 = vmatpush1.xpose.msra.mxu0 0.0
      %991 = vmatprep.subr.mxu0 0.0
      %992 = vmatpush1.xpose.msra.mxu0 0.0
      %993 = vmatprep.subr.mxu0 0.0
      %994 = vmatpush1.xpose.msra.mxu0 0.0
      %995 = vmatprep.subr.mxu0 0.0
      %996 = vmatpush1.xpose.msra.mxu0 0.0
      %997 = vmatprep.subr.mxu0 0.0
      %998 = vmatpush1.xpose.msra.mxu0 0.0
      %999 = vmatprep.subr.mxu0 0.0
      %1000 = vmatpush1.xpose.msra.mxu0 0.0
      %1001 = vmatprep.subr.mxu0 0.0
      %1002 = vmatpush1.xpose.msra.mxu0 0.0
      %1003 = vmatprep.subr.mxu0 0.0
      %1004 = vmatpush1.xpose.msra.mxu0 0.0
      %1005 = vmatprep.subr.mxu0 0.0
      %1006 = vmatpush1.xpose.msra.mxu0 0.0
      %1007 = vmatprep.subr.mxu0 0.0
      %1008 = vmatpush1.xpose.msra.mxu0 0.0
      %1009 = vmatprep.subr.mxu0 0.0
      %1010 = vmatpush1.xpose.msra.mxu0 0.0
      %1011 = vmatprep.subr.mxu0 0.0
      %1012 = vmatpush1.xpose.msra.mxu0 0.0
      %1013 = vmatprep.subr.mxu0 0.0
      %1014 = vmatpush1.xpose.msra.mxu0 0.0
      %1015 = vmatprep.subr.mxu0 0.0
      %1016 = vmatpush1.xpose.msra.mxu0 0.0
      %1017 = vmatprep.subr.mxu0 0.0
      %1018 = vmatpush1.xpose.msra.mxu0 0.0
      %1019 = vmatprep.subr.mxu0 0.0
      %1020 = vmatpush1.xpose.msra.mxu0 0.0
      %1021 = vmatprep.subr.mxu0 0.0
      %1022 = vmatpush1.xpose.msra.mxu0 0.0
      %1023 = vmatprep.subr.mxu0 0.0
      %1024 = vmatpush1.xpose.msra.mxu0 0.0
      %1025 = vmatprep.subr.mxu0 0.0
      %1026 = vmatpush1.xpose.msra.mxu0 0.0
      %1027 = vmatprep.subr.mxu0 0.0
      %1028 = vmatpush1.xpose.msra.mxu0 0.0
      %1029 = vmatprep.subr.mxu0 0.0
      %1030 = vmatpush1.xpose.msra.mxu0 0.0
      %1031 = vmatprep.subr.mxu0 0.0
      %1032 = vmatpush1.xpose.msra.mxu0 0.0
      %1033 = vmatprep.subr.mxu0 0.0
      %1034 = vmatpush1.xpose.msra.mxu0 0.0
      %1035 = vmatprep.subr.mxu0 0.0
      %1036 = vmatpush1.xpose.msra.mxu0 0.0
      %1037 = vmatprep.subr.mxu0 0.0
      %1038 = vmatpush1.xpose.msra.mxu0 0.0
      %1039 = vmatprep.subr.mxu0 0.0
      %1040 = vmatpush1.xpose.msra.mxu0 0.0
      %1041 = vmatprep.subr.mxu0 0.0
      %1042 = vmatpush1.xpose.msra.mxu0 0.0
      %1043 = vmatprep.mubr.f32.mxu0 0.0
      %1044 = vmatmul.mubr.f32.gmra.mrb[0].mxu0 %v965
      %v1045 = vpop.f32.mrb[0].mxu0
      %v1046 = vadd.f32 0.0, %v1045
      %v1047 = vpop.f32.mrb[0].mxu0
      %1048 = vmatprep.mubr.f32.mxu0 0.0
      %1049 = vmatmul.mubr.f32.gmra.mrb[0].mxu0 %v968
      %v1050 = vpop.f32.mrb[0].mxu0
      %v1051 = vadd.f32 0.0, %v1050
      %v1052 = vpop.f32.mrb[0].mxu0
      %1053 = vmatprep.mubr.f32.mxu0 0.0
      %1054 = vmatmul.mubr.f32.gmra.mrb[0].mxu0 %v971
      %v1055 = vpop.f32.mrb[0].mxu0
      %v1056 = vadd.f32 0.0, %v1055
      %v1057 = vpop.f32.mrb[0].mxu0
      %1058 = vdwg.mxu0
      %vm1059 = vcmask 138240
      %v1060 = vsel %vm1059, %v1046, -inf
      %1061 = vmax.xlane.f32.xlu0 %v1060
      %v1062 = vpop.xlane.xlu0 %1061
      %v1063 = vsel %vm1059, %v1051, -inf
      %1064 = vmax.xlane.f32.xlu0 %v1063
      %v1065 = vpop.xlane.xlu0 %1064
      %vm1066 = vcmask 131072
      %v1067 = vsel %vm1066, %v1056, -inf
      %1068 = vmax.xlane.f32.xlu0 %v1067
      %v1069 = vpop.xlane.xlu0 %1068
      %v1070 = vsub.f32 %v1046, %v1062
      %v1071 = vsub.f32 %v1051, %v1065
      %v1072 = vsub.f32 %v1056, %v1069
      %v1073 = vmul.f32 %v1070, 1.442695
      %v1074 = vpow.pop %v1073
      %v1075 = vmul.f32 %v1071, 1.442695
      %v1076 = vpow.pop %v1075
      %v1077 = vmul.f32 %v1072, 1.442695
      %v1078 = vpow.pop %v1077
      %v1079 = vsel %vm1059, %v1074, 0.0
      %1080 = vadd.xlane.f32.xlu0 %v1079
      %v1081 = vpop.xlane.xlu0 %1080
      %v1082 = vsel %vm1059, %v1076, 0.0
      %1083 = vadd.xlane.f32.xlu0 %v1082
      %v1084 = vpop.xlane.xlu0 %1083
      %v1085 = vsel %vm1066, %v1078, 0.0
      %1086 = vadd.xlane.f32.xlu0 %v1085
      %v1087 = vpop.xlane.xlu0 %1086
      %v1088 = vrcp.pop %v1081
      %v1089 = vmul.f32 %v1074, %v1088
      %v1090 = vrcp.pop %v1084
      %v1091 = vmul.f32 %v1076, %v1090
      %v1092 = vrcp.pop %v1087
      %v1093 = vmul.f32 %v1078, %v1092
      %1094 = vrot.lane.b32.xlu0 %v933, 64
      %v1095 = vpop.permute.xlu0 %1094
      %1096 = vrot.lane.b32.xlu0 %v938, 64
      %v1097 = vpop.permute.xlu0 %1096
      %1098 = vrot.lane.b32.xlu0 %v943, 64
      %v1099 = vpop.permute.xlu0 %1098
      %v1103 = vsel %vm1059, %v1089, 0
      %v1106 = vsel %vm1059, %v1091, 0
      %v1109 = vsel %vm1059, %v1093, 0
      %vm1111 = vcmask 1040384
      %v1112 = vsel %vm1111, %v1099, 0
      %1114 = vmatprep.subr.mxu0 0.0
      %1115 = vmatpush1.msra.mxu0 %v1095
      %1116 = vmatprep.subr.mxu0 0.0
      %1117 = vmatpush1.msra.mxu0 %v1097
      %1118 = vmatprep.subr.mxu0 0.0
      %1119 = vmatpush1.msra.mxu0 %v1112
      %1120 = vmatprep.subr.mxu0 0.0
      %1121 = vmatpush1.msra.mxu0 0.0
      %1122 = vmatprep.subr.mxu0 0.0
      %1123 = vmatpush1.msra.mxu0 0.0
      %1124 = vmatprep.subr.mxu0 0.0
      %1125 = vmatpush1.msra.mxu0 0.0
      %1126 = vmatprep.subr.mxu0 0.0
      %1127 = vmatpush1.msra.mxu0 0.0
      %1128 = vmatprep.subr.mxu0 0.0
      %1129 = vmatpush1.msra.mxu0 0.0
      %1130 = vmatprep.subr.mxu0 0.0
      %1131 = vmatpush1.msra.mxu0 0.0
      %1132 = vmatprep.subr.mxu0 0.0
      %1133 = vmatpush1.msra.mxu0 0.0
      %1134 = vmatprep.subr.mxu0 0.0
      %1135 = vmatpush1.msra.mxu0 0.0
      %1136 = vmatprep.subr.mxu0 0.0
      %1137 = vmatpush1.msra.mxu0 0.0
      %1138 = vmatprep.subr.mxu0 0.0
      %1139 = vmatpush1.msra.mxu0 0.0
      %1140 = vmatprep.subr.mxu0 0.0
      %1141 = vmatpush1.msra.mxu0 0.0
      %1142 = vmatprep.subr.mxu0 0.0
      %1143 = vmatpush1.msra.mxu0 0.0
      %1144 = vmatprep.subr.mxu0 0.0
      %1145 = vmatpush1.msra.mxu0 0.0
      %1146 = vmatprep.subr.mxu0 0.0
      %1147 = vmatpush1.msra.mxu0 0.0
      %1148 = vmatprep.subr.mxu0 0.0
      %1149 = vmatpush1.msra.mxu0 0.0
      %1150 = vmatprep.subr.mxu0 0.0
      %1151 = vmatpush1.msra.mxu0 0.0
      %1152 = vmatprep.subr.mxu0 0.0
      %1153 = vmatpush1.msra.mxu0 0.0
      %1154 = vmatprep.subr.mxu0 0.0
      %1155 = vmatpush1.msra.mxu0 0.0
      %1156 = vmatprep.subr.mxu0 0.0
      %1157 = vmatpush1.msra.mxu0 0.0
      %1158 = vmatprep.subr.mxu0 0.0
      %1159 = vmatpush1.msra.mxu0 0.0
      %1160 = vmatprep.subr.mxu0 0.0
      %1161 = vmatpush1.msra.mxu0 0.0
      %1162 = vmatprep.subr.mxu0 0.0
      %1163 = vmatpush1.msra.mxu0 0.0
      %1164 = vmatprep.subr.mxu0 0.0
      %1165 = vmatpush1.msra.mxu0 0.0
      %1166 = vmatprep.subr.mxu0 0.0
      %1167 = vmatpush1.msra.mxu0 0.0
      %1168 = vmatprep.subr.mxu0 0.0
      %1169 = vmatpush1.msra.mxu0 0.0
      %1170 = vmatprep.subr.mxu0 0.0
      %1171 = vmatpush1.msra.mxu0 0.0
      %1172 = vmatprep.subr.mxu0 0.0
      %1173 = vmatpush1.msra.mxu0 0.0
      %1174 = vmatprep.subr.mxu0 0.0
      %1175 = vmatpush1.msra.mxu0 0.0
      %1176 = vmatprep.subr.mxu0 0.0
      %1177 = vmatpush1.msra.mxu0 0.0
      %1178 = vmatprep.mubr.f32.mxu0 0.0
      %1179 = vmatmul.mubr.f32.gmra.mrb[0].mxu0 %v1103
      %v1180 = vpop.f32.mrb[0].mxu0
      %v1181 = vadd.f32 0.0, %v1180
      %v1182 = vpop.f32.mrb[0].mxu0
      %1183 = vmatprep.mubr.f32.mxu0 0.0
      %1184 = vmatmul.mubr.f32.gmra.mrb[0].mxu0 %v1106
      %v1185 = vpop.f32.mrb[0].mxu0
      %v1186 = vadd.f32 0.0, %v1185
      %v1187 = vpop.f32.mrb[0].mxu0
      %1188 = vmatprep.mubr.f32.mxu0 0.0
      %1189 = vmatmul.mubr.f32.gmra.mrb[0].mxu0 %v1109
      %v1190 = vpop.f32.mrb[0].mxu0
      %v1191 = vadd.f32 0.0, %v1190
      %v1192 = vpop.f32.mrb[0].mxu0
      %1193 = vdwg.mxu0
      %v1195 = vsel %vm963, %v1181, 0
      %v1198 = vsel %vm963, %v1186, 0
      %v1201 = vsel %vm963, %v1191, 0
      %1203 = vmatprep.subr.mxu0 0.0
      %1204 = vmatpush1.msra.mxu0 %v946
      %1205 = vmatprep.subr.mxu0 0.0
      %1206 = vmatpush1.msra.mxu0 %v947
      %1207 = vmatprep.subr.mxu0 0.0
      %1208 = vmatpush1.msra.mxu0 0.0
      %1209 = vmatprep.subr.mxu0 0.0
      %1210 = vmatpush1.msra.mxu0 0.0
      %1211 = vmatprep.subr.mxu0 0.0
      %1212 = vmatpush1.msra.mxu0 0.0
      %1213 = vmatprep.subr.mxu0 0.0
      %1214 = vmatpush1.msra.mxu0 0.0
      %1215 = vmatprep.subr.mxu0 0.0
      %1216 = vmatpush1.msra.mxu0 0.0
      %1217 = vmatprep.subr.mxu0 0.0
      %1218 = vmatpush1.msra.mxu0 0.0
      %1219 = vmatprep.subr.mxu0 0.0
      %1220 = vmatpush1.msra.mxu0 0.0
      %1221 = vmatprep.subr.mxu0 0.0
      %1222 = vmatpush1.msra.mxu0 0.0
      %1223 = vmatprep.subr.mxu0 0.0
      %1224 = vmatpush1.msra.mxu0 0.0
      %1225 = vmatprep.subr.mxu0 0.0
      %1226 = vmatpush1.msra.mxu0 0.0
      %1227 = vmatprep.subr.mxu0 0.0
      %1228 = vmatpush1.msra.mxu0 0.0
      %1229 = vmatprep.subr.mxu0 0.0
      %1230 = vmatpush1.msra.mxu0 0.0
      %1231 = vmatprep.subr.mxu0 0.0
      %1232 = vmatpush1.msra.mxu0 0.0
      %1233 = vmatprep.subr.mxu0 0.0
      %1234 = vmatpush1.msra.mxu0 0.0
      %1235 = vmatprep.subr.mxu0 0.0
      %1236 = vmatpush1.msra.mxu0 0.0
      %1237 = vmatprep.subr.mxu0 0.0
      %1238 = vmatpush1.msra.mxu0 0.0
      %1239 = vmatprep.subr.mxu0 0.0
      %1240 = vmatpush1.msra.mxu0 0.0
      %1241 = vmatprep.subr.mxu0 0.0
      %1242 = vmatpush1.msra.mxu0 0.0
      %1243 = vmatprep.subr.mxu0 0.0
      %1244 = vmatpush1.msra.mxu0 0.0
      %1245 = vmatprep.subr.mxu0 0.0
      %1246 = vmatpush1.msra.mxu0 0.0
      %1247 = vmatprep.subr.mxu0 0.0
      %1248 = vmatpush1.msra.mxu0 0.0
      %1249 = vmatprep.subr.mxu0 0.0
      %1250 = vmatpush1.msra.mxu0 0.0
      %1251 = vmatprep.subr.mxu0 0.0
      %1252 = vmatpush1.msra.mxu0 0.0
      %1253 = vmatprep.subr.mxu0 0.0
      %1254 = vmatpush1.msra.mxu0 0.0
      %1255 = vmatprep.subr.mxu0 0.0
      %1256 = vmatpush1.msra.mxu0 0.0
      %1257 = vmatprep.subr.mxu0 0.0
      %1258 = vmatpush1.msra.mxu0 0.0
      %1259 = vmatprep.subr.mxu0 0.0
      %1260 = vmatpush1.msra.mxu0 0.0
      %1261 = vmatprep.subr.mxu0 0.0
      %1262 = vmatpush1.msra.mxu0 0.0
      %1263 = vmatprep.subr.mxu0 0.0
      %1264 = vmatpush1.msra.mxu0 0.0
      %1265 = vmatprep.subr.mxu0 0.0
      %1266 = vmatpush1.msra.mxu0 0.0
      %1267 = vmatprep.mubr.f32.mxu0 0.0
      %1268 = vmatmul.mubr.f32.gmra.mrb[0].mxu0 %v1195
      %v1269 = vpop.f32.mrb[0].mxu0
      %v1270 = vadd.f32 0.0, %v1269
      %v1271 = vpop.f32.mrb[0].mxu0
      %1272 = vmatprep.mubr.f32.mxu0 0.0
      %1273 = vmatmul.mubr.f32.gmra.mrb[0].mxu0 %v1198
      %v1274 = vpop.f32.mrb[0].mxu0
      %v1275 = vadd.f32 0.0, %v1274
      %v1276 = vpop.f32.mrb[0].mxu0
      %1277 = vmatprep.mubr.f32.mxu0 0.0
      %1278 = vmatmul.mubr.f32.gmra.mrb[0].mxu0 %v1201
      %v1279 = vpop.f32.mrb[0].mxu0
      %v1280 = vadd.f32 0.0, %v1279
      %v1281 = vpop.f32.mrb[0].mxu0
      %1282 = vdwg.mxu0
      %v1284 = vlaneseq
      %v1285 = vshrl.u32 %v1284, 7
      %v1286 = vsub.s32 0, %v1285
      %v1287 = vrot.slane %v950, %v1286
      %v1289 = vadd.f32 %v1287, %v1270
      %v1290 = vadd.f32 %v1287, %v1275
      %v1291 = vadd.f32 %v1287, %v1280
      %1292 = vrot.lane.b32.xlu0 %v951, 112
      %v1293 = vpop.permute.xlu0 %1292
      %1294 = vrot.lane.b32.xlu0 %v952, 112
      %v1295 = vpop.permute.xlu0 %1294
      %1296 = vrot.lane.b32.xlu0 %v953, 112
      %v1297 = vpop.permute.xlu0 %1296
      %1298 = vrot.lane.b32.xlu0 %v933, 80
      %v1299 = vpop.permute.xlu0 %1298
      %1300 = vrot.lane.b32.xlu0 %v938, 80
      %v1301 = vpop.permute.xlu0 %1300
      %1302 = vrot.lane.b32.xlu0 %v943, 80
      %v1303 = vpop.permute.xlu0 %1302
      %v1304 = vsel %vm963, %v1293, 0
      %v1306 = vsel %vm963, %v1295, 0
      %v1308 = vsel %vm963, %v1297, 0
      %v1310 = vsel %vm963, %v1299, 0
      %v1312 = vsel %vm963, %v1301, 0
      %v1314 = vsel %vm963, %v1303, 0
      %1316 = vmatprep.subr.mxu0 0.0
      %1317 = vmatpush1.xpose.msra.mxu0 %v1310
      %1318 = vmatprep.subr.mxu0 0.0
      %1319 = vmatpush1.xpose.msra.mxu0 %v1312
      %1320 = vmatprep.subr.mxu0 0.0
      %1321 = vmatpush1.xpose.msra.mxu0 %v1314
      %1322 = vmatprep.subr.mxu0 0.0
      %1323 = vmatpush1.xpose.msra.mxu0 0.0
      %1324 = vmatprep.subr.mxu0 0.0
      %1325 = vmatpush1.xpose.msra.mxu0 0.0
      %1326 = vmatprep.subr.mxu0 0.0
      %1327 = vmatpush1.xpose.msra.mxu0 0.0
      %1328 = vmatprep.subr.mxu0 0.0
      %1329 = vmatpush1.xpose.msra.mxu0 0.0
      %1330 = vmatprep.subr.mxu0 0.0
      %1331 = vmatpush1.xpose.msra.mxu0 0.0
      %1332 = vmatprep.subr.mxu0 0.0
      %1333 = vmatpush1.xpose.msra.mxu0 0.0
      %1334 = vmatprep.subr.mxu0 0.0
      %1335 = vmatpush1.xpose.msra.mxu0 0.0
      %1336 = vmatprep.subr.mxu0 0.0
      %1337 = vmatpush1.xpose.msra.mxu0 0.0
      %1338 = vmatprep.subr.mxu0 0.0
      %1339 = vmatpush1.xpose.msra.mxu0 0.0
      %1340 = vmatprep.subr.mxu0 0.0
      %1341 = vmatpush1.xpose.msra.mxu0 0.0
      %1342 = vmatprep.subr.mxu0 0.0
      %1343 = vmatpush1.xpose.msra.mxu0 0.0
      %1344 = vmatprep.subr.mxu0 0.0
      %1345 = vmatpush1.xpose.msra.mxu0 0.0
      %1346 = vmatprep.subr.mxu0 0.0
      %1347 = vmatpush1.xpose.msra.mxu0 0.0
      %1348 = vmatprep.subr.mxu0 0.0
      %1349 = vmatpush1.xpose.msra.mxu0 0.0
      %1350 = vmatprep.subr.mxu0 0.0
      %1351 = vmatpush1.xpose.msra.mxu0 0.0
      %1352 = vmatprep.subr.mxu0 0.0
      %1353 = vmatpush1.xpose.msra.mxu0 0.0
      %1354 = vmatprep.subr.mxu0 0.0
      %1355 = vmatpush1.xpose.msra.mxu0 0.0
      %1356 = vmatprep.subr.mxu0 0.0
      %1357 = vmatpush1.xpose.msra.mxu0 0.0
      %1358 = vmatprep.subr.mxu0 0.0
      %1359 = vmatpush1.xpose.msra.mxu0 0.0
      %1360 = vmatprep.subr.mxu0 0.0
      %1361 = vmatpush1.xpose.msra.mxu0 0.0
      %1362 = vmatprep.subr.mxu0 0.0
      %1363 = vmatpush1.xpose.msra.mxu0 0.0
      %1364 = vmatprep.subr.mxu0 0.0
      %1365 = vmatpush1.xpose.msra.mxu0 0.0
      %1366 = vmatprep.subr.mxu0 0.0
      %1367 = vmatpush1.xpose.msra.mxu0 0.0
      %1368 = vmatprep.subr.mxu0 0.0
      %1369 = vmatpush1.xpose.msra.mxu0 0.0
      %1370 = vmatprep.subr.mxu0 0.0
      %1371 = vmatpush1.xpose.msra.mxu0 0.0
      %1372 = vmatprep.subr.mxu0 0.0
      %1373 = vmatpush1.xpose.msra.mxu0 0.0
      %1374 = vmatprep.subr.mxu0 0.0
      %1375 = vmatpush1.xpose.msra.mxu0 0.0
      %1376 = vmatprep.subr.mxu0 0.0
      %1377 = vmatpush1.xpose.msra.mxu0 0.0
      %1378 = vmatprep.subr.mxu0 0.0
      %1379 = vmatpush1.xpose.msra.mxu0 0.0
      %1380 = vmatprep.mubr.f32.mxu0 0.0
      %1381 = vmatmul.mubr.f32.gmra.mrb[0].mxu0 %v1304
      %v1382 = vpop.f32.mrb[0].mxu0
      %v1383 = vadd.f32 0.0, %v1382
      %v1384 = vpop.f32.mrb[0].mxu0
      %1385 = vmatprep.mubr.f32.mxu0 0.0
      %1386 = vmatmul.mubr.f32.gmra.mrb[0].mxu0 %v1306
      %v1387 = vpop.f32.mrb[0].mxu0
      %v1388 = vadd.f32 0.0, %v1387
      %v1389 = vpop.f32.mrb[0].mxu0
      %1390 = vmatprep.mubr.f32.mxu0 0.0
      %1391 = vmatmul.mubr.f32.gmra.mrb[0].mxu0 %v1308
      %v1392 = vpop.f32.mrb[0].mxu0
      %v1393 = vadd.f32 0.0, %v1392
      %v1394 = vpop.f32.mrb[0].mxu0
      %1395 = vdwg.mxu0
      %v1396 = vsel %vm1059, %v1383, -inf
      %1397 = vmax.xlane.f32.xlu0 %v1396
      %v1398 = vpop.xlane.xlu0 %1397
      %v1399 = vsel %vm1059, %v1388, -inf
      %1400 = vmax.xlane.f32.xlu0 %v1399
      %v1401 = vpop.xlane.xlu0 %1400
      %v1402 = vsel %vm1066, %v1393, -inf
      %1403 = vmax.xlane.f32.xlu0 %v1402
      %v1404 = vpop.xlane.xlu0 %1403
      %v1405 = vsub.f32 %v1383, %v1398
      %v1406 = vsub.f32 %v1388, %v1401
      %v1407 = vsub.f32 %v1393, %v1404
      %v1408 = vmul.f32 %v1405, 1.442695
      %v1409 = vpow.pop %v1408
      %v1410 = vmul.f32 %v1406, 1.442695
      %v1411 = vpow.pop %v1410
      %v1412 = vmul.f32 %v1407, 1.442695
      %v1413 = vpow.pop %v1412
      %v1414 = vsel %vm1059, %v1409, 0.0
      %1415 = vadd.xlane.f32.xlu0 %v1414
      %v1416 = vpop.xlane.xlu0 %1415
      %v1417 = vsel %vm1059, %v1411, 0.0
      %1418 = vadd.xlane.f32.xlu0 %v1417
      %v1419 = vpop.xlane.xlu0 %1418
      %v1420 = vsel %vm1066, %v1413, 0.0
      %1421 = vadd.xlane.f32.xlu0 %v1420
      %v1422 = vpop.xlane.xlu0 %1421
      %v1423 = vrcp.pop %v1416
      %v1424 = vmul.f32 %v1409, %v1423
      %v1425 = vrcp.pop %v1419
      %v1426 = vmul.f32 %v1411, %v1425
      %v1427 = vrcp.pop %v1422
      %v1428 = vmul.f32 %v1413, %v1427
      %1429 = vrot.lane.b32.xlu0 %v933, 48
      %v1430 = vpop.permute.xlu0 %1429
      %1431 = vrot.lane.b32.xlu0 %v938, 48
      %v1432 = vpop.permute.xlu0 %1431
      %1433 = vrot.lane.b32.xlu0 %v943, 48
      %v1434 = vpop.permute.xlu0 %1433
      %v1438 = vsel %vm1059, %v1424, 0
      %v1441 = vsel %vm1059, %v1426, 0
      %v1444 = vsel %vm1059, %v1428, 0
      %v1446 = vsel %vm1111, %v1434, 0
      %1448 = vmatprep.subr.mxu0 0.0
      %1449 = vmatpush1.msra.mxu0 %v1430
      %1450 = vmatprep.subr.mxu0 0.0
      %1451 = vmatpush1.msra.mxu0 %v1432
      %1452 = vmatprep.subr.mxu0 0.0
      %1453 = vmatpush1.msra.mxu0 %v1446
      %1454 = vmatprep.subr.mxu0 0.0
      %1455 = vmatpush1.msra.mxu0 0.0
      %1456 = vmatprep.subr.mxu0 0.0
      %1457 = vmatpush1.msra.mxu0 0.0
      %1458 = vmatprep.subr.mxu0 0.0
      %1459 = vmatpush1.msra.mxu0 0.0
      %1460 = vmatprep.subr.mxu0 0.0
      %1461 = vmatpush1.msra.mxu0 0.0
      %1462 = vmatprep.subr.mxu0 0.0
      %1463 = vmatpush1.msra.mxu0 0.0
      %1464 = vmatprep.subr.mxu0 0.0
      %1465 = vmatpush1.msra.mxu0 0.0
      %1466 = vmatprep.subr.mxu0 0.0
      %1467 = vmatpush1.msra.mxu0 0.0
      %1468 = vmatprep.subr.mxu0 0.0
      %1469 = vmatpush1.msra.mxu0 0.0
      %1470 = vmatprep.subr.mxu0 0.0
      %1471 = vmatpush1.msra.mxu0 0.0
      %1472 = vmatprep.subr.mxu0 0.0
      %1473 = vmatpush1.msra.mxu0 0.0
      %1474 = vmatprep.subr.mxu0 0.0
      %1475 = vmatpush1.msra.mxu0 0.0
      %1476 = vmatprep.subr.mxu0 0.0
      %1477 = vmatpush1.msra.mxu0 0.0
      %1478 = vmatprep.subr.mxu0 0.0
      %1479 = vmatpush1.msra.mxu0 0.0
      %1480 = vmatprep.subr.mxu0 0.0
      %1481 = vmatpush1.msra.mxu0 0.0
      %1482 = vmatprep.subr.mxu0 0.0
      %1483 = vmatpush1.msra.mxu0 0.0
      %1484 = vmatprep.subr.mxu0 0.0
      %1485 = vmatpush1.msra.mxu0 0.0
      %1486 = vmatprep.subr.mxu0 0.0
      %1487 = vmatpush1.msra.mxu0 0.0
      %1488 = vmatprep.subr.mxu0 0.0
      %1489 = vmatpush1.msra.mxu0 0.0
      %1490 = vmatprep.subr.mxu0 0.0
      %1491 = vmatpush1.msra.mxu0 0.0
      %1492 = vmatprep.subr.mxu0 0.0
      %1493 = vmatpush1.msra.mxu0 0.0
      %1494 = vmatprep.subr.mxu0 0.0
      %1495 = vmatpush1.msra.mxu0 0.0
      %1496 = vmatprep.subr.mxu0 0.0
      %1497 = vmatpush1.msra.mxu0 0.0
      %1498 = vmatprep.subr.mxu0 0.0
      %1499 = vmatpush1.msra.mxu0 0.0
      %1500 = vmatprep.subr.mxu0 0.0
      %1501 = vmatpush1.msra.mxu0 0.0
      %1502 = vmatprep.subr.mxu0 0.0
      %1503 = vmatpush1.msra.mxu0 0.0
      %1504 = vmatprep.subr.mxu0 0.0
      %1505 = vmatpush1.msra.mxu0 0.0
      %1506 = vmatprep.subr.mxu0 0.0
      %1507 = vmatpush1.msra.mxu0 0.0
      %1508 = vmatprep.subr.mxu0 0.0
      %1509 = vmatpush1.msra.mxu0 0.0
      %1510 = vmatprep.subr.mxu0 0.0
      %1511 = vmatpush1.msra.mxu0 0.0
      %1512 = vmatprep.mubr.f32.mxu0 0.0
      %1513 = vmatmul.mubr.f32.gmra.mrb[0].mxu0 %v1438
      %v1514 = vpop.f32.mrb[0].mxu0
      %v1515 = vadd.f32 0.0, %v1514
      %v1516 = vpop.f32.mrb[0].mxu0
      %1517 = vmatprep.mubr.f32.mxu0 0.0
      %1518 = vmatmul.mubr.f32.gmra.mrb[0].mxu0 %v1441
      %v1519 = vpop.f32.mrb[0].mxu0
      %v1520 = vadd.f32 0.0, %v1519
      %v1521 = vpop.f32.mrb[0].mxu0
      %1522 = vmatprep.mubr.f32.mxu0 0.0
      %1523 = vmatmul.mubr.f32.gmra.mrb[0].mxu0 %v1444
      %v1524 = vpop.f32.mrb[0].mxu0
      %v1525 = vadd.f32 0.0, %v1524
      %v1526 = vpop.f32.mrb[0].mxu0
      %1527 = vdwg.mxu0
      %v1529 = vsel %vm963, %v1515, 0
      %v1532 = vsel %vm963, %v1520, 0
      %v1535 = vsel %vm963, %v1525, 0
      %1537 = vmatprep.subr.mxu0 0.0
      %1538 = vmatpush1.msra.mxu0 %v948
      %1539 = vmatprep.subr.mxu0 0.0
      %1540 = vmatpush1.msra.mxu0 %v949
      %1541 = vmatprep.subr.mxu0 0.0
      %1542 = vmatpush1.msra.mxu0 0.0
      %1543 = vmatprep.subr.mxu0 0.0
      %1544 = vmatpush1.msra.mxu0 0.0
      %1545 = vmatprep.subr.mxu0 0.0
      %1546 = vmatpush1.msra.mxu0 0.0
      %1547 = vmatprep.subr.mxu0 0.0
      %1548 = vmatpush1.msra.mxu0 0.0
      %1549 = vmatprep.subr.mxu0 0.0
      %1550 = vmatpush1.msra.mxu0 0.0
      %1551 = vmatprep.subr.mxu0 0.0
      %1552 = vmatpush1.msra.mxu0 0.0
      %1553 = vmatprep.subr.mxu0 0.0
      %1554 = vmatpush1.msra.mxu0 0.0
      %1555 = vmatprep.subr.mxu0 0.0
      %1556 = vmatpush1.msra.mxu0 0.0
      %1557 = vmatprep.subr.mxu0 0.0
      %1558 = vmatpush1.msra.mxu0 0.0
      %1559 = vmatprep.subr.mxu0 0.0
      %1560 = vmatpush1.msra.mxu0 0.0
      %1561 = vmatprep.subr.mxu0 0.0
      %1562 = vmatpush1.msra.mxu0 0.0
      %1563 = vmatprep.subr.mxu0 0.0
      %1564 = vmatpush1.msra.mxu0 0.0
      %1565 = vmatprep.subr.mxu0 0.0
      %1566 = vmatpush1.msra.mxu0 0.0
      %1567 = vmatprep.subr.mxu0 0.0
      %1568 = vmatpush1.msra.mxu0 0.0
      %1569 = vmatprep.subr.mxu0 0.0
      %1570 = vmatpush1.msra.mxu0 0.0
      %1571 = vmatprep.subr.mxu0 0.0
      %1572 = vmatpush1.msra.mxu0 0.0
      %1573 = vmatprep.subr.mxu0 0.0
      %1574 = vmatpush1.msra.mxu0 0.0
      %1575 = vmatprep.subr.mxu0 0.0
      %1576 = vmatpush1.msra.mxu0 0.0
      %1577 = vmatprep.subr.mxu0 0.0
      %1578 = vmatpush1.msra.mxu0 0.0
      %1579 = vmatprep.subr.mxu0 0.0
      %1580 = vmatpush1.msra.mxu0 0.0
      %1581 = vmatprep.subr.mxu0 0.0
      %1582 = vmatpush1.msra.mxu0 0.0
      %1583 = vmatprep.subr.mxu0 0.0
      %1584 = vmatpush1.msra.mxu0 0.0
      %1585 = vmatprep.subr.mxu0 0.0
      %1586 = vmatpush1.msra.mxu0 0.0
      %1587 = vmatprep.subr.mxu0 0.0
      %1588 = vmatpush1.msra.mxu0 0.0
      %1589 = vmatprep.subr.mxu0 0.0
      %1590 = vmatpush1.msra.mxu0 0.0
      %1591 = vmatprep.subr.mxu0 0.0
      %1592 = vmatpush1.msra.mxu0 0.0
      %1593 = vmatprep.subr.mxu0 0.0
      %1594 = vmatpush1.msra.mxu0 0.0
      %1595 = vmatprep.subr.mxu0 0.0
      %1596 = vmatpush1.msra.mxu0 0.0
      %1597 = vmatprep.subr.mxu0 0.0
      %1598 = vmatpush1.msra.mxu0 0.0
      %1599 = vmatprep.subr.mxu0 0.0
      %1600 = vmatpush1.msra.mxu0 0.0
      %1601 = vmatprep.mubr.f32.mxu0 0.0
      %1602 = vmatmul.mubr.f32.gmra.mrb[0].mxu0 %v1529
      %v1603 = vpop.f32.mrb[0].mxu0
      %v1604 = vadd.f32 0.0, %v1603
      %v1605 = vpop.f32.mrb[0].mxu0
      %1606 = vmatprep.mubr.f32.mxu0 0.0
      %1607 = vmatmul.mubr.f32.gmra.mrb[0].mxu0 %v1532
      %v1608 = vpop.f32.mrb[0].mxu0
      %v1609 = vadd.f32 0.0, %v1608
      %v1610 = vpop.f32.mrb[0].mxu0
      %1611 = vmatprep.mubr.f32.mxu0 0.0
      %1612 = vmatmul.mubr.f32.gmra.mrb[0].mxu0 %v1535
      %v1613 = vpop.f32.mrb[0].mxu0
      %v1614 = vadd.f32 0.0, %v1613
      %v1615 = vpop.f32.mrb[0].mxu0
      %1616 = vdwg.mxu0
      %v1617 = vadd.f32 %v1289, %v1604
      %v1618 = vadd.f32 %v1290, %v1609
      %v1619 = vadd.f32 %v1291, %v1614
      %v1620 = vadd.f32 %v781, %v1617
      %v1621 = vadd.f32 %v782, %v1618
      %v1622 = vadd.f32 %v783, %v1619
      %v1623 = vld [vmem:[%s11] sm:$0x1]
      %v1624 = vld [vmem:[%s12] sm:$0x1]
      %v1625 = vsel %vm786, %v1620, 0.0
      %1626 = vadd.xlane.f32.xlu0 %v1625
      %v1627 = vpop.xlane.xlu0 %1626
      %v1628 = vsel %vm786, %v1621, 0.0
      %1629 = vadd.xlane.f32.xlu0 %v1628
      %v1630 = vpop.xlane.xlu0 %1629
      %v1631 = vsel %vm793, %v1622, 0.0
      %1632 = vadd.xlane.f32.xlu0 %v1631
      %v1633 = vpop.xlane.xlu0 %1632
      %v1634 = vmul.f32 %v1627, %v797
      %v1635 = vmul.f32 %v1630, %v797
      %v1636 = vmul.f32 %v1633, %v797
      %v1637 = vsub.f32 %v1620, %v1634
      %v1638 = vsub.f32 %v1621, %v1635
      %v1639 = vsub.f32 %v1622, %v1636
      %v1640 = vmul.f32 %v1637, %v1637
      %v1641 = vmul.f32 %v1638, %v1638
      %v1642 = vmul.f32 %v1639, %v1639
      %v1643 = vsel %vm786, %v1640, 0.0
      %1644 = vadd.xlane.f32.xlu0 %v1643
      %v1645 = vpop.xlane.xlu0 %1644
      %v1646 = vsel %vm786, %v1641, 0.0
      %1647 = vadd.xlane.f32.xlu0 %v1646
      %v1648 = vpop.xlane.xlu0 %1647
      %v1649 = vsel %vm793, %v1642, 0.0
      %1650 = vadd.xlane.f32.xlu0 %v1649
      %v1651 = vpop.xlane.xlu0 %1650
      %v1652 = vmul.f32 %v1645, %v797
      %v1653 = vmul.f32 %v1648, %v797
      %v1654 = vmul.f32 %v1651, %v797
      %v1655 = vadd.f32 %v1652, 1e-06
      %v1656 = vadd.f32 %v1653, 1e-06
      %v1657 = vadd.f32 %v1654, 1e-06
      %v1658 = vrsqrt.pop %v1655
      %v1659 = vrsqrt.pop %v1656
      %v1660 = vrsqrt.pop %v1657
      %v1661 = vmul.f32 %v1637, %v1658
      %v1662 = vmul.f32 %v1638, %v1659
      %v1663 = vmul.f32 %v1639, %v1660
      %v1665 = vlaneseq
      %v1666 = vshrl.u32 %v1665, 7
      %v1667 = vsub.s32 0, %v1666
      %v1668 = vrot.slane %v1623, %v1667
      %v1670 = vmul.f32 %v1661, %v1668
      %v1671 = vmul.f32 %v1662, %v1668
      %v1672 = vmul.f32 %v1663, %v1668
      %v1674 = vlaneseq
      %v1675 = vshrl.u32 %v1674, 7
      %v1676 = vsub.s32 0, %v1675
      %v1677 = vrot.slane %v1624, %v1676
      %v1679 = vadd.f32 %v1670, %v1677
      %v1680 = vadd.f32 %v1671, %v1677
      %v1681 = vadd.f32 %v1672, %v1677
      %v1682 = vld [vmem:[%s13] sm:$0xff]
      %v1683 = vld [vmem:[%s13 + $0x8] sm:$0xff]
      %v1684 = vld [vmem:[%s13 + $0x10] sm:$0xff]
      %v1685 = vld [vmem:[%s13 + $0x18] sm:$0xff]
      %v1686 = vld [vmem:[%s14] sm:$0x1]
      %v1688 = vlaneseq
      %v1689 = vshrl.u32 %v1688, 7
      %v1690 = vsub.s32 0, %v1689
      %v1691 = vrot.slane %v1686, %v1690
      %v1694 = vsel %vm786, %v1679, 0
      %v1697 = vsel %vm786, %v1680, 0
      %v1700 = vsel %vm786, %v1681, 0
      %1702 = vmatprep.subr.mxu0 0.0
      %1703 = vmatpush1.msra.mxu0 %v1682
      %1704 = vmatprep.subr.mxu0 0.0
      %1705 = vmatpush1.msra.mxu0 %v1683
      %1706 = vmatprep.subr.mxu0 0.0
      %1707 = vmatpush1.msra.mxu0 %v1684
      %1708 = vmatprep.subr.mxu0 0.0
      %1709 = vmatpush1.msra.mxu0 %v1685
      %1710 = vmatprep.subr.mxu0 0.0
      %1711 = vmatpush1.msra.mxu0 0.0
      %1712 = vmatprep.subr.mxu0 0.0
      %1713 = vmatpush1.msra.mxu0 0.0
      %1714 = vmatprep.subr.mxu0 0.0
      %1715 = vmatpush1.msra.mxu0 0.0
      %1716 = vmatprep.subr.mxu0 0.0
      %1717 = vmatpush1.msra.mxu0 0.0
      %1718 = vmatprep.subr.mxu0 0.0
      %1719 = vmatpush1.msra.mxu0 0.0
      %1720 = vmatprep.subr.mxu0 0.0
      %1721 = vmatpush1.msra.mxu0 0.0
      %1722 = vmatprep.subr.mxu0 0.0
      %1723 = vmatpush1.msra.mxu0 0.0
      %1724 = vmatprep.subr.mxu0 0.0
      %1725 = vmatpush1.msra.mxu0 0.0
      %1726 = vmatprep.subr.mxu0 0.0
      %1727 = vmatpush1.msra.mxu0 0.0
      %1728 = vmatprep.subr.mxu0 0.0
      %1729 = vmatpush1.msra.mxu0 0.0
      %1730 = vmatprep.subr.mxu0 0.0
      %1731 = vmatpush1.msra.mxu0 0.0
      %1732 = vmatprep.subr.mxu0 0.0
      %1733 = vmatpush1.msra.mxu0 0.0
      %1734 = vmatprep.subr.mxu0 0.0
      %1735 = vmatpush1.msra.mxu0 0.0
      %1736 = vmatprep.subr.mxu0 0.0
      %1737 = vmatpush1.msra.mxu0 0.0
      %1738 = vmatprep.subr.mxu0 0.0
      %1739 = vmatpush1.msra.mxu0 0.0
      %1740 = vmatprep.subr.mxu0 0.0
      %1741 = vmatpush1.msra.mxu0 0.0
      %1742 = vmatprep.subr.mxu0 0.0
      %1743 = vmatpush1.msra.mxu0 0.0
      %1744 = vmatprep.subr.mxu0 0.0
      %1745 = vmatpush1.msra.mxu0 0.0
      %1746 = vmatprep.subr.mxu0 0.0
      %1747 = vmatpush1.msra.mxu0 0.0
      %1748 = vmatprep.subr.mxu0 0.0
      %1749 = vmatpush1.msra.mxu0 0.0
      %1750 = vmatprep.subr.mxu0 0.0
      %1751 = vmatpush1.msra.mxu0 0.0
      %1752 = vmatprep.subr.mxu0 0.0
      %1753 = vmatpush1.msra.mxu0 0.0
      %1754 = vmatprep.subr.mxu0 0.0
      %1755 = vmatpush1.msra.mxu0 0.0
      %1756 = vmatprep.subr.mxu0 0.0
      %1757 = vmatpush1.msra.mxu0 0.0
      %1758 = vmatprep.subr.mxu0 0.0
      %1759 = vmatpush1.msra.mxu0 0.0
      %1760 = vmatprep.subr.mxu0 0.0
      %1761 = vmatpush1.msra.mxu0 0.0
      %1762 = vmatprep.subr.mxu0 0.0
      %1763 = vmatpush1.msra.mxu0 0.0
      %1764 = vmatprep.subr.mxu0 0.0
      %1765 = vmatpush1.msra.mxu0 0.0
      %1766 = vmatprep.mubr.f32.mxu0 0.0
      %1767 = vmatmul.mubr.f32.gmra.mrb[0].mxu0 %v1694
      %v1768 = vpop.f32.mrb[0].mxu0
      %v1769 = vadd.f32 %v1691, %v1768
      %v1770 = vpop.f32.mrb[0].mxu0
      %1771 = vmatprep.mubr.f32.mxu0 0.0
      %1772 = vmatmul.mubr.f32.gmra.mrb[0].mxu0 %v1697
      %v1773 = vpop.f32.mrb[0].mxu0
      %v1774 = vadd.f32 %v1691, %v1773
      %v1775 = vpop.f32.mrb[0].mxu0
      %1776 = vmatprep.mubr.f32.mxu0 0.0
      %1777 = vmatmul.mubr.f32.gmra.mrb[0].mxu0 %v1700
      %v1778 = vpop.f32.mrb[0].mxu0
      %v1779 = vadd.f32 %v1691, %v1778
      %v1780 = vpop.f32.mrb[0].mxu0
      %1781 = vdwg.mxu0
      %v1782 = vmul.f32 %v1769, %v1769
      %v1783 = vmul.f32 %v1774, %v1774
      %v1784 = vmul.f32 %v1779, %v1779
      %v1785 = vmul.f32 %v1769, %v1782
      %v1786 = vmul.f32 %v1774, %v1783
      %v1787 = vmul.f32 %v1779, %v1784
      %v1788 = vmul.f32 %v1785, 0.044715
      %v1789 = vmul.f32 %v1786, 0.044715
      %v1790 = vmul.f32 %v1787, 0.044715
      %v1791 = vadd.f32 %v1769, %v1788
      %v1792 = vadd.f32 %v1774, %v1789
      %v1793 = vadd.f32 %v1779, %v1790
      %v1794 = vmul.f32 %v1791, 0.7978846
      %v1795 = vmul.f32 %v1792, 0.7978846
      %v1796 = vmul.f32 %v1793, 0.7978846
      %v1797 = vtanh.pop %v1794
      %v1798 = vtanh.pop %v1795
      %v1799 = vtanh.pop %v1796
      %v1800 = vadd.f32 %v1797, 1.0
      %v1801 = vadd.f32 %v1798, 1.0
      %v1802 = vadd.f32 %v1799, 1.0
      %v1803 = vmul.f32 %v1800, 0.5
      %v1804 = vmul.f32 %v1801, 0.5
      %v1805 = vmul.f32 %v1802, 0.5
      %v1806 = vmul.f32 %v1769, %v1803
      %v1807 = vmul.f32 %v1774, %v1804
      %v1808 = vmul.f32 %v1779, %v1805
      %v1809 = vld [vmem:[%s15] sm:$0xff]
      %v1810 = vld [vmem:[%s15 + $0x8] sm:$0xff]
      %v1811 = vld [vmem:[%s15 + $0x10] sm:$0xff]
      %v1812 = vld [vmem:[%s15 + $0x18] sm:$0xff]
      %v1813 = vld [vmem:[%s15 + $0x20] sm:$0xff]
      %v1814 = vld [vmem:[%s15 + $0x28] sm:$0xff]
      %v1815 = vld [vmem:[%s15 + $0x30] sm:$0xff]
      %v1816 = vld [vmem:[%s15 + $0x38] sm:$0xff]
      %v1817 = vld [vmem:[%s15 + $0x40] sm:$0xff]
      %v1818 = vld [vmem:[%s15 + $0x48] sm:$0xff]
      %v1819 = vld [vmem:[%s15 + $0x50] sm:$0xff]
      %v1820 = vld [vmem:[%s15 + $0x58] sm:$0xff]
      %v1821 = vld [vmem:[%s15 + $0x60] sm:$0xff]
      %v1822 = vld [vmem:[%s15 + $0x68] sm:$0xff]
      %v1823 = vld [vmem:[%s15 + $0x70] sm:$0xff]
      %v1824 = vld [vmem:[%s15 + $0x78] sm:$0xff]
      %v1825 = vld [vmem:[%s16] sm:$0x1]
      %v1827 = vlaneseq
      %v1828 = vshrl.u32 %v1827, 7
      %v1829 = vsub.s32 0, %v1828
      %v1830 = vrot.slane %v1825, %v1829
      %1832 = vmatprep.subr.mxu0 0.0
      %1833 = vmatpush1.msra.mxu0 %v1809
      %1834 = vmatprep.subr.mxu0 0.0
      %1835 = vmatpush1.msra.mxu0 %v1810
      %1836 = vmatprep.subr.mxu0 0.0
      %1837 = vmatpush1.msra.mxu0 %v1811
      %1838 = vmatprep.subr.mxu0 0.0
      %1839 = vmatpush1.msra.mxu0 %v1812
      %1840 = vmatprep.subr.mxu0 0.0
      %1841 = vmatpush1.msra.mxu0 %v1813
      %1842 = vmatprep.subr.mxu0 0.0
      %1843 = vmatpush1.msra.mxu0 %v1814
      %1844 = vmatprep.subr.mxu0 0.0
      %1845 = vmatpush1.msra.mxu0 %v1815
      %1846 = vmatprep.subr.mxu0 0.0
      %1847 = vmatpush1.msra.mxu0 %v1816
      %1848 = vmatprep.subr.mxu0 0.0
      %1849 = vmatpush1.msra.mxu0 %v1817
      %1850 = vmatprep.subr.mxu0 0.0
      %1851 = vmatpush1.msra.mxu0 %v1818
      %1852 = vmatprep.subr.mxu0 0.0
      %1853 = vmatpush1.msra.mxu0 %v1819
      %1854 = vmatprep.subr.mxu0 0.0
      %1855 = vmatpush1.msra.mxu0 %v1820
      %1856 = vmatprep.subr.mxu0 0.0
      %1857 = vmatpush1.msra.mxu0 %v1821
      %1858 = vmatprep.subr.mxu0 0.0
      %1859 = vmatpush1.msra.mxu0 %v1822
      %1860 = vmatprep.subr.mxu0 0.0
      %1861 = vmatpush1.msra.mxu0 %v1823
      %1862 = vmatprep.subr.mxu0 0.0
      %1863 = vmatpush1.msra.mxu0 %v1824
      %1864 = vmatprep.subr.mxu0 0.0
      %1865 = vmatpush1.msra.mxu0 0.0
      %1866 = vmatprep.subr.mxu0 0.0
      %1867 = vmatpush1.msra.mxu0 0.0
      %1868 = vmatprep.subr.mxu0 0.0
      %1869 = vmatpush1.msra.mxu0 0.0
      %1870 = vmatprep.subr.mxu0 0.0
      %1871 = vmatpush1.msra.mxu0 0.0
      %1872 = vmatprep.subr.mxu0 0.0
      %1873 = vmatpush1.msra.mxu0 0.0
      %1874 = vmatprep.subr.mxu0 0.0
      %1875 = vmatpush1.msra.mxu0 0.0
      %1876 = vmatprep.subr.mxu0 0.0
      %1877 = vmatpush1.msra.mxu0 0.0
      %1878 = vmatprep.subr.mxu0 0.0
      %1879 = vmatpush1.msra.mxu0 0.0
      %1880 = vmatprep.subr.mxu0 0.0
      %1881 = vmatpush1.msra.mxu0 0.0
      %1882 = vmatprep.subr.mxu0 0.0
      %1883 = vmatpush1.msra.mxu0 0.0
      %1884 = vmatprep.subr.mxu0 0.0
      %1885 = vmatpush1.msra.mxu0 0.0
      %1886 = vmatprep.subr.mxu0 0.0
      %1887 = vmatpush1.msra.mxu0 0.0
      %1888 = vmatprep.subr.mxu0 0.0
      %1889 = vmatpush1.msra.mxu0 0.0
      %1890 = vmatprep.subr.mxu0 0.0
      %1891 = vmatpush1.msra.mxu0 0.0
      %1892 = vmatprep.subr.mxu0 0.0
      %1893 = vmatpush1.msra.mxu0 0.0
      %1894 = vmatprep.subr.mxu0 0.0
      %1895 = vmatpush1.msra.mxu0 0.0
      %1896 = vmatprep.mubr.f32.mxu0 0.0
      %1897 = vmatmul.mubr.f32.gmra.mrb[0].mxu0 %v1806
      %v1898 = vpop.f32.mrb[0].mxu0
      %v1899 = vadd.f32 %v1830, %v1898
      %v1900 = vpop.f32.mrb[0].mxu0
      %1901 = vmatprep.mubr.f32.mxu0 0.0
      %1902 = vmatmul.mubr.f32.gmra.mrb[0].mxu0 %v1807
      %v1903 = vpop.f32.mrb[0].mxu0
      %v1904 = vadd.f32 %v1830, %v1903
      %v1905 = vpop.f32.mrb[0].mxu0
      %1906 = vmatprep.mubr.f32.mxu0 0.0
      %1907 = vmatmul.mubr.f32.gmra.mrb[0].mxu0 %v1808
      %v1908 = vpop.f32.mrb[0].mxu0
      %v1909 = vadd.f32 %v1830, %v1908
      %v1910 = vpop.f32.mrb[0].mxu0
      %1911 = vdwg.mxu0
      %v1912 = vadd.f32 %v1620, %v1899
      %v1913 = vadd.f32 %v1621, %v1904
      %v1914 = vadd.f32 %v1622, %v1909
      %s1915 = scalar_lea.vmem %s5, 1
      %v1916 = vld [vmem:[%s1915] sm:$0x1]
      %s1917 = scalar_lea.vmem %s6, 1
      %v1918 = vld [vmem:[%s1917] sm:$0x1]
      %v1919 = vsel %vm786, %v1912, 0.0
      %1920 = vadd.xlane.f32.xlu0 %v1919
      %v1921 = vpop.xlane.xlu0 %1920
      %v1922 = vsel %vm786, %v1913, 0.0
      %1923 = vadd.xlane.f32.xlu0 %v1922
      %v1924 = vpop.xlane.xlu0 %1923
      %v1925 = vsel %vm793, %v1914, 0.0
      %1926 = vadd.xlane.f32.xlu0 %v1925
      %v1927 = vpop.xlane.xlu0 %1926
      %v1928 = vmul.f32 %v1921, %v797
      %v1929 = vmul.f32 %v1924, %v797
      %v1930 = vmul.f32 %v1927, %v797
      %v1931 = vsub.f32 %v1912, %v1928
      %v1932 = vsub.f32 %v1913, %v1929
      %v1933 = vsub.f32 %v1914, %v1930
      %v1934 = vmul.f32 %v1931, %v1931
      %v1935 = vmul.f32 %v1932, %v1932
      %v1936 = vmul.f32 %v1933, %v1933
      %v1937 = vsel %vm786, %v1934, 0.0
      %1938 = vadd.xlane.f32.xlu0 %v1937
      %v1939 = vpop.xlane.xlu0 %1938
      %v1940 = vsel %vm786, %v1935, 0.0
      %1941 = vadd.xlane.f32.xlu0 %v1940
      %v1942 = vpop.xlane.xlu0 %1941
      %v1943 = vsel %vm793, %v1936, 0.0
      %1944 = vadd.xlane.f32.xlu0 %v1943
      %v1945 = vpop.xlane.xlu0 %1944
      %v1946 = vmul.f32 %v1939, %v797
      %v1947 = vmul.f32 %v1942, %v797
      %v1948 = vmul.f32 %v1945, %v797
      %v1949 = vadd.f32 %v1946, 1e-06
      %v1950 = vadd.f32 %v1947, 1e-06
      %v1951 = vadd.f32 %v1948, 1e-06
      %v1952 = vrsqrt.pop %v1949
      %v1953 = vrsqrt.pop %v1950
      %v1954 = vrsqrt.pop %v1951
      %v1955 = vmul.f32 %v1931, %v1952
      %v1956 = vmul.f32 %v1932, %v1953
      %v1957 = vmul.f32 %v1933, %v1954
      %v1959 = vlaneseq
      %v1960 = vshrl.u32 %v1959, 7
      %v1961 = vsub.s32 0, %v1960
      %v1962 = vrot.slane %v1916, %v1961
      %v1964 = vmul.f32 %v1955, %v1962
      %v1965 = vmul.f32 %v1956, %v1962
      %v1966 = vmul.f32 %v1957, %v1962
      %v1968 = vlaneseq
      %v1969 = vshrl.u32 %v1968, 7
      %v1970 = vsub.s32 0, %v1969
      %v1971 = vrot.slane %v1918, %v1970
      %v1973 = vadd.f32 %v1964, %v1971
      %v1974 = vadd.f32 %v1965, %v1971
      %v1975 = vadd.f32 %v1966, %v1971
      %s1976 = scalar_lea.vmem %s7, 32
      %v1977 = vld [vmem:[%s1976] sm:$0xff]
      %v1978 = vld [vmem:[%s1976 + $0x8] sm:$0xff]
      %v1979 = vld [vmem:[%s1976 + $0x10] sm:$0xff]
      %v1980 = vld [vmem:[%s1976 + $0x18] sm:$0xff]
      %s1981 = scalar_lea.vmem %s8, 1
      %v1982 = vld [vmem:[%s1981] sm:$0x1]
      %v1984 = vlaneseq
      %v1985 = vshrl.u32 %v1984, 7
      %v1986 = vsub.s32 0, %v1985
      %v1987 = vrot.slane %v1982, %v1986
      %v1990 = vsel %vm786, %v1973, 0
      %v1993 = vsel %vm786, %v1974, 0
      %v1996 = vsel %vm786, %v1975, 0
      %1998 = vmatprep.subr.mxu0 0.0
      %1999 = vmatpush1.msra.mxu0 %v1977
      %2000 = vmatprep.subr.mxu0 0.0
      %2001 = vmatpush1.msra.mxu0 %v1978
      %2002 = vmatprep.subr.mxu0 0.0
      %2003 = vmatpush1.msra.mxu0 %v1979
      %2004 = vmatprep.subr.mxu0 0.0
      %2005 = vmatpush1.msra.mxu0 %v1980
      %2006 = vmatprep.subr.mxu0 0.0
      %2007 = vmatpush1.msra.mxu0 0.0
      %2008 = vmatprep.subr.mxu0 0.0
      %2009 = vmatpush1.msra.mxu0 0.0
      %2010 = vmatprep.subr.mxu0 0.0
      %2011 = vmatpush1.msra.mxu0 0.0
      %2012 = vmatprep.subr.mxu0 0.0
      %2013 = vmatpush1.msra.mxu0 0.0
      %2014 = vmatprep.subr.mxu0 0.0
      %2015 = vmatpush1.msra.mxu0 0.0
      %2016 = vmatprep.subr.mxu0 0.0
      %2017 = vmatpush1.msra.mxu0 0.0
      %2018 = vmatprep.subr.mxu0 0.0
      %2019 = vmatpush1.msra.mxu0 0.0
      %2020 = vmatprep.subr.mxu0 0.0
      %2021 = vmatpush1.msra.mxu0 0.0
      %2022 = vmatprep.subr.mxu0 0.0
      %2023 = vmatpush1.msra.mxu0 0.0
      %2024 = vmatprep.subr.mxu0 0.0
      %2025 = vmatpush1.msra.mxu0 0.0
      %2026 = vmatprep.subr.mxu0 0.0
      %2027 = vmatpush1.msra.mxu0 0.0
      %2028 = vmatprep.subr.mxu0 0.0
      %2029 = vmatpush1.msra.mxu0 0.0
      %2030 = vmatprep.subr.mxu0 0.0
      %2031 = vmatpush1.msra.mxu0 0.0
      %2032 = vmatprep.subr.mxu0 0.0
      %2033 = vmatpush1.msra.mxu0 0.0
      %2034 = vmatprep.subr.mxu0 0.0
      %2035 = vmatpush1.msra.mxu0 0.0
      %2036 = vmatprep.subr.mxu0 0.0
      %2037 = vmatpush1.msra.mxu0 0.0
      %2038 = vmatprep.subr.mxu0 0.0
      %2039 = vmatpush1.msra.mxu0 0.0
      %2040 = vmatprep.subr.mxu0 0.0
      %2041 = vmatpush1.msra.mxu0 0.0
      %2042 = vmatprep.subr.mxu0 0.0
      %2043 = vmatpush1.msra.mxu0 0.0
      %2044 = vmatprep.subr.mxu0 0.0
      %2045 = vmatpush1.msra.mxu0 0.0
      %2046 = vmatprep.subr.mxu0 0.0
      %2047 = vmatpush1.msra.mxu0 0.0
      %2048 = vmatprep.subr.mxu0 0.0
      %2049 = vmatpush1.msra.mxu0 0.0
      %2050 = vmatprep.subr.mxu0 0.0
      %2051 = vmatpush1.msra.mxu0 0.0
      %2052 = vmatprep.subr.mxu0 0.0
      %2053 = vmatpush1.msra.mxu0 0.0
      %2054 = vmatprep.subr.mxu0 0.0
      %2055 = vmatpush1.msra.mxu0 0.0
      %2056 = vmatprep.subr.mxu0 0.0
      %2057 = vmatpush1.msra.mxu0 0.0
      %2058 = vmatprep.subr.mxu0 0.0
      %2059 = vmatpush1.msra.mxu0 0.0
      %2060 = vmatprep.subr.mxu0 0.0
      %2061 = vmatpush1.msra.mxu0 0.0
      %2062 = vmatprep.mubr.f32.mxu0 0.0
      %2063 = vmatmul.mubr.f32.gmra.mrb[0].mxu0 %v1990
      %v2064 = vpop.f32.mrb[0].mxu0
      %v2065 = vadd.f32 %v1987, %v2064
      %v2066 = vpop.f32.mrb[0].mxu0
      %2067 = vmatprep.mubr.f32.mxu0 0.0
      %2068 = vmatmul.mubr.f32.gmra.mrb[0].mxu0 %v1993
      %v2069 = vpop.f32.mrb[0].mxu0
      %v2070 = vadd.f32 %v1987, %v2069
      %v2071 = vpop.f32.mrb[0].mxu0
      %2072 = vmatprep.mubr.f32.mxu0 0.0
      %2073 = vmatmul.mubr.f32.gmra.mrb[0].mxu0 %v1996
      %v2074 = vpop.f32.mrb[0].mxu0
      %v2075 = vadd.f32 %v1987, %v2074
      %v2076 = vpop.f32.mrb[0].mxu0
      %2077 = vdwg.mxu0
      %s2078 = scalar_lea.vmem %s9, 32
      %v2079 = vld [vmem:[%s2078] sm:$0xff]
      %v2080 = vld [vmem:[%s2078 + $0x8] sm:$0xff]
      %v2081 = vld [vmem:[%s2078 + $0x10] sm:$0xff]
      %v2082 = vld [vmem:[%s2078 + $0x18] sm:$0xff]
      %s2083 = scalar_lea.vmem %s10, 1
      %v2084 = vld [vmem:[%s2083] sm:$0x1]
      %v2085 = vmul.f32 %v2065, 0.25
      %v2086 = vmul.f32 %v2070, 0.25
      %v2087 = vmul.f32 %v2075, 0.25
      %2091 = vrot.lane.b32.xlu0 %v2065, 96
      %v2092 = vpop.permute.xlu0 %2091
      %2093 = vrot.lane.b32.xlu0 %v2070, 96
      %v2094 = vpop.permute.xlu0 %2093
      %2095 = vrot.lane.b32.xlu0 %v2075, 96
      %v2096 = vpop.permute.xlu0 %2095
      %v2098 = vsel %vm963, %v2085, 0
      %v2101 = vsel %vm963, %v2086, 0
      %v2104 = vsel %vm963, %v2087, 0
      %v2106 = vsel %vm963, %v2092, 0
      %v2108 = vsel %vm963, %v2094, 0
      %v2110 = vsel %vm963, %v2096, 0
      %2112 = vmatprep.subr.mxu0 0.0
      %2113 = vmatpush1.xpose.msra.mxu0 %v2106
      %2114 = vmatprep.subr.mxu0 0.0
      %2115 = vmatpush1.xpose.msra.mxu0 %v2108
      %2116 = vmatprep.subr.mxu0 0.0
      %2117 = vmatpush1.xpose.msra.mxu0 %v2110
      %2118 = vmatprep.subr.mxu0 0.0
      %2119 = vmatpush1.xpose.msra.mxu0 0.0
      %2120 = vmatprep.subr.mxu0 0.0
      %2121 = vmatpush1.xpose.msra.mxu0 0.0
      %2122 = vmatprep.subr.mxu0 0.0
      %2123 = vmatpush1.xpose.msra.mxu0 0.0
      %2124 = vmatprep.subr.mxu0 0.0
      %2125 = vmatpush1.xpose.msra.mxu0 0.0
      %2126 = vmatprep.subr.mxu0 0.0
      %2127 = vmatpush1.xpose.msra.mxu0 0.0
      %2128 = vmatprep.subr.mxu0 0.0
      %2129 = vmatpush1.xpose.msra.mxu0 0.0
      %2130 = vmatprep.subr.mxu0 0.0
      %2131 = vmatpush1.xpose.msra.mxu0 0.0
      %2132 = vmatprep.subr.mxu0 0.0
      %2133 = vmatpush1.xpose.msra.mxu0 0.0
      %2134 = vmatprep.subr.mxu0 0.0
      %2135 = vmatpush1.xpose.msra.mxu0 0.0
      %2136 = vmatprep.subr.mxu0 0.0
      %2137 = vmatpush1.xpose.msra.mxu0 0.0
      %2138 = vmatprep.subr.mxu0 0.0
      %2139 = vmatpush1.xpose.msra.mxu0 0.0
      %2140 = vmatprep.subr.mxu0 0.0
      %2141 = vmatpush1.xpose.msra.mxu0 0.0
      %2142 = vmatprep.subr.mxu0 0.0
      %2143 = vmatpush1.xpose.msra.mxu0 0.0
      %2144 = vmatprep.subr.mxu0 0.0
      %2145 = vmatpush1.xpose.msra.mxu0 0.0
      %2146 = vmatprep.subr.mxu0 0.0
      %2147 = vmatpush1.xpose.msra.mxu0 0.0
      %2148 = vmatprep.subr.mxu0 0.0
      %2149 = vmatpush1.xpose.msra.mxu0 0.0
      %2150 = vmatprep.subr.mxu0 0.0
      %2151 = vmatpush1.xpose.msra.mxu0 0.0
      %2152 = vmatprep.subr.mxu0 0.0
      %2153 = vmatpush1.xpose.msra.mxu0 0.0
      %2154 = vmatprep.subr.mxu0 0.0
      %2155 = vmatpush1.xpose.msra.mxu0 0.0
      %2156 = vmatprep.subr.mxu0 0.0
      %2157 = vmatpush1.xpose.msra.mxu0 0.0
      %2158 = vmatprep.subr.mxu0 0.0
      %2159 = vmatpush1.xpose.msra.mxu0 0.0
      %2160 = vmatprep.subr.mxu0 0.0
      %2161 = vmatpush1.xpose.msra.mxu0 0.0
      %2162 = vmatprep.subr.mxu0 0.0
      %2163 = vmatpush1.xpose.msra.mxu0 0.0
      %2164 = vmatprep.subr.mxu0 0.0
      %2165 = vmatpush1.xpose.msra.mxu0 0.0
      %2166 = vmatprep.subr.mxu0 0.0
      %2167 = vmatpush1.xpose.msra.mxu0 0.0
      %2168 = vmatprep.subr.mxu0 0.0
      %2169 = vmatpush1.xpose.msra.mxu0 0.0
      %2170 = vmatprep.subr.mxu0 0.0
      %2171 = vmatpush1.xpose.msra.mxu0 0.0
      %2172 = vmatprep.subr.mxu0 0.0
      %2173 = vmatpush1.xpose.msra.mxu0 0.0
      %2174 = vmatprep.subr.mxu0 0.0
      %2175 = vmatpush1.xpose.msra.mxu0 0.0
      %2176 = vmatprep.mubr.f32.mxu0 0.0
      %2177 = vmatmul.mubr.f32.gmra.mrb[0].mxu0 %v2098
      %v2178 = vpop.f32.mrb[0].mxu0
      %v2179 = vadd.f32 0.0, %v2178
      %v2180 = vpop.f32.mrb[0].mxu0
      %2181 = vmatprep.mubr.f32.mxu0 0.0
      %2182 = vmatmul.mubr.f32.gmra.mrb[0].mxu0 %v2101
      %v2183 = vpop.f32.mrb[0].mxu0
      %v2184 = vadd.f32 0.0, %v2183
      %v2185 = vpop.f32.mrb[0].mxu0
      %2186 = vmatprep.mubr.f32.mxu0 0.0
      %2187 = vmatmul.mubr.f32.gmra.mrb[0].mxu0 %v2104
      %v2188 = vpop.f32.mrb[0].mxu0
      %v2189 = vadd.f32 0.0, %v2188
      %v2190 = vpop.f32.mrb[0].mxu0
      %2191 = vdwg.mxu0
      %v2192 = vsel %vm1059, %v2179, -inf
      %2193 = vmax.xlane.f32.xlu0 %v2192
      %v2194 = vpop.xlane.xlu0 %2193
      %v2195 = vsel %vm1059, %v2184, -inf
      %2196 = vmax.xlane.f32.xlu0 %v2195
      %v2197 = vpop.xlane.xlu0 %2196
      %v2198 = vsel %vm1066, %v2189, -inf
      %2199 = vmax.xlane.f32.xlu0 %v2198
      %v2200 = vpop.xlane.xlu0 %2199
      %v2201 = vsub.f32 %v2179, %v2194
      %v2202 = vsub.f32 %v2184, %v2197
      %v2203 = vsub.f32 %v2189, %v2200
      %v2204 = vmul.f32 %v2201, 1.442695
      %v2205 = vpow.pop %v2204
      %v2206 = vmul.f32 %v2202, 1.442695
      %v2207 = vpow.pop %v2206
      %v2208 = vmul.f32 %v2203, 1.442695
      %v2209 = vpow.pop %v2208
      %v2210 = vsel %vm1059, %v2205, 0.0
      %2211 = vadd.xlane.f32.xlu0 %v2210
      %v2212 = vpop.xlane.xlu0 %2211
      %v2213 = vsel %vm1059, %v2207, 0.0
      %2214 = vadd.xlane.f32.xlu0 %v2213
      %v2215 = vpop.xlane.xlu0 %2214
      %v2216 = vsel %vm1066, %v2209, 0.0
      %2217 = vadd.xlane.f32.xlu0 %v2216
      %v2218 = vpop.xlane.xlu0 %2217
      %v2219 = vrcp.pop %v2212
      %v2220 = vmul.f32 %v2205, %v2219
      %v2221 = vrcp.pop %v2215
      %v2222 = vmul.f32 %v2207, %v2221
      %v2223 = vrcp.pop %v2218
      %v2224 = vmul.f32 %v2209, %v2223
      %2225 = vrot.lane.b32.xlu0 %v2065, 64
      %v2226 = vpop.permute.xlu0 %2225
      %2227 = vrot.lane.b32.xlu0 %v2070, 64
      %v2228 = vpop.permute.xlu0 %2227
      %2229 = vrot.lane.b32.xlu0 %v2075, 64
      %v2230 = vpop.permute.xlu0 %2229
      %v2234 = vsel %vm1059, %v2220, 0
      %v2237 = vsel %vm1059, %v2222, 0
      %v2240 = vsel %vm1059, %v2224, 0
      %v2242 = vsel %vm1111, %v2230, 0
      %2244 = vmatprep.subr.mxu0 0.0
      %2245 = vmatpush1.msra.mxu0 %v2226
      %2246 = vmatprep.subr.mxu0 0.0
      %2247 = vmatpush1.msra.mxu0 %v2228
      %2248 = vmatprep.subr.mxu0 0.0
      %2249 = vmatpush1.msra.mxu0 %v2242
      %2250 = vmatprep.subr.mxu0 0.0
      %2251 = vmatpush1.msra.mxu0 0.0
      %2252 = vmatprep.subr.mxu0 0.0
      %2253 = vmatpush1.msra.mxu0 0.0
      %2254 = vmatprep.subr.mxu0 0.0
      %2255 = vmatpush1.msra.mxu0 0.0
      %2256 = vmatprep.subr.mxu0 0.0
      %2257 = vmatpush1.msra.mxu0 0.0
      %2258 = vmatprep.subr.mxu0 0.0
      %2259 = vmatpush1.msra.mxu0 0.0
      %2260 = vmatprep.subr.mxu0 0.0
      %2261 = vmatpush1.msra.mxu0 0.0
      %2262 = vmatprep.subr.mxu0 0.0
      %2263 = vmatpush1.msra.mxu0 0.0
      %2264 = vmatprep.subr.mxu0 0.0
      %2265 = vmatpush1.msra.mxu0 0.0
      %2266 = vmatprep.subr.mxu0 0.0
      %2267 = vmatpush1.msra.mxu0 0.0
      %2268 = vmatprep.subr.mxu0 0.0
      %2269 = vmatpush1.msra.mxu0 0.0
      %2270 = vmatprep.subr.mxu0 0.0
      %2271 = vmatpush1.msra.mxu0 0.0
      %2272 = vmatprep.subr.mxu0 0.0
      %2273 = vmatpush1.msra.mxu0 0.0
      %2274 = vmatprep.subr.mxu0 0.0
      %2275 = vmatpush1.msra.mxu0 0.0
      %2276 = vmatprep.subr.mxu0 0.0
      %2277 = vmatpush1.msra.mxu0 0.0
      %2278 = vmatprep.subr.mxu0 0.0
      %2279 = vmatpush1.msra.mxu0 0.0
      %2280 = vmatprep.subr.mxu0 0.0
      %2281 = vmatpush1.msra.mxu0 0.0
      %2282 = vmatprep.subr.mxu0 0.0
      %2283 = vmatpush1.msra.mxu0 0.0
      %2284 = vmatprep.subr.mxu0 0.0
      %2285 = vmatpush1.msra.mxu0 0.0
      %2286 = vmatprep.subr.mxu0 0.0
      %2287 = vmatpush1.msra.mxu0 0.0
      %2288 = vmatprep.subr.mxu0 0.0
      %2289 = vmatpush1.msra.mxu0 0.0
      %2290 = vmatprep.subr.mxu0 0.0
      %2291 = vmatpush1.msra.mxu0 0.0
      %2292 = vmatprep.subr.mxu0 0.0
      %2293 = vmatpush1.msra.mxu0 0.0
      %2294 = vmatprep.subr.mxu0 0.0
      %2295 = vmatpush1.msra.mxu0 0.0
      %2296 = vmatprep.subr.mxu0 0.0
      %2297 = vmatpush1.msra.mxu0 0.0
      %2298 = vmatprep.subr.mxu0 0.0
      %2299 = vmatpush1.msra.mxu0 0.0
      %2300 = vmatprep.subr.mxu0 0.0
      %2301 = vmatpush1.msra.mxu0 0.0
      %2302 = vmatprep.subr.mxu0 0.0
      %2303 = vmatpush1.msra.mxu0 0.0
      %2304 = vmatprep.subr.mxu0 0.0
      %2305 = vmatpush1.msra.mxu0 0.0
      %2306 = vmatprep.subr.mxu0 0.0
      %2307 = vmatpush1.msra.mxu0 0.0
      %2308 = vmatprep.mubr.f32.mxu0 0.0
      %2309 = vmatmul.mubr.f32.gmra.mrb[0].mxu0 %v2234
      %v2310 = vpop.f32.mrb[0].mxu0
      %v2311 = vadd.f32 0.0, %v2310
      %v2312 = vpop.f32.mrb[0].mxu0
      %2313 = vmatprep.mubr.f32.mxu0 0.0
      %2314 = vmatmul.mubr.f32.gmra.mrb[0].mxu0 %v2237
      %v2315 = vpop.f32.mrb[0].mxu0
      %v2316 = vadd.f32 0.0, %v2315
      %v2317 = vpop.f32.mrb[0].mxu0
      %2318 = vmatprep.mubr.f32.mxu0 0.0
      %2319 = vmatmul.mubr.f32.gmra.mrb[0].mxu0 %v2240
      %v2320 = vpop.f32.mrb[0].mxu0
      %v2321 = vadd.f32 0.0, %v2320
      %v2322 = vpop.f32.mrb[0].mxu0
      %2323 = vdwg.mxu0
      %v2325 = vsel %vm963, %v2311, 0
      %v2328 = vsel %vm963, %v2316, 0
      %v2331 = vsel %vm963, %v2321, 0
      %2333 = vmatprep.subr.mxu0 0.0
      %2334 = vmatpush1.msra.mxu0 %v2079
      %2335 = vmatprep.subr.mxu0 0.0
      %2336 = vmatpush1.msra.mxu0 %v2080
      %2337 = vmatprep.subr.mxu0 0.0
      %2338 = vmatpush1.msra.mxu0 0.0
      %2339 = vmatprep.subr.mxu0 0.0
      %2340 = vmatpush1.msra.mxu0 0.0
      %2341 = vmatprep.subr.mxu0 0.0
      %2342 = vmatpush1.msra.mxu0 0.0
      %2343 = vmatprep.subr.mxu0 0.0
      %2344 = vmatpush1.msra.mxu0 0.0
      %2345 = vmatprep.subr.mxu0 0.0
      %2346 = vmatpush1.msra.mxu0 0.0
      %2347 = vmatprep.subr.mxu0 0.0
      %2348 = vmatpush1.msra.mxu0 0.0
      %2349 = vmatprep.subr.mxu0 0.0
      %2350 = vmatpush1.msra.mxu0 0.0
      %2351 = vmatprep.subr.mxu0 0.0
      %2352 = vmatpush1.msra.mxu0 0.0
      %2353 = vmatprep.subr.mxu0 0.0
      %2354 = vmatpush1.msra.mxu0 0.0
      %2355 = vmatprep.subr.mxu0 0.0
      %2356 = vmatpush1.msra.mxu0 0.0
      %2357 = vmatprep.subr.mxu0 0.0
      %2358 = vmatpush1.msra.mxu0 0.0
      %2359 = vmatprep.subr.mxu0 0.0
      %2360 = vmatpush1.msra.mxu0 0.0
      %2361 = vmatprep.subr.mxu0 0.0
      %2362 = vmatpush1.msra.mxu0 0.0
      %2363 = vmatprep.subr.mxu0 0.0
      %2364 = vmatpush1.msra.mxu0 0.0
      %2365 = vmatprep.subr.mxu0 0.0
      %2366 = vmatpush1.msra.mxu0 0.0
      %2367 = vmatprep.subr.mxu0 0.0
      %2368 = vmatpush1.msra.mxu0 0.0
      %2369 = vmatprep.subr.mxu0 0.0
      %2370 = vmatpush1.msra.mxu0 0.0
      %2371 = vmatprep.subr.mxu0 0.0
      %2372 = vmatpush1.msra.mxu0 0.0
      %2373 = vmatprep.subr.mxu0 0.0
      %2374 = vmatpush1.msra.mxu0 0.0
      %2375 = vmatprep.subr.mxu0 0.0
      %2376 = vmatpush1.msra.mxu0 0.0
      %2377 = vmatprep.subr.mxu0 0.0
      %2378 = vmatpush1.msra.mxu0 0.0
      %2379 = vmatprep.subr.mxu0 0.0
      %2380 = vmatpush1.msra.mxu0 0.0
      %2381 = vmatprep.subr.mxu0 0.0
      %2382 = vmatpush1.msra.mxu0 0.0
      %2383 = vmatprep.subr.mxu0 0.0
      %2384 = vmatpush1.msra.mxu0 0.0
      %2385 = vmatprep.subr.mxu0 0.0
      %2386 = vmatpush1.msra.mxu0 0.0
      %2387 = vmatprep.subr.mxu0 0.0
      %2388 = vmatpush1.msra.mxu0 0.0
      %2389 = vmatprep.subr.mxu0 0.0
      %2390 = vmatpush1.msra.mxu0 0.0
      %2391 = vmatprep.subr.mxu0 0.0
      %2392 = vmatpush1.msra.mxu0 0.0
      %2393 = vmatprep.subr.mxu0 0.0
      %2394 = vmatpush1.msra.mxu0 0.0
      %2395 = vmatprep.subr.mxu0 0.0
      %2396 = vmatpush1.msra.mxu0 0.0
      %2397 = vmatprep.mubr.f32.mxu0 0.0
      %2398 = vmatmul.mubr.f32.gmra.mrb[0].mxu0 %v2325
      %v2399 = vpop.f32.mrb[0].mxu0
      %v2400 = vadd.f32 0.0, %v2399
      %v2401 = vpop.f32.mrb[0].mxu0
      %2402 = vmatprep.mubr.f32.mxu0 0.0
      %2403 = vmatmul.mubr.f32.gmra.mrb[0].mxu0 %v2328
      %v2404 = vpop.f32.mrb[0].mxu0
      %v2405 = vadd.f32 0.0, %v2404
      %v2406 = vpop.f32.mrb[0].mxu0
      %2407 = vmatprep.mubr.f32.mxu0 0.0
      %2408 = vmatmul.mubr.f32.gmra.mrb[0].mxu0 %v2331
      %v2409 = vpop.f32.mrb[0].mxu0
      %v2410 = vadd.f32 0.0, %v2409
      %v2411 = vpop.f32.mrb[0].mxu0
      %2412 = vdwg.mxu0
      %v2414 = vlaneseq
      %v2415 = vshrl.u32 %v2414, 7
      %v2416 = vsub.s32 0, %v2415
      %v2417 = vrot.slane %v2084, %v2416
      %v2419 = vadd.f32 %v2417, %v2400
      %v2420 = vadd.f32 %v2417, %v2405
      %v2421 = vadd.f32 %v2417, %v2410
      %2422 = vrot.lane.b32.xlu0 %v2085, 112
      %v2423 = vpop.permute.xlu0 %2422
      %2424 = vrot.lane.b32.xlu0 %v2086, 112
      %v2425 = vpop.permute.xlu0 %2424
      %2426 = vrot.lane.b32.xlu0 %v2087, 112
      %v2427 = vpop.permute.xlu0 %2426
      %2428 = vrot.lane.b32.xlu0 %v2065, 80
      %v2429 = vpop.permute.xlu0 %2428
      %2430 = vrot.lane.b32.xlu0 %v2070, 80
      %v2431 = vpop.permute.xlu0 %2430
      %2432 = vrot.lane.b32.xlu0 %v2075, 80
      %v2433 = vpop.permute.xlu0 %2432
      %v2434 = vsel %vm963, %v2423, 0
      %v2436 = vsel %vm963, %v2425, 0
      %v2438 = vsel %vm963, %v2427, 0
      %v2440 = vsel %vm963, %v2429, 0
      %v2442 = vsel %vm963, %v2431, 0
      %v2444 = vsel %vm963, %v2433, 0
      %2446 = vmatprep.subr.mxu0 0.0
      %2447 = vmatpush1.xpose.msra.mxu0 %v2440
      %2448 = vmatprep.subr.mxu0 0.0
      %2449 = vmatpush1.xpose.msra.mxu0 %v2442
      %2450 = vmatprep.subr.mxu0 0.0
      %2451 = vmatpush1.xpose.msra.mxu0 %v2444
      %2452 = vmatprep.subr.mxu0 0.0
      %2453 = vmatpush1.xpose.msra.mxu0 0.0
      %2454 = vmatprep.subr.mxu0 0.0
      %2455 = vmatpush1.xpose.msra.mxu0 0.0
      %2456 = vmatprep.subr.mxu0 0.0
      %2457 = vmatpush1.xpose.msra.mxu0 0.0
      %2458 = vmatprep.subr.mxu0 0.0
      %2459 = vmatpush1.xpose.msra.mxu0 0.0
      %2460 = vmatprep.subr.mxu0 0.0
      %2461 = vmatpush1.xpose.msra.mxu0 0.0
      %2462 = vmatprep.subr.mxu0 0.0
      %2463 = vmatpush1.xpose.msra.mxu0 0.0
      %2464 = vmatprep.subr.mxu0 0.0
      %2465 = vmatpush1.xpose.msra.mxu0 0.0
      %2466 = vmatprep.subr.mxu0 0.0
      %2467 = vmatpush1.xpose.msra.mxu0 0.0
      %2468 = vmatprep.subr.mxu0 0.0
      %2469 = vmatpush1.xpose.msra.mxu0 0.0
      %2470 = vmatprep.subr.mxu0 0.0
      %2471 = vmatpush1.xpose.msra.mxu0 0.0
      %2472 = vmatprep.subr.mxu0 0.0
      %2473 = vmatpush1.xpose.msra.mxu0 0.0
      %2474 = vmatprep.subr.mxu0 0.0
      %2475 = vmatpush1.xpose.msra.mxu0 0.0
      %2476 = vmatprep.subr.mxu0 0.0
      %2477 = vmatpush1.xpose.msra.mxu0 0.0
      %2478 = vmatprep.subr.mxu0 0.0
      %2479 = vmatpush1.xpose.msra.mxu0 0.0
      %2480 = vmatprep.subr.mxu0 0.0
      %2481 = vmatpush1.xpose.msra.mxu0 0.0
      %2482 = vmatprep.subr.mxu0 0.0
      %2483 = vmatpush1.xpose.msra.mxu0 0.0
      %2484 = vmatprep.subr.mxu0 0.0
      %2485 = vmatpush1.xpose.msra.mxu0 0.0
      %2486 = vmatprep.subr.mxu0 0.0
      %2487 = vmatpush1.xpose.msra.mxu0 0.0
      %2488 = vmatprep.subr.mxu0 0.0
      %2489 = vmatpush1.xpose.msra.mxu0 0.0
      %2490 = vmatprep.subr.mxu0 0.0
      %2491 = vmatpush1.xpose.msra.mxu0 0.0
      %2492 = vmatprep.subr.mxu0 0.0
      %2493 = vmatpush1.xpose.msra.mxu0 0.0
      %2494 = vmatprep.subr.mxu0 0.0
      %2495 = vmatpush1.xpose.msra.mxu0 0.0
      %2496 = vmatprep.subr.mxu0 0.0
      %2497 = vmatpush1.xpose.msra.mxu0 0.0
      %2498 = vmatprep.subr.mxu0 0.0
      %2499 = vmatpush1.xpose.msra.mxu0 0.0
      %2500 = vmatprep.subr.mxu0 0.0
      %2501 = vmatpush1.xpose.msra.mxu0 0.0
      %2502 = vmatprep.subr.mxu0 0.0
      %2503 = vmatpush1.xpose.msra.mxu0 0.0
      %2504 = vmatprep.subr.mxu0 0.0
      %2505 = vmatpush1.xpose.msra.mxu0 0.0
      %2506 = vmatprep.subr.mxu0 0.0
      %2507 = vmatpush1.xpose.msra.mxu0 0.0
      %2508 = vmatprep.subr.mxu0 0.0
      %2509 = vmatpush1.xpose.msra.mxu0 0.0
      %2510 = vmatprep.mubr.f32.mxu0 0.0
      %2511 = vmatmul.mubr.f32.gmra.mrb[0].mxu0 %v2434
      %v2512 = vpop.f32.mrb[0].mxu0
      %v2513 = vadd.f32 0.0, %v2512
      %v2514 = vpop.f32.mrb[0].mxu0
      %2515 = vmatprep.mubr.f32.mxu0 0.0
      %2516 = vmatmul.mubr.f32.gmra.mrb[0].mxu0 %v2436
      %v2517 = vpop.f32.mrb[0].mxu0
      %v2518 = vadd.f32 0.0, %v2517
      %v2519 = vpop.f32.mrb[0].mxu0
      %2520 = vmatprep.mubr.f32.mxu0 0.0
      %2521 = vmatmul.mubr.f32.gmra.mrb[0].mxu0 %v2438
      %v2522 = vpop.f32.mrb[0].mxu0
      %v2523 = vadd.f32 0.0, %v2522
      %v2524 = vpop.f32.mrb[0].mxu0
      %2525 = vdwg.mxu0
      %v2526 = vsel %vm1059, %v2513, -inf
      %2527 = vmax.xlane.f32.xlu0 %v2526
      %v2528 = vpop.xlane.xlu0 %2527
      %v2529 = vsel %vm1059, %v2518, -inf
      %2530 = vmax.xlane.f32.xlu0 %v2529
      %v2531 = vpop.xlane.xlu0 %2530
      %v2532 = vsel %vm1066, %v2523, -inf
      %2533 = vmax.xlane.f32.xlu0 %v2532
      %v2534 = vpop.xlane.xlu0 %2533
      %v2535 = vsub.f32 %v2513, %v2528
      %v2536 = vsub.f32 %v2518, %v2531
      %v2537 = vsub.f32 %v2523, %v2534
      %v2538 = vmul.f32 %v2535, 1.442695
      %v2539 = vpow.pop %v2538
      %v2540 = vmul.f32 %v2536, 1.442695
      %v2541 = vpow.pop %v2540
      %v2542 = vmul.f32 %v2537, 1.442695
      %v2543 = vpow.pop %v2542
      %v2544 = vsel %vm1059, %v2539, 0.0
      %2545 = vadd.xlane.f32.xlu0 %v2544
      %v2546 = vpop.xlane.xlu0 %2545
      %v2547 = vsel %vm1059, %v2541, 0.0
      %2548 = vadd.xlane.f32.xlu0 %v2547
      %v2549 = vpop.xlane.xlu0 %2548
      %v2550 = vsel %vm1066, %v2543, 0.0
      %2551 = vadd.xlane.f32.xlu0 %v2550
      %v2552 = vpop.xlane.xlu0 %2551
      %v2553 = vrcp.pop %v2546
      %v2554 = vmul.f32 %v2539, %v2553
      %v2555 = vrcp.pop %v2549
      %v2556 = vmul.f32 %v2541, %v2555
      %v2557 = vrcp.pop %v2552
      %v2558 = vmul.f32 %v2543, %v2557
      %2559 = vrot.lane.b32.xlu0 %v2065, 48
      %v2560 = vpop.permute.xlu0 %2559
      %2561 = vrot.lane.b32.xlu0 %v2070, 48
      %v2562 = vpop.permute.xlu0 %2561
      %2563 = vrot.lane.b32.xlu0 %v2075, 48
      %v2564 = vpop.permute.xlu0 %2563
      %v2568 = vsel %vm1059, %v2554, 0
      %v2571 = vsel %vm1059, %v2556, 0
      %v2574 = vsel %vm1059, %v2558, 0
      %v2576 = vsel %vm1111, %v2564, 0
      %2578 = vmatprep.subr.mxu0 0.0
      %2579 = vmatpush1.msra.mxu0 %v2560
      %2580 = vmatprep.subr.mxu0 0.0
      %2581 = vmatpush1.msra.mxu0 %v2562
      %2582 = vmatprep.subr.mxu0 0.0
      %2583 = vmatpush1.msra.mxu0 %v2576
      %2584 = vmatprep.subr.mxu0 0.0
      %2585 = vmatpush1.msra.mxu0 0.0
      %2586 = vmatprep.subr.mxu0 0.0
      %2587 = vmatpush1.msra.mxu0 0.0
      %2588 = vmatprep.subr.mxu0 0.0
      %2589 = vmatpush1.msra.mxu0 0.0
      %2590 = vmatprep.subr.mxu0 0.0
      %2591 = vmatpush1.msra.mxu0 0.0
      %2592 = vmatprep.subr.mxu0 0.0
      %2593 = vmatpush1.msra.mxu0 0.0
      %2594 = vmatprep.subr.mxu0 0.0
      %2595 = vmatpush1.msra.mxu0 0.0
      %2596 = vmatprep.subr.mxu0 0.0
      %2597 = vmatpush1.msra.mxu0 0.0
      %2598 = vmatprep.subr.mxu0 0.0
      %2599 = vmatpush1.msra.mxu0 0.0
      %2600 = vmatprep.subr.mxu0 0.0
      %2601 = vmatpush1.msra.mxu0 0.0
      %2602 = vmatprep.subr.mxu0 0.0
      %2603 = vmatpush1.msra.mxu0 0.0
      %2604 = vmatprep.subr.mxu0 0.0
      %2605 = vmatpush1.msra.mxu0 0.0
      %2606 = vmatprep.subr.mxu0 0.0
      %2607 = vmatpush1.msra.mxu0 0.0
      %2608 = vmatprep.subr.mxu0 0.0
      %2609 = vmatpush1.msra.mxu0 0.0
      %2610 = vmatprep.subr.mxu0 0.0
      %2611 = vmatpush1.msra.mxu0 0.0
      %2612 = vmatprep.subr.mxu0 0.0
      %2613 = vmatpush1.msra.mxu0 0.0
      %2614 = vmatprep.subr.mxu0 0.0
      %2615 = vmatpush1.msra.mxu0 0.0
      %2616 = vmatprep.subr.mxu0 0.0
      %2617 = vmatpush1.msra.mxu0 0.0
      %2618 = vmatprep.subr.mxu0 0.0
      %2619 = vmatpush1.msra.mxu0 0.0
      %2620 = vmatprep.subr.mxu0 0.0
      %2621 = vmatpush1.msra.mxu0 0.0
      %2622 = vmatprep.subr.mxu0 0.0
      %2623 = vmatpush1.msra.mxu0 0.0
      %2624 = vmatprep.subr.mxu0 0.0
      %2625 = vmatpush1.msra.mxu0 0.0
      %2626 = vmatprep.subr.mxu0 0.0
      %2627 = vmatpush1.msra.mxu0 0.0
      %2628 = vmatprep.subr.mxu0 0.0
      %2629 = vmatpush1.msra.mxu0 0.0
      %2630 = vmatprep.subr.mxu0 0.0
      %2631 = vmatpush1.msra.mxu0 0.0
      %2632 = vmatprep.subr.mxu0 0.0
      %2633 = vmatpush1.msra.mxu0 0.0
      %2634 = vmatprep.subr.mxu0 0.0
      %2635 = vmatpush1.msra.mxu0 0.0
      %2636 = vmatprep.subr.mxu0 0.0
      %2637 = vmatpush1.msra.mxu0 0.0
      %2638 = vmatprep.subr.mxu0 0.0
      %2639 = vmatpush1.msra.mxu0 0.0
      %2640 = vmatprep.subr.mxu0 0.0
      %2641 = vmatpush1.msra.mxu0 0.0
      %2642 = vmatprep.mubr.f32.mxu0 0.0
      %2643 = vmatmul.mubr.f32.gmra.mrb[0].mxu0 %v2568
      %v2644 = vpop.f32.mrb[0].mxu0
      %v2645 = vadd.f32 0.0, %v2644
      %v2646 = vpop.f32.mrb[0].mxu0
      %2647 = vmatprep.mubr.f32.mxu0 0.0
      %2648 = vmatmul.mubr.f32.gmra.mrb[0].mxu0 %v2571
      %v2649 = vpop.f32.mrb[0].mxu0
      %v2650 = vadd.f32 0.0, %v2649
      %v2651 = vpop.f32.mrb[0].mxu0
      %2652 = vmatprep.mubr.f32.mxu0 0.0
      %2653 = vmatmul.mubr.f32.gmra.mrb[0].mxu0 %v2574
      %v2654 = vpop.f32.mrb[0].mxu0
      %v2655 = vadd.f32 0.0, %v2654
      %v2656 = vpop.f32.mrb[0].mxu0
      %2657 = vdwg.mxu0
      %v2659 = vsel %vm963, %v2645, 0
      %v2662 = vsel %vm963, %v2650, 0
      %v2665 = vsel %vm963, %v2655, 0
      %2667 = vmatprep.subr.mxu0 0.0
      %2668 = vmatpush1.msra.mxu0 %v2081
      %2669 = vmatprep.subr.mxu0 0.0
      %2670 = vmatpush1.msra.mxu0 %v2082
      %2671 = vmatprep.subr.mxu0 0.0
      %2672 = vmatpush1.msra.mxu0 0.0
      %2673 = vmatprep.subr.mxu0 0.0
      %2674 = vmatpush1.msra.mxu0 0.0
      %2675 = vmatprep.subr.mxu0 0.0
      %2676 = vmatpush1.msra.mxu0 0.0
      %2677 = vmatprep.subr.mxu0 0.0
      %2678 = vmatpush1.msra.mxu0 0.0
      %2679 = vmatprep.subr.mxu0 0.0
      %2680 = vmatpush1.msra.mxu0 0.0
      %2681 = vmatprep.subr.mxu0 0.0
      %2682 = vmatpush1.msra.mxu0 0.0
      %2683 = vmatprep.subr.mxu0 0.0
      %2684 = vmatpush1.msra.mxu0 0.0
      %2685 = vmatprep.subr.mxu0 0.0
      %2686 = vmatpush1.msra.mxu0 0.0
      %2687 = vmatprep.subr.mxu0 0.0
      %2688 = vmatpush1.msra.mxu0 0.0
      %2689 = vmatprep.subr.mxu0 0.0
      %2690 = vmatpush1.msra.mxu0 0.0
      %2691 = vmatprep.subr.mxu0 0.0
      %2692 = vmatpush1.msra.mxu0 0.0
      %2693 = vmatprep.subr.mxu0 0.0
      %2694 = vmatpush1.msra.mxu0 0.0
      %2695 = vmatprep.subr.mxu0 0.0
      %2696 = vmatpush1.msra.mxu0 0.0
      %2697 = vmatprep.subr.mxu0 0.0
      %2698 = vmatpush1.msra.mxu0 0.0
      %2699 = vmatprep.subr.mxu0 0.0
      %2700 = vmatpush1.msra.mxu0 0.0
      %2701 = vmatprep.subr.mxu0 0.0
      %2702 = vmatpush1.msra.mxu0 0.0
      %2703 = vmatprep.subr.mxu0 0.0
      %2704 = vmatpush1.msra.mxu0 0.0
      %2705 = vmatprep.subr.mxu0 0.0
      %2706 = vmatpush1.msra.mxu0 0.0
      %2707 = vmatprep.subr.mxu0 0.0
      %2708 = vmatpush1.msra.mxu0 0.0
      %2709 = vmatprep.subr.mxu0 0.0
      %2710 = vmatpush1.msra.mxu0 0.0
      %2711 = vmatprep.subr.mxu0 0.0
      %2712 = vmatpush1.msra.mxu0 0.0
      %2713 = vmatprep.subr.mxu0 0.0
      %2714 = vmatpush1.msra.mxu0 0.0
      %2715 = vmatprep.subr.mxu0 0.0
      %2716 = vmatpush1.msra.mxu0 0.0
      %2717 = vmatprep.subr.mxu0 0.0
      %2718 = vmatpush1.msra.mxu0 0.0
      %2719 = vmatprep.subr.mxu0 0.0
      %2720 = vmatpush1.msra.mxu0 0.0
      %2721 = vmatprep.subr.mxu0 0.0
      %2722 = vmatpush1.msra.mxu0 0.0
      %2723 = vmatprep.subr.mxu0 0.0
      %2724 = vmatpush1.msra.mxu0 0.0
      %2725 = vmatprep.subr.mxu0 0.0
      %2726 = vmatpush1.msra.mxu0 0.0
      %2727 = vmatprep.subr.mxu0 0.0
      %2728 = vmatpush1.msra.mxu0 0.0
      %2729 = vmatprep.subr.mxu0 0.0
      %2730 = vmatpush1.msra.mxu0 0.0
      %2731 = vmatprep.mubr.f32.mxu0 0.0
      %2732 = vmatmul.mubr.f32.gmra.mrb[0].mxu0 %v2659
      %v2733 = vpop.f32.mrb[0].mxu0
      %v2734 = vadd.f32 0.0, %v2733
      %v2735 = vpop.f32.mrb[0].mxu0
      %2736 = vmatprep.mubr.f32.mxu0 0.0
      %2737 = vmatmul.mubr.f32.gmra.mrb[0].mxu0 %v2662
      %v2738 = vpop.f32.mrb[0].mxu0
      %v2739 = vadd.f32 0.0, %v2738
      %v2740 = vpop.f32.mrb[0].mxu0
      %2741 = vmatprep.mubr.f32.mxu0 0.0
      %2742 = vmatmul.mubr.f32.gmra.mrb[0].mxu0 %v2665
      %v2743 = vpop.f32.mrb[0].mxu0
      %v2744 = vadd.f32 0.0, %v2743
      %v2745 = vpop.f32.mrb[0].mxu0
      %2746 = vdwg.mxu0
      %v2747 = vadd.f32 %v2419, %v2734
      %v2748 = vadd.f32 %v2420, %v2739
      %v2749 = vadd.f32 %v2421, %v2744
      %v2750 = vadd.f32 %v1912, %v2747
      %v2751 = vadd.f32 %v1913, %v2748
      %v2752 = vadd.f32 %v1914, %v2749
      %s2753 = scalar_lea.vmem %s11, 1
      %v2754 = vld [vmem:[%s2753] sm:$0x1]
      %s2755 = scalar_lea.vmem %s12, 1
      %v2756 = vld [vmem:[%s2755] sm:$0x1]
      %v2757 = vsel %vm786, %v2750, 0.0
      %2758 = vadd.xlane.f32.xlu0 %v2757
      %v2759 = vpop.xlane.xlu0 %2758
      %v2760 = vsel %vm786, %v2751, 0.0
      %2761 = vadd.xlane.f32.xlu0 %v2760
      %v2762 = vpop.xlane.xlu0 %2761
      %v2763 = vsel %vm793, %v2752, 0.0
      %2764 = vadd.xlane.f32.xlu0 %v2763
      %v2765 = vpop.xlane.xlu0 %2764
      %v2766 = vmul.f32 %v2759, %v797
      %v2767 = vmul.f32 %v2762, %v797
      %v2768 = vmul.f32 %v2765, %v797
      %v2769 = vsub.f32 %v2750, %v2766
      %v2770 = vsub.f32 %v2751, %v2767
      %v2771 = vsub.f32 %v2752, %v2768
      %v2772 = vmul.f32 %v2769, %v2769
      %v2773 = vmul.f32 %v2770, %v2770
      %v2774 = vmul.f32 %v2771, %v2771
      %v2775 = vsel %vm786, %v2772, 0.0
      %2776 = vadd.xlane.f32.xlu0 %v2775
      %v2777 = vpop.xlane.xlu0 %2776
      %v2778 = vsel %vm786, %v2773, 0.0
      %2779 = vadd.xlane.f32.xlu0 %v2778
      %v2780 = vpop.xlane.xlu0 %2779
      %v2781 = vsel %vm793, %v2774, 0.0
      %2782 = vadd.xlane.f32.xlu0 %v2781
      %v2783 = vpop.xlane.xlu0 %2782
      %v2784 = vmul.f32 %v2777, %v797
      %v2785 = vmul.f32 %v2780, %v797
      %v2786 = vmul.f32 %v2783, %v797
      %v2787 = vadd.f32 %v2784, 1e-06
      %v2788 = vadd.f32 %v2785, 1e-06
      %v2789 = vadd.f32 %v2786, 1e-06
      %v2790 = vrsqrt.pop %v2787
      %v2791 = vrsqrt.pop %v2788
      %v2792 = vrsqrt.pop %v2789
      %v2793 = vmul.f32 %v2769, %v2790
      %v2794 = vmul.f32 %v2770, %v2791
      %v2795 = vmul.f32 %v2771, %v2792
      %v2797 = vlaneseq
      %v2798 = vshrl.u32 %v2797, 7
      %v2799 = vsub.s32 0, %v2798
      %v2800 = vrot.slane %v2754, %v2799
      %v2802 = vmul.f32 %v2793, %v2800
      %v2803 = vmul.f32 %v2794, %v2800
      %v2804 = vmul.f32 %v2795, %v2800
      %v2806 = vlaneseq
      %v2807 = vshrl.u32 %v2806, 7
      %v2808 = vsub.s32 0, %v2807
      %v2809 = vrot.slane %v2756, %v2808
      %v2811 = vadd.f32 %v2802, %v2809
      %v2812 = vadd.f32 %v2803, %v2809
      %v2813 = vadd.f32 %v2804, %v2809
      %s2814 = scalar_lea.vmem %s13, 32
      %v2815 = vld [vmem:[%s2814] sm:$0xff]
      %v2816 = vld [vmem:[%s2814 + $0x8] sm:$0xff]
      %v2817 = vld [vmem:[%s2814 + $0x10] sm:$0xff]
      %v2818 = vld [vmem:[%s2814 + $0x18] sm:$0xff]
      %s2819 = scalar_lea.vmem %s14, 1
      %v2820 = vld [vmem:[%s2819] sm:$0x1]
      %v2822 = vlaneseq
      %v2823 = vshrl.u32 %v2822, 7
      %v2824 = vsub.s32 0, %v2823
      %v2825 = vrot.slane %v2820, %v2824
      %v2828 = vsel %vm786, %v2811, 0
      %v2831 = vsel %vm786, %v2812, 0
      %v2834 = vsel %vm786, %v2813, 0
      %2836 = vmatprep.subr.mxu0 0.0
      %2837 = vmatpush1.msra.mxu0 %v2815
      %2838 = vmatprep.subr.mxu0 0.0
      %2839 = vmatpush1.msra.mxu0 %v2816
      %2840 = vmatprep.subr.mxu0 0.0
      %2841 = vmatpush1.msra.mxu0 %v2817
      %2842 = vmatprep.subr.mxu0 0.0
      %2843 = vmatpush1.msra.mxu0 %v2818
      %2844 = vmatprep.subr.mxu0 0.0
      %2845 = vmatpush1.msra.mxu0 0.0
      %2846 = vmatprep.subr.mxu0 0.0
      %2847 = vmatpush1.msra.mxu0 0.0
      %2848 = vmatprep.subr.mxu0 0.0
      %2849 = vmatpush1.msra.mxu0 0.0
      %2850 = vmatprep.subr.mxu0 0.0
      %2851 = vmatpush1.msra.mxu0 0.0
      %2852 = vmatprep.subr.mxu0 0.0
      %2853 = vmatpush1.msra.mxu0 0.0
      %2854 = vmatprep.subr.mxu0 0.0
      %2855 = vmatpush1.msra.mxu0 0.0
      %2856 = vmatprep.subr.mxu0 0.0
      %2857 = vmatpush1.msra.mxu0 0.0
      %2858 = vmatprep.subr.mxu0 0.0
      %2859 = vmatpush1.msra.mxu0 0.0
      %2860 = vmatprep.subr.mxu0 0.0
      %2861 = vmatpush1.msra.mxu0 0.0
      %2862 = vmatprep.subr.mxu0 0.0
      %2863 = vmatpush1.msra.mxu0 0.0
      %2864 = vmatprep.subr.mxu0 0.0
      %2865 = vmatpush1.msra.mxu0 0.0
      %2866 = vmatprep.subr.mxu0 0.0
      %2867 = vmatpush1.msra.mxu0 0.0
      %2868 = vmatprep.subr.mxu0 0.0
      %2869 = vmatpush1.msra.mxu0 0.0
      %2870 = vmatprep.subr.mxu0 0.0
      %2871 = vmatpush1.msra.mxu0 0.0
      %2872 = vmatprep.subr.mxu0 0.0
      %2873 = vmatpush1.msra.mxu0 0.0
      %2874 = vmatprep.subr.mxu0 0.0
      %2875 = vmatpush1.msra.mxu0 0.0
      %2876 = vmatprep.subr.mxu0 0.0
      %2877 = vmatpush1.msra.mxu0 0.0
      %2878 = vmatprep.subr.mxu0 0.0
      %2879 = vmatpush1.msra.mxu0 0.0
      %2880 = vmatprep.subr.mxu0 0.0
      %2881 = vmatpush1.msra.mxu0 0.0
      %2882 = vmatprep.subr.mxu0 0.0
      %2883 = vmatpush1.msra.mxu0 0.0
      %2884 = vmatprep.subr.mxu0 0.0
      %2885 = vmatpush1.msra.mxu0 0.0
      %2886 = vmatprep.subr.mxu0 0.0
      %2887 = vmatpush1.msra.mxu0 0.0
      %2888 = vmatprep.subr.mxu0 0.0
      %2889 = vmatpush1.msra.mxu0 0.0
      %2890 = vmatprep.subr.mxu0 0.0
      %2891 = vmatpush1.msra.mxu0 0.0
      %2892 = vmatprep.subr.mxu0 0.0
      %2893 = vmatpush1.msra.mxu0 0.0
      %2894 = vmatprep.subr.mxu0 0.0
      %2895 = vmatpush1.msra.mxu0 0.0
      %2896 = vmatprep.subr.mxu0 0.0
      %2897 = vmatpush1.msra.mxu0 0.0
      %2898 = vmatprep.subr.mxu0 0.0
      %2899 = vmatpush1.msra.mxu0 0.0
      %2900 = vmatprep.mubr.f32.mxu0 0.0
      %2901 = vmatmul.mubr.f32.gmra.mrb[0].mxu0 %v2828
      %v2902 = vpop.f32.mrb[0].mxu0
      %v2903 = vadd.f32 %v2825, %v2902
      %v2904 = vpop.f32.mrb[0].mxu0
      %2905 = vmatprep.mubr.f32.mxu0 0.0
      %2906 = vmatmul.mubr.f32.gmra.mrb[0].mxu0 %v2831
      %v2907 = vpop.f32.mrb[0].mxu0
      %v2908 = vadd.f32 %v2825, %v2907
      %v2909 = vpop.f32.mrb[0].mxu0
      %2910 = vmatprep.mubr.f32.mxu0 0.0
      %2911 = vmatmul.mubr.f32.gmra.mrb[0].mxu0 %v2834
      %v2912 = vpop.f32.mrb[0].mxu0
      %v2913 = vadd.f32 %v2825, %v2912
      %v2914 = vpop.f32.mrb[0].mxu0
      %2915 = vdwg.mxu0
      %v2916 = vmul.f32 %v2903, %v2903
      %v2917 = vmul.f32 %v2908, %v2908
      %v2918 = vmul.f32 %v2913, %v2913
      %v2919 = vmul.f32 %v2903, %v2916
      %v2920 = vmul.f32 %v2908, %v2917
      %v2921 = vmul.f32 %v2913, %v2918
      %v2922 = vmul.f32 %v2919, 0.044715
      %v2923 = vmul.f32 %v2920, 0.044715
      %v2924 = vmul.f32 %v2921, 0.044715
      %v2925 = vadd.f32 %v2903, %v2922
      %v2926 = vadd.f32 %v2908, %v2923
      %v2927 = vadd.f32 %v2913, %v2924
      %v2928 = vmul.f32 %v2925, 0.7978846
      %v2929 = vmul.f32 %v2926, 0.7978846
      %v2930 = vmul.f32 %v2927, 0.7978846
      %v2931 = vtanh.pop %v2928
      %v2932 = vtanh.pop %v2929
      %v2933 = vtanh.pop %v2930
      %v2934 = vadd.f32 %v2931, 1.0
      %v2935 = vadd.f32 %v2932, 1.0
      %v2936 = vadd.f32 %v2933, 1.0
      %v2937 = vmul.f32 %v2934, 0.5
      %v2938 = vmul.f32 %v2935, 0.5
      %v2939 = vmul.f32 %v2936, 0.5
      %v2940 = vmul.f32 %v2903, %v2937
      %v2941 = vmul.f32 %v2908, %v2938
      %v2942 = vmul.f32 %v2913, %v2939
      %s2943 = scalar_lea.vmem %s15, 128
      %v2944 = vld [vmem:[%s2943] sm:$0xff]
      %v2945 = vld [vmem:[%s2943 + $0x8] sm:$0xff]
      %v2946 = vld [vmem:[%s2943 + $0x10] sm:$0xff]
      %v2947 = vld [vmem:[%s2943 + $0x18] sm:$0xff]
      %v2948 = vld [vmem:[%s2943 + $0x20] sm:$0xff]
      %v2949 = vld [vmem:[%s2943 + $0x28] sm:$0xff]
      %v2950 = vld [vmem:[%s2943 + $0x30] sm:$0xff]
      %v2951 = vld [vmem:[%s2943 + $0x38] sm:$0xff]
      %v2952 = vld [vmem:[%s2943 + $0x40] sm:$0xff]
      %v2953 = vld [vmem:[%s2943 + $0x48] sm:$0xff]
      %v2954 = vld [vmem:[%s2943 + $0x50] sm:$0xff]
      %v2955 = vld [vmem:[%s2943 + $0x58] sm:$0xff]
      %v2956 = vld [vmem:[%s2943 + $0x60] sm:$0xff]
      %v2957 = vld [vmem:[%s2943 + $0x68] sm:$0xff]
      %v2958 = vld [vmem:[%s2943 + $0x70] sm:$0xff]
      %v2959 = vld [vmem:[%s2943 + $0x78] sm:$0xff]
      %s2960 = scalar_lea.vmem %s16, 1
      %v2961 = vld [vmem:[%s2960] sm:$0x1]
      %v2963 = vlaneseq
      %v2964 = vshrl.u32 %v2963, 7
      %v2965 = vsub.s32 0, %v2964
      %v2966 = vrot.slane %v2961, %v2965
      %2968 = vmatprep.subr.mxu0 0.0
      %2969 = vmatpush1.msra.mxu0 %v2944
      %2970 = vmatprep.subr.mxu0 0.0
      %2971 = vmatpush1.msra.mxu0 %v2945
      %2972 = vmatprep.subr.mxu0 0.0
      %2973 = vmatpush1.msra.mxu0 %v2946
      %2974 = vmatprep.subr.mxu0 0.0
      %2975 = vmatpush1.msra.mxu0 %v2947
      %2976 = vmatprep.subr.mxu0 0.0
      %2977 = vmatpush1.msra.mxu0 %v2948
      %2978 = vmatprep.subr.mxu0 0.0
      %2979 = vmatpush1.msra.mxu0 %v2949
      %2980 = vmatprep.subr.mxu0 0.0
      %2981 = vmatpush1.msra.mxu0 %v2950
      %2982 = vmatprep.subr.mxu0 0.0
      %2983 = vmatpush1.msra.mxu0 %v2951
      %2984 = vmatprep.subr.mxu0 0.0
      %2985 = vmatpush1.msra.mxu0 %v2952
      %2986 = vmatprep.subr.mxu0 0.0
      %2987 = vmatpush1.msra.mxu0 %v2953
      %2988 = vmatprep.subr.mxu0 0.0
      %2989 = vmatpush1.msra.mxu0 %v2954
      %2990 = vmatprep.subr.mxu0 0.0
      %2991 = vmatpush1.msra.mxu0 %v2955
      %2992 = vmatprep.subr.mxu0 0.0
      %2993 = vmatpush1.msra.mxu0 %v2956
      %2994 = vmatprep.subr.mxu0 0.0
      %2995 = vmatpush1.msra.mxu0 %v2957
      %2996 = vmatprep.subr.mxu0 0.0
      %2997 = vmatpush1.msra.mxu0 %v2958
      %2998 = vmatprep.subr.mxu0 0.0
      %2999 = vmatpush1.msra.mxu0 %v2959
      %3000 = vmatprep.subr.mxu0 0.0
      %3001 = vmatpush1.msra.mxu0 0.0
      %3002 = vmatprep.subr.mxu0 0.0
      %3003 = vmatpush1.msra.mxu0 0.0
      %3004 = vmatprep.subr.mxu0 0.0
      %3005 = vmatpush1.msra.mxu0 0.0
      %3006 = vmatprep.subr.mxu0 0.0
      %3007 = vmatpush1.msra.mxu0 0.0
      %3008 = vmatprep.subr.mxu0 0.0
      %3009 = vmatpush1.msra.mxu0 0.0
      %3010 = vmatprep.subr.mxu0 0.0
      %3011 = vmatpush1.msra.mxu0 0.0
      %3012 = vmatprep.subr.mxu0 0.0
      %3013 = vmatpush1.msra.mxu0 0.0
      %3014 = vmatprep.subr.mxu0 0.0
      %3015 = vmatpush1.msra.mxu0 0.0
      %3016 = vmatprep.subr.mxu0 0.0
      %3017 = vmatpush1.msra.mxu0 0.0
      %3018 = vmatprep.subr.mxu0 0.0
      %3019 = vmatpush1.msra.mxu0 0.0
      %3020 = vmatprep.subr.mxu0 0.0
      %3021 = vmatpush1.msra.mxu0 0.0
      %3022 = vmatprep.subr.mxu0 0.0
      %3023 = vmatpush1.msra.mxu0 0.0
      %3024 = vmatprep.subr.mxu0 0.0
      %3025 = vmatpush1.msra.mxu0 0.0
      %3026 = vmatprep.subr.mxu0 0.0
      %3027 = vmatpush1.msra.mxu0 0.0
      %3028 = vmatprep.subr.mxu0 0.0
      %3029 = vmatpush1.msra.mxu0 0.0
      %3030 = vmatprep.subr.mxu0 0.0
      %3031 = vmatpush1.msra.mxu0 0.0
      %3032 = vmatprep.mubr.f32.mxu0 0.0
      %3033 = vmatmul.mubr.f32.gmra.mrb[0].mxu0 %v2940
      %v3034 = vpop.f32.mrb[0].mxu0
      %v3035 = vadd.f32 %v2966, %v3034
      %v3036 = vpop.f32.mrb[0].mxu0
      %3037 = vmatprep.mubr.f32.mxu0 0.0
      %3038 = vmatmul.mubr.f32.gmra.mrb[0].mxu0 %v2941
      %v3039 = vpop.f32.mrb[0].mxu0
      %v3040 = vadd.f32 %v2966, %v3039
      %v3041 = vpop.f32.mrb[0].mxu0
      %3042 = vmatprep.mubr.f32.mxu0 0.0
      %3043 = vmatmul.mubr.f32.gmra.mrb[0].mxu0 %v2942
      %v3044 = vpop.f32.mrb[0].mxu0
      %v3045 = vadd.f32 %v2966, %v3044
      %v3046 = vpop.f32.mrb[0].mxu0
      %3047 = vdwg.mxu0
      %v3048 = vadd.f32 %v2750, %v3035
      %v3049 = vadd.f32 %v2751, %v3040
      %v3050 = vadd.f32 %v2752, %v3045
      %v3051 = vld [vmem:[%s17] sm:$0x1]
      %v3052 = vld [vmem:[%s18] sm:$0x1]
      %v3053 = vsel %vm786, %v3048, 0.0
      %3054 = vadd.xlane.f32.xlu0 %v3053
      %v3055 = vpop.xlane.xlu0 %3054
      %v3056 = vsel %vm786, %v3049, 0.0
      %3057 = vadd.xlane.f32.xlu0 %v3056
      %v3058 = vpop.xlane.xlu0 %3057
      %v3059 = vsel %vm793, %v3050, 0.0
      %3060 = vadd.xlane.f32.xlu0 %v3059
      %v3061 = vpop.xlane.xlu0 %3060
      %v3062 = vmul.f32 %v3055, %v797
      %v3063 = vmul.f32 %v3058, %v797
      %v3064 = vmul.f32 %v3061, %v797
      %v3065 = vsub.f32 %v3048, %v3062
      %v3066 = vsub.f32 %v3049, %v3063
      %v3067 = vsub.f32 %v3050, %v3064
      %v3068 = vmul.f32 %v3065, %v3065
      %v3069 = vmul.f32 %v3066, %v3066
      %v3070 = vmul.f32 %v3067, %v3067
      %v3071 = vsel %vm786, %v3068, 0.0
      %3072 = vadd.xlane.f32.xlu0 %v3071
      %v3073 = vpop.xlane.xlu0 %3072
      %v3074 = vsel %vm786, %v3069, 0.0
      %3075 = vadd.xlane.f32.xlu0 %v3074
      %v3076 = vpop.xlane.xlu0 %3075
      %v3077 = vsel %vm793, %v3070, 0.0
      %3078 = vadd.xlane.f32.xlu0 %v3077
      %v3079 = vpop.xlane.xlu0 %3078
      %v3080 = vmul.f32 %v3073, %v797
      %v3081 = vmul.f32 %v3076, %v797
      %v3082 = vmul.f32 %v3079, %v797
      %v3083 = vadd.f32 %v3080, 1e-06
      %v3084 = vadd.f32 %v3081, 1e-06
      %v3085 = vadd.f32 %v3082, 1e-06
      %v3086 = vrsqrt.pop %v3083
      %v3087 = vrsqrt.pop %v3084
      %v3088 = vrsqrt.pop %v3085
      %v3089 = vmul.f32 %v3065, %v3086
      %v3090 = vmul.f32 %v3066, %v3087
      %v3091 = vmul.f32 %v3067, %v3088
      %v3093 = vlaneseq
      %v3094 = vshrl.u32 %v3093, 7
      %v3095 = vsub.s32 0, %v3094
      %v3096 = vrot.slane %v3051, %v3095
      %v3098 = vmul.f32 %v3089, %v3096
      %v3099 = vmul.f32 %v3090, %v3096
      %v3100 = vmul.f32 %v3091, %v3096
      %v3102 = vlaneseq
      %v3103 = vshrl.u32 %v3102, 7
      %v3104 = vsub.s32 0, %v3103
      %v3105 = vrot.slane %v3052, %v3104
      %v3107 = vadd.f32 %v3098, %v3105
      %v3108 = vadd.f32 %v3099, %v3105
      %v3109 = vadd.f32 %v3100, %v3105
      %v3110 = vmax.f32 %v3107, 1e-06
      %v3111 = vmax.f32 %v3108, 1e-06
      %v3112 = vmax.f32 %v3109, 1e-06
      %v3113 = vmul.f32 %v3110, %v3110
      %v3114 = vmul.f32 %v3111, %v3111
      %v3115 = vmul.f32 %v3112, %v3112
      %v3116 = vmul.f32 %v3113, %v3110
      %v3117 = vmul.f32 %v3114, %v3111
      %v3118 = vmul.f32 %v3115, %v3112
      %v3119 = vsel %vm786, %v3116, 0.0
      %v3120 = vsel %vm786, %v3117, 0.0
      %v3121 = vadd.f32 %v3119, %v3120
      %v3122 = vsel %vm793, %v3118, 0.0
      %v3123 = vadd.f32 %v3121, %v3122
      %v3124 = vrot.slane %v3123, 4
      %v3125 = vadd.f32 %v3123, %v3124
      %v3126 = vrot.slane %v3125, 2
      %v3127 = vadd.f32 %v3125, %v3126
      %v3128 = vrot.slane %v3127, 1
      %v3129 = vadd.f32 %v3127, %v3128
      %v3130 = vrcp.pop 17.0
      %v3131 = vmul.f32 %v3129, %v3130
      %v3132 = vlog2.pop %v3131
      %v3133 = vmul.f32 %v3132, 0.6931472
      %v3134 = vmul.f32 %v3133, 0.33333334
      %v3135 = vmul.f32 %v3134, 1.442695
      %v3136 = vpow.pop %v3135
      %v3137 = vld [vmem:[%s19] sm:$0xff]
      %v3138 = vld [vmem:[%s19 + $0x8] sm:$0xff]
      %v3139 = vld [vmem:[%s19 + $0x10] sm:$0xff]
      %v3140 = vld [vmem:[%s19 + $0x18] sm:$0xff]
      %v3141 = vld [vmem:[#allocation2] sm:$0x1]
      %v3143 = vsel %vm786, %v3136, 0
      %3145 = vmatprep.subr.mxu0 0.0
      %3146 = vmatpush1.msra.mxu0 %v3137
      %3147 = vmatprep.subr.mxu0 0.0
      %3148 = vmatpush1.msra.mxu0 %v3138
      %3149 = vmatprep.subr.mxu0 0.0
      %3150 = vmatpush1.msra.mxu0 %v3139
      %3151 = vmatprep.subr.mxu0 0.0
      %3152 = vmatpush1.msra.mxu0 %v3140
      %3153 = vmatprep.subr.mxu0 0.0
      %3154 = vmatpush1.msra.mxu0 0.0
      %3155 = vmatprep.subr.mxu0 0.0
      %3156 = vmatpush1.msra.mxu0 0.0
      %3157 = vmatprep.subr.mxu0 0.0
      %3158 = vmatpush1.msra.mxu0 0.0
      %3159 = vmatprep.subr.mxu0 0.0
      %3160 = vmatpush1.msra.mxu0 0.0
      %3161 = vmatprep.subr.mxu0 0.0
      %3162 = vmatpush1.msra.mxu0 0.0
      %3163 = vmatprep.subr.mxu0 0.0
      %3164 = vmatpush1.msra.mxu0 0.0
      %3165 = vmatprep.subr.mxu0 0.0
      %3166 = vmatpush1.msra.mxu0 0.0
      %3167 = vmatprep.subr.mxu0 0.0
      %3168 = vmatpush1.msra.mxu0 0.0
      %3169 = vmatprep.subr.mxu0 0.0
      %3170 = vmatpush1.msra.mxu0 0.0
      %3171 = vmatprep.subr.mxu0 0.0
      %3172 = vmatpush1.msra.mxu0 0.0
      %3173 = vmatprep.subr.mxu0 0.0
      %3174 = vmatpush1.msra.mxu0 0.0
      %3175 = vmatprep.subr.mxu0 0.0
      %3176 = vmatpush1.msra.mxu0 0.0
      %3177 = vmatprep.subr.mxu0 0.0
      %3178 = vmatpush1.msra.mxu0 0.0
      %3179 = vmatprep.subr.mxu0 0.0
      %3180 = vmatpush1.msra.mxu0 0.0
      %3181 = vmatprep.subr.mxu0 0.0
      %3182 = vmatpush1.msra.mxu0 0.0
      %3183 = vmatprep.subr.mxu0 0.0
      %3184 = vmatpush1.msra.mxu0 0.0
      %3185 = vmatprep.subr.mxu0 0.0
      %3186 = vmatpush1.msra.mxu0 0.0
      %3187 = vmatprep.subr.mxu0 0.0
      %3188 = vmatpush1.msra.mxu0 0.0
      %3189 = vmatprep.subr.mxu0 0.0
      %3190 = vmatpush1.msra.mxu0 0.0
      %3191 = vmatprep.subr.mxu0 0.0
      %3192 = vmatpush1.msra.mxu0 0.0
      %3193 = vmatprep.subr.mxu0 0.0
      %3194 = vmatpush1.msra.mxu0 0.0
      %3195 = vmatprep.subr.mxu0 0.0
      %3196 = vmatpush1.msra.mxu0 0.0
      %3197 = vmatprep.subr.mxu0 0.0
      %3198 = vmatpush1.msra.mxu0 0.0
      %3199 = vmatprep.subr.mxu0 0.0
      %3200 = vmatpush1.msra.mxu0 0.0
      %3201 = vmatprep.subr.mxu0 0.0
      %3202 = vmatpush1.msra.mxu0 0.0
      %3203 = vmatprep.subr.mxu0 0.0
      %3204 = vmatpush1.msra.mxu0 0.0
      %3205 = vmatprep.subr.mxu0 0.0
      %3206 = vmatpush1.msra.mxu0 0.0
      %3207 = vmatprep.subr.mxu0 0.0
      %3208 = vmatpush1.msra.mxu0 0.0
      %3209 = vmatprep.mubr.f32.mxu0 0.0
      %3210 = vmatmul.mubr.f32.gmra.mrb[0].mxu0 %v3143
      %v3211 = vpop.f32.mrb[0].mxu0
      %v3212 = vadd.f32 %v3141, %v3211
      %v3213 = vpop.f32.mrb[0].mxu0
      %3214 = vdwg.mxu0
      %3216 = vset.pattern.permute.xlu0 0
      %3217 = vperm.xlu0 %3216, %v3212
      %v3218 = vpop.permute.xlu0 %3217
      %3220 = vst [vmem:[%s654] sm:$0x1] %v3218
      %p3221 = scmp.lt.s32.totalorder %s34, 1
      %s3222 = scalar_select %p3221, %s34, 1
      %s3223 = scalar_lea.vmem %s21, %s3222
      // Predicated region
      $region105: #{vit_skin_forward.1} parent=103 // pred_check
        %p3224 = pneg %p498
      $region106: #{vit_skin_forward.1} parent=103 // pred_check_branch
        %3226 = sbr.rel (%p3224) target = $region108
      $region107: #{vit_skin_forward.1} parent=103 // pred_region
        _
      $region108: #{vit_skin_forward.1} parent=103 // pred_fallthru
        _
    $region104: #{vit_skin_forward.1} parent=5 // pred_fallthru
      _
    %p3227 = scmp.le.s32.totalorder 2, %s29
    // Predicated region
    $region109: #{vit_skin_forward.1} parent=5 // pred_check
      %p3228 = pneg %p3227
    $region110: #{vit_skin_forward.1} parent=5 // pred_check_branch
      %3230 = sbr.rel (%p3228) target = $region112
    $region111: #{vit_skin_forward.1} parent=5 // pred_region
      %s3231 = ssub.s32 %s29, 2
      // Predicated region
      $region113: #{vit_skin_forward.1} parent=111 // pred_check
        %p3232 = pneg %p504
      $region114: #{vit_skin_forward.1} parent=111 // pred_check_branch
        %3234 = sbr.rel (%p3232) target = $region116
      $region115: #{vit_skin_forward.1} parent=111 // pred_region
        %p3235 = scmp.lt.s32.totalorder %s35, 1
        %s3236 = scalar_select %p3235, %s35, 1
        %s3237 = scalar_lea.vmem %s21, %s3236
      $region116: #{vit_skin_forward.1} parent=111 // pred_fallthru
        _
    $region112: #{vit_skin_forward.1} parent=5 // pred_fallthru
      _
  $region6: #{vit_skin_forward.1} parent=0 // loop_footer
    %s33 = sadd.s32 1, %s29
  $region7: #{vit_skin_forward.1} parent=0 // loop_footer_branch
    %28 = sbr.rel target = $region3
  $region8: #{vit_skin_forward.1} parent=0 // loop_exit
    _

</llo_original>
